<compile_context>
chip_gen: v6e
topology: v6e:2x2x1
jax: 0.10.0
libtpu: 0.0.40
codegen_flags: <defaults>
</compile_context>

<pallas_src>
import functools

import jax
import jax.numpy as jnp
from jax.experimental import pallas as pl
from jax.experimental.pallas import tpu as pltpu

# Working-set target for one grid step (fits v7x's 64 MiB VMEM with headroom
# for pipelining); v5e/v6e (128 MiB) could run ~2x larger tiles.
_VMEM_TILE_BUDGET = 32 * 1024 * 1024
_VMEM_LIMIT_BYTES = 48 * 1024 * 1024


# ----------------------------------------------------------------------------
# Row-tile selection: byte budget instead of a row-count heuristic
# ----------------------------------------------------------------------------
def _row_tile(H, W, cin, cout_p, in_bytes, out_bytes, use_concat, head=False):
    """Largest power-of-two-divisor row tile whose VMEM working set fits."""
    def vmem_bytes(th):
        halo = (th + 2) * (W + 2) * cin * 2                    # bf16 halo scratch
        xin = 2 * (th + 4) * W * cin * in_bytes                # dbl-buffered body + halo rows
        out = 2 * th * W * cout_p * out_bytes                  # dbl-buffered output tile
        acc = th * W * cout_p * 4                              # f32 accumulator
        if head:
            tmp = th * W * cin * 4                             # f32 per-tap product
        else:
            tmp = th * W * (9 if use_concat else 1) * cin * 2  # im2col patch / tap load
        wgt = 9 * cin * cout_p * 2 + 16 * cout_p               # single weight copy
        return halo + xin + out + acc + tmp + wgt

    th = H
    while th > 8 and th % 2 == 0 and vmem_bytes(th) > _VMEM_TILE_BUDGET:
        nxt = th // 2
        if head and nxt % 8 != 0:   # head output block needs th % 8 == 0 (or th == H)
            break
        th = nxt
    return th


# ----------------------------------------------------------------------------
# Shared in-kernel halo fill (per grid step; zero only the 1-wide border)
# ----------------------------------------------------------------------------
def _fill_halo(xpad_ref, bodies, tops, bots, cins, th, W):
    """Rebuild the zero-padded (th+2, W+2, sum(cins)) window for this row tile.

    Only the border is zeroed; the channel concat of multiple inputs is fused
    here.  Every element read by the compute below is rewritten this step, so
    there is no cross-grid-step state (both grid axes may be 'parallel').
    """
    r = pl.program_id(1)
    last = pl.num_programs(1) - 1
    cin = sum(cins)
    zcol = jnp.zeros((th + 2, 1, cin), xpad_ref.dtype)
    xpad_ref[:, 0:1, :] = zcol                    # left halo column
    xpad_ref[:, W + 1:W + 2, :] = zcol            # right halo column
    off = 0
    for body, top, bot, c in zip(bodies, tops, bots, cins):
        xpad_ref[1:th + 1, 1:W + 1, off:off + c] = body[0].astype(xpad_ref.dtype)
        t = top[0, 0].astype(xpad_ref.dtype)
        t = jnp.where(r > 0, t, jnp.zeros_like(t))          # zero-pad at image top
        xpad_ref[0:1, 1:W + 1, off:off + c] = t[None]
        bm = bot[0, 0].astype(xpad_ref.dtype)
        bm = jnp.where(r < last, bm, jnp.zeros_like(bm))    # zero-pad at image bottom
        xpad_ref[th + 1:th + 2, 1:W + 1, off:off + c] = bm[None]
        off += c


# ----------------------------------------------------------------------------
# Fused Conv3x3 + folded-BN + activation (Cout > 1)
# ----------------------------------------------------------------------------
def _conv3x3_bn_act_kernel(*refs, n_in, W, th, cins, cout_p, act, use_concat):
    bodies = refs[0:3 * n_in:3]
    tops = refs[1:3 * n_in:3]
    bots = refs[2:3 * n_in:3]
    w_ref, scale_ref, shift_ref, o_ref, xpad_ref = refs[3 * n_in:]
    cin = sum(cins)

    _fill_halo(xpad_ref, bodies, tops, bots, cins, th, W)

    if use_concat:
        # Small Cin: one MXU matmul with K = 9*Cin (im2col fused in VMEM).
        taps = [xpad_ref[ky:ky + th, kx:kx + W, :]
                for ky in range(3) for kx in range(3)]
        patch = jnp.concatenate(taps, axis=-1).reshape(th * W, 9 * cin)
        acc = jnp.dot(patch, w_ref[...], preferred_element_type=jnp.float32)
    else:
        # Cin >= 128: each K=Cin dot already fills the MXU -> 9 accumulating
        # dots, no 9x materialized patch going through the store slot.
        acc = jnp.zeros((th * W, cout_p), jnp.float32)
        for ky in range(3):
            for kx in range(3):
                tap = xpad_ref[ky:ky + th, kx:kx + W, :].reshape(th * W, cin)
                k0 = (ky * 3 + kx) * cin
                acc = acc + jnp.dot(tap, w_ref[k0:k0 + cin, :],
                                    preferred_element_type=jnp.float32)

    # Folded BatchNorm (inference) + activation, in f32.
    y = acc * scale_ref[...] + shift_ref[...]
    if act == "relu":
        y = jnp.maximum(y, 0.0)
    elif act == "elu":
        y = jnp.where(y > 0.0, y, jnp.expm1(y))
    elif act == "sigmoid":
        y = jax.nn.sigmoid(y)
    else:
        raise ValueError(f"unknown act {act}")

    o_ref[...] = y.reshape(1, th, W, cout_p).astype(o_ref.dtype)


# ----------------------------------------------------------------------------
# Fused Conv3x3 + folded-BN + activation for Cout == 1 depth heads
# (lane-dense (B, H, W) output; VPU multiply + lane-reduce, no padded HBM)
# ----------------------------------------------------------------------------
def _conv3x3_head_kernel(*refs, n_in, W, th, cins, act):
    bodies = refs[0:3 * n_in:3]
    tops = refs[1:3 * n_in:3]
    bots = refs[2:3 * n_in:3]
    w_ref, shift_ref, o_ref, xpad_ref = refs[3 * n_in:]

    _fill_halo(xpad_ref, bodies, tops, bots, cins, th, W)

    acc = jnp.zeros((th, W), jnp.float32)
    for ky in range(3):
        for kx in range(3):
            tap = xpad_ref[ky:ky + th, kx:kx + W, :].astype(jnp.float32)
            wk = w_ref[ky * 3 + kx:ky * 3 + kx + 1, :]        # (1, Cin) f32, scale folded
            acc = acc + jnp.sum(tap * wk, axis=-1)

    y = acc + shift_ref[...]
    if act == "relu":
        y = jnp.maximum(y, 0.0)
    elif act == "elu":
        y = jnp.where(y > 0.0, y, jnp.expm1(y))
    elif act == "sigmoid":
        y = jax.nn.sigmoid(y)
    else:
        raise ValueError(f"unknown act {act}")

    o_ref[...] = y.reshape(1, th, W).astype(o_ref.dtype)


# ----------------------------------------------------------------------------
# BlockSpec / argument plumbing shared by both kernels
# ----------------------------------------------------------------------------
def _halo_in_specs(phys, th, H, W):
    specs = []
    for c in phys:
        specs.append(pl.BlockSpec((1, th, W, c), lambda b, r: (b, r, 0, 0)))
        specs.append(pl.BlockSpec(
            (1, 1, W, c), lambda b, r: (b, jnp.maximum(r * th - 1, 0), 0, 0)))
        specs.append(pl.BlockSpec(
            (1, 1, W, c), lambda b, r: (b, jnp.minimum(r * th + th, H - 1), 0, 0)))
    return specs


def _halo_args(xs):
    args = []
    for x in xs:
        args += [x, x, x]
    return args


# ----------------------------------------------------------------------------
# Python wrappers
# ----------------------------------------------------------------------------
def conv3x3_bn_act(xs, w, scale, shift, act, *, logical_cins=None,
                   out_dtype=jnp.bfloat16, pad_cout=True):
    """Fused Conv3x3(stride=1, pad=1) + BatchNorm(eval, folded) + activation.

    xs: NHWC tensor or tuple of NHWC tensors sharing (B, H, W).  Multiple
        inputs are channel-concatenated *inside* the kernel (order preserved).
        Inputs may carry trailing padding channels beyond `logical_cins`; the
        padding is nullified via zero weight rows.
    w:  (3, 3, sum(logical_cins), Cout) HWIO conv weight.
    scale/shift: (Cout,) folded BN affine (conv bias folded into shift).
    Returns (B, H, W, Cout_p) where Cout_p rounds Cout up to a multiple of 128
    when pad_cout (lane-dense stores; extra channels are exactly 0).
    """
    if not isinstance(xs, (tuple, list)):
        xs = (xs,)
    xs = tuple(xs)
    B, H, W = xs[0].shape[:3]
    phys = tuple(int(x.shape[-1]) for x in xs)
    logical = tuple(logical_cins) if logical_cins is not None else phys
    assert len(logical) == len(phys)
    assert all(l <= p for l, p in zip(logical, phys)), (logical, phys)
    cin_log, cin_phys = sum(logical), sum(phys)
    cout = int(w.shape[-1])
    assert w.shape == (3, 3, cin_log, cout), (w.shape, logical, cout)
    assert cout > 1, "use conv3x3_head for Cout == 1"

    cout_p = (-(-cout // 128) * 128) if pad_cout else cout

    # Scatter logical-channel weight rows into the physical-channel layout
    # (zero rows for carried padding channels); flatten taps as (ky, kx, cin).
    w_full = jnp.zeros((3, 3, cin_phys, cout_p), jnp.float32)
    o_l = o_p = 0
    for c_l, c_p in zip(logical, phys):
        w_full = w_full.at[:, :, o_p:o_p + c_l, :cout].set(
            w[:, :, o_l:o_l + c_l, :].astype(jnp.float32))
        o_l += c_l
        o_p += c_p
    w2 = w_full.reshape(9 * cin_phys, cout_p).astype(jnp.bfloat16)
    scale2 = jnp.zeros((1, cout_p), jnp.float32).at[0, :cout].set(
        scale.astype(jnp.float32))
    shift2 = jnp.zeros((1, cout_p), jnp.float32).at[0, :cout].set(
        shift.astype(jnp.float32))

    use_concat = cin_phys < 128
    th = _row_tile(H, W, cin_phys, cout_p, xs[0].dtype.itemsize,
                   jnp.dtype(out_dtype).itemsize, use_concat)
    n_rt = H // th

    kernel = functools.partial(
        _conv3x3_bn_act_kernel, n_in=len(xs), W=W, th=th, cins=phys,
        cout_p=cout_p, act=act, use_concat=use_concat)

    # Constant operands: whole-array VMEM (single copy, fetched once; no dead
    # double-buffering of blocks whose index map never changes).
    const_vmem = pl.BlockSpec(memory_space=pltpu.MemorySpace.VMEM)
    in_specs = _halo_in_specs(phys, th, H, W) + [const_vmem] * 3

    return pl.pallas_call(
        kernel,
        out_shape=jax.ShapeDtypeStruct((B, H, W, cout_p), out_dtype),
        grid=(B, n_rt),
        in_specs=in_specs,
        out_specs=pl.BlockSpec((1, th, W, cout_p), lambda b, r: (b, r, 0, 0)),
        scratch_shapes=[pltpu.VMEM((th + 2, W + 2, cin_phys), jnp.bfloat16)],
        compiler_params=pltpu.CompilerParams(
            dimension_semantics=("parallel", "parallel"),
            vmem_limit_bytes=_VMEM_LIMIT_BYTES),
    )(*_halo_args(xs), w2, scale2, shift2)


def conv3x3_head(x, w, scale, shift, act="sigmoid", *, logical_cins=None,
                 out_dtype=jnp.float32):
    """Conv3x3 + folded BN + act for Cout == 1: lane-dense (B, H, W) output."""
    xs = tuple(x) if isinstance(x, (tuple, list)) else (x,)
    B, H, W = xs[0].shape[:3]
    phys = tuple(int(t.shape[-1]) for t in xs)
    logical = tuple(logical_cins) if logical_cins is not None else phys
    cin_log, cin_phys = sum(logical), sum(phys)
    assert w.shape == (3, 3, cin_log, 1), (w.shape, logical)

    # Fold the BN scale into the f32 weights; zero rows for padding channels.
    w_full = jnp.zeros((3, 3, cin_phys), jnp.float32)
    o_l = o_p = 0
    for c_l, c_p in zip(logical, phys):
        w_full = w_full.at[:, :, o_p:o_p + c_l].set(
            w[:, :, o_l:o_l + c_l, 0].astype(jnp.float32))
        o_l += c_l
        o_p += c_p
    w2 = (w_full * scale.astype(jnp.float32)[0]).reshape(9, cin_phys)
    shift2 = shift.reshape(1, 1).astype(jnp.float32)

    th = _row_tile(H, W, cin_phys, 1, xs[0].dtype.itemsize,
                   jnp.dtype(out_dtype).itemsize, False, head=True)
    n_rt = H // th

    kernel = functools.partial(_conv3x3_head_kernel, n_in=len(xs), W=W, th=th,
                               cins=phys, act=act)
    const_vmem = pl.BlockSpec(memory_space=pltpu.MemorySpace.VMEM)
    in_specs = _halo_in_specs(phys, th, H, W) + [const_vmem] * 2

    return pl.pallas_call(
        kernel,
        out_shape=jax.ShapeDtypeStruct((B, H, W), out_dtype),
        grid=(B, n_rt),
        in_specs=in_specs,
        out_specs=pl.BlockSpec((1, th, W), lambda b, r: (b, r, 0)),
        scratch_shapes=[pltpu.VMEM((th + 2, W + 2, cin_phys), jnp.bfloat16)],
        compiler_params=pltpu.CompilerParams(
            dimension_semantics=("parallel", "parallel"),
            vmem_limit_bytes=_VMEM_LIMIT_BYTES),
    )(*_halo_args(xs), w2, shift2)


# ----------------------------------------------------------------------------
# Bilinear x2 upsample, align_corners=True, as two dense interp-matrix matmuls
# (bf16 intermediate so no f32 HBM round trip between the two einsums)
# ----------------------------------------------------------------------------
def _interp_matrix(n_in, n_out):
    if n_in == 1:
        return jnp.ones((n_out, 1), jnp.float32)
    src = jnp.arange(n_out, dtype=jnp.float32) * ((n_in - 1) / (n_out - 1))
    i0f = jnp.clip(jnp.floor(src), 0.0, n_in - 1)
    frac = src - i0f
    i0 = i0f.astype(jnp.int32)
    i1 = jnp.clip(i0 + 1, 0, n_in - 1)
    cols = jnp.arange(n_in, dtype=jnp.int32)[None, :]
    return ((cols == i0[:, None]) * (1.0 - frac)[:, None]
            + (cols == i1[:, None]) * frac[:, None]).astype(jnp.float32)


def upsample2x(x):
    """(B,H,W,C) -> (B,2H,2W,C); F.interpolate(scale=2, bilinear,
    align_corners=True) semantics as two MXU-friendly matmuls."""
    B, H, W, C = x.shape
    wy = _interp_matrix(H, 2 * H)          # (2H, H)
    wx = _interp_matrix(W, 2 * W)          # (2W, W)
    y = jnp.einsum("oh,bhwc->bowc", wy, x).astype(jnp.bfloat16)
    y = jnp.einsum("ow,bhwc->bhoc", wx, y).astype(jnp.bfloat16)
    return y


# ----------------------------------------------------------------------------
# Parameter construction (deterministic, synthetic; BN running stats folded)
# ----------------------------------------------------------------------------
def make_conv3x3_params(key, cin, cout):
    k = jax.random.split(key, 6)
    w = jax.random.normal(k[0], (3, 3, cin, cout), jnp.float32) / jnp.sqrt(9.0 * cin)
    b = 0.01 * jax.random.normal(k[1], (cout,), jnp.float32)
    gamma = 1.0 + 0.1 * jax.random.normal(k[2], (cout,), jnp.float32)
    beta = 0.1 * jax.random.normal(k[3], (cout,), jnp.float32)
    running_mean = 0.1 * jax.random.normal(k[4], (cout,), jnp.float32)
    running_var = 0.5 + jax.random.uniform(k[5], (cout,), jnp.float32)
    eps = 1e-5
    scale = gamma / jnp.sqrt(running_var + eps)
    shift = beta + (b - running_mean) * scale
    return {"w": w, "scale": scale, "shift": shift}


def make_depth_decoder_params(key, channels):
    """Mirrors DepthDecoder.__init__(channels). Returns (params, enc_channels)."""
    enc = channels[::-1]
    dec = channels[::-1]
    if len(enc) == 4:
        enc = enc + [enc[-1]]
    if len(dec) == 4:
        dec = dec + [dec[-1] // 2]
    dec = dec[1:]

    keys = iter(jax.random.split(key, 16))
    params = {"dec": [], "heads": [], "head4": {}}

    sec_ins = [enc[0], enc[1], enc[2], enc[4] + dec[3]]
    for i in range(4):
        params["dec"].append({
            "up": make_conv3x3_params(next(keys), enc[i], dec[i]),
            "block": make_conv3x3_params(next(keys), sec_ins[i], dec[i]),
        })

    for c in (dec[1], dec[2], dec[3]):
        params["heads"].append(make_conv3x3_params(next(keys), c, 1))

    c = dec[3]
    params["head4"]["c1"] = make_conv3x3_params(next(keys), c, c // 2)
    params["head4"]["c2"] = make_conv3x3_params(next(keys), c // 2, 1)
    return params, enc


# ----------------------------------------------------------------------------
# DepthDecoder forward (tracks logical channel counts; physical tensors carry
# lane padding forward between Conv3x3 kernels)
# ----------------------------------------------------------------------------
@jax.jit
def depth_decoder_forward(params, features):
    """features: list of 5 NHWC tensors [f0 (deepest), f1, f2, f3, f4]."""
    feats = [f.astype(jnp.bfloat16) for f in features]   # bf16 intermediates
    x = feats[0]
    x_log = int(x.shape[-1])
    intern = feats[1:]
    disp_map = []

    for i in range(4):
        p = params["dec"][i]
        # DepthUPConv: up_conv -> upsample -> cat([skip, x]) -> ConvBlock
        x = conv3x3_bn_act(x, p["up"]["w"], p["up"]["scale"], p["up"]["shift"],
                           "relu", logical_cins=(x_log,))
        x_log = int(p["up"]["w"].shape[-1])
        x = upsample2x(x)
        skip = intern[i]
        # torch.cat([skip, x], dim=1) is fused into the block conv kernel.
        x = conv3x3_bn_act((skip, x), p["block"]["w"], p["block"]["scale"],
                           p["block"]["shift"], "relu",
                           logical_cins=(int(skip.shape[-1]), x_log))
        x_log = int(p["block"]["w"].shape[-1])
        if i > 0:
            h = params["heads"][i - 1]
            d = conv3x3_head(x, h["w"], h["scale"], h["shift"], "sigmoid",
                             logical_cins=(x_log,))
            disp_map.append(d[..., None].astype(jnp.float32))

    # LastDepthHead: Conv3x3(c, c//2, ELU) -> upsample -> Conv3x3(c//2, 1, Sigmoid)
    h4 = params["head4"]
    y = conv3x3_bn_act(x, h4["c1"]["w"], h4["c1"]["scale"], h4["c1"]["shift"],
                       "elu", logical_cins=(x_log,))
    y_log = int(h4["c1"]["w"].shape[-1])
    y = upsample2x(y)
    d = conv3x3_head(y, h4["c2"]["w"], h4["c2"]["scale"], h4["c2"]["shift"],
                     "sigmoid", logical_cins=(y_log,))
    disp_map.append(d[..., None].astype(jnp.float32))
    return disp_map


# ----------------------------------------------------------------------------
# Pure-JAX reference (for standalone kernel verification)
# ----------------------------------------------------------------------------
def _ref_conv3x3_bn_act(xs, w, scale, shift, act, logical_cins=None):
    if not isinstance(xs, (tuple, list)):
        xs = (xs,)
    logical = (tuple(logical_cins) if logical_cins is not None
               else tuple(int(x.shape[-1]) for x in xs))
    parts = [x[..., :c].astype(jnp.bfloat16).astype(jnp.float32)
             for x, c in zip(xs, logical)]
    xcat = jnp.concatenate(parts, axis=-1)
    wf = w.astype(jnp.bfloat16).astype(jnp.float32)
    y = jax.lax.conv_general_dilated(
        xcat, wf, (1, 1), ((1, 1), (1, 1)),
        dimension_numbers=("NHWC", "HWIO", "NHWC"))
    y = y * scale.astype(jnp.float32) + shift.astype(jnp.float32)
    if act == "relu":
        y = jnp.maximum(y, 0.0)
    elif act == "elu":
        y = jnp.where(y > 0.0, y, jnp.expm1(y))
    elif act == "sigmoid":
        y = jax.nn.sigmoid(y)
    return y


# ----------------------------------------------------------------------------
if __name__ == "__main__":
    key = jax.random.PRNGKey(0)
    kp, kf, kt = jax.random.split(key, 3)
    tkeys = jax.random.split(kt, 8)

    def check(a, b, tol, msg):
        err = float(jnp.max(jnp.abs(a.astype(jnp.float32) - b.astype(jnp.float32))))
        assert err < tol, f"{msg}: max abs err {err}"

    # (A) Cin < 128 -> fused single-dot im2col path; Cout padded to 128 lanes.
    xA = jax.random.normal(tkeys[0], (2, 16, 16, 24), jnp.float32)
    pA = make_conv3x3_params(tkeys[1], 24, 40)
    yA = conv3x3_bn_act(xA, pA["w"], pA["scale"], pA["shift"], "relu")
    rA = _ref_conv3x3_bn_act(xA, pA["w"], pA["scale"], pA["shift"], "relu")
    assert yA.shape == (2, 16, 16, 128), yA.shape
    check(yA[..., :40], rA, 5e-2, "conv path A")
    assert float(jnp.max(jnp.abs(yA[..., 40:]))) == 0.0

    # (B) Cin >= 128 -> 9 accumulating MXU dots; fused concat of a real skip
    #     with a channel-padded activation (128 physical / 16 logical).
    x1 = jax.random.normal(tkeys[2], (2, 8, 8, 8), jnp.float32)
    x2 = jax.random.normal(tkeys[3], (2, 8, 8, 128), jnp.float32)
    pB = make_conv3x3_params(tkeys[4], 8 + 16, 16)
    yB = conv3x3_bn_act((x1, x2), pB["w"], pB["scale"], pB["shift"], "elu",
                        logical_cins=(8, 16))
    rB = _ref_conv3x3_bn_act((x1, x2), pB["w"], pB["scale"], pB["shift"], "elu",
                             logical_cins=(8, 16))
    check(yB[..., :16], rB, 5e-2, "conv path B")

    # (C) Cout == 1 head -> lane-dense (B, H, W) output, VPU channel-reduce.
    xC = jax.random.normal(tkeys[5], (2, 16, 16, 64), jnp.float32)
    pC = make_conv3x3_params(tkeys[6], 40, 1)
    yC = conv3x3_head(xC, pC["w"], pC["scale"], pC["shift"], "sigmoid",
                      logical_cins=(40,))
    rC = _ref_conv3x3_bn_act(xC, pC["w"], pC["scale"], pC["shift"], "sigmoid",
                             logical_cins=(40,))
    assert yC.shape == (2, 16, 16), yC.shape
    check(yC, rC[..., 0], 3e-2, "head path C")

    # ---- Full DepthDecoder smoke test (small-channel toy configuration) ----
    channels = [8, 16, 32, 64]
    params, enc = make_depth_decoder_params(kp, channels)   # enc = [64,32,16,8,8]

    B, H0 = 2, 4
    fkeys = jax.random.split(kf, 5)
    spatial = [H0, 2 * H0, 4 * H0, 8 * H0, 16 * H0]
    features = [
        jax.random.normal(fkeys[i], (B, spatial[i], spatial[i], enc[i]), jnp.float32)
        for i in range(5)
    ]

    disp_map = depth_decoder_forward(params, features)
    disp_map = jax.block_until_ready(disp_map)

    expected = [(B, 16, 16, 1), (B, 32, 32, 1), (B, 64, 64, 1), (B, 128, 128, 1)]
    assert [tuple(d.shape) for d in disp_map] == expected, \
        [tuple(d.shape) for d in disp_map]
    assert all(bool(jnp.isfinite(d).all()) for d in disp_map)
    assert all(bool(((d >= 0) & (d <= 1)).all()) for d in disp_map)

    print("KERNEL_OK")
</pallas_src>

<mosaic_0001>
module attributes {stable_mosaic.version = 11 : i64} {
  func.func @_conv3x3_bn_act_kernel(%arg0: i32, %arg1: i32, %arg2: memref<1x16x16x24xf32, #tpu.memory_space<vmem>>, %arg3: memref<1x1x16x24xf32, #tpu.memory_space<vmem>>, %arg4: memref<1x1x16x24xf32, #tpu.memory_space<vmem>>, %arg5: memref<216x128xbf16, #tpu.memory_space<vmem>>, %arg6: memref<1x128xf32, #tpu.memory_space<vmem>>, %arg7: memref<1x128xf32, #tpu.memory_space<vmem>>, %arg8: memref<1x16x16x128xbf16, #tpu.memory_space<vmem>>, %arg9: memref<18x18x24xbf16, #tpu.memory_space<vmem>>) attributes {dimension_semantics = [#tpu.dimension_semantics<parallel>, #tpu.dimension_semantics<parallel>], iteration_bounds = array<i64: 2, 1>, scalar_prefetch = 0 : i64, scratch_operands = 1 : i64, tpu.core_type = #tpu.core_type<tc>, window_params = [{transform_indices = @transform_0, window_bounds = array<i64: 1, 16, 16, 24>}, {transform_indices = @transform_1, window_bounds = array<i64: 1, 1, 16, 24>}, {transform_indices = @transform_2, window_bounds = array<i64: 1, 1, 16, 24>}, {pipeline_mode = #tpu.pipeline_mode<synchronous>, transform_indices = @transform_3, window_bounds = array<i64: 216, 128>}, {pipeline_mode = #tpu.pipeline_mode<synchronous>, transform_indices = @transform_4, window_bounds = array<i64: 1, 128>}, {pipeline_mode = #tpu.pipeline_mode<synchronous>, transform_indices = @transform_5, window_bounds = array<i64: 1, 128>}, {transform_indices = @transform_6, window_bounds = array<i64: 1, 16, 16, 128>}]} {
    %cst = arith.constant 0.000000e+00 : bf16
    %0 = vector.broadcast %cst : bf16 to vector<18x1x24xbf16>
    %c0 = arith.constant 0 : index
    %c0_0 = arith.constant 0 : index
    %c0_1 = arith.constant 0 : index
    %1 = vector.load %arg9[%c0, %c0_0, %c0_1] : memref<18x18x24xbf16, #tpu.memory_space<vmem>>, vector<18x1x24xbf16>
    tpu.vector_store %arg9[%c0, %c0_0, %c0_1], %0 {strides = array<i32>} : memref<18x18x24xbf16, #tpu.memory_space<vmem>>, vector<18x1x24xbf16>,
    %c0_2 = arith.constant 0 : index
    %c17 = arith.constant 17 : index
    %c0_3 = arith.constant 0 : index
    %2 = vector.load %arg9[%c0_2, %c17, %c0_3] : memref<18x18x24xbf16, #tpu.memory_space<vmem>>, vector<18x1x24xbf16>
    tpu.vector_store %arg9[%c0_2, %c17, %c0_3], %0 {strides = array<i32>} : memref<18x18x24xbf16, #tpu.memory_space<vmem>>, vector<18x1x24xbf16>,
    %c0_4 = arith.constant 0 : index
    %c0_5 = arith.constant 0 : index
    %c0_6 = arith.constant 0 : index
    %c0_7 = arith.constant 0 : index
    %3 = vector.load %arg2[%c0_4, %c0_5, %c0_6, %c0_7] : memref<1x16x16x24xf32, #tpu.memory_space<vmem>>, vector<1x16x16x24xf32>
    %4 = vector.shape_cast %3 : vector<1x16x16x24xf32> to vector<16x16x24xf32>
    %5 = arith.truncf %4 : vector<16x16x24xf32> to vector<16x16x24xbf16>
    %c1 = arith.constant 1 : index
    %c1_8 = arith.constant 1 : index
    %c0_9 = arith.constant 0 : index
    %6 = vector.load %arg9[%c1, %c1_8, %c0_9] : memref<18x18x24xbf16, #tpu.memory_space<vmem>>, vector<16x16x24xbf16>
    tpu.vector_store %arg9[%c1, %c1_8, %c0_9], %5 {strides = array<i32>} : memref<18x18x24xbf16, #tpu.memory_space<vmem>>, vector<16x16x24xbf16>,
    %c0_10 = arith.constant 0 : index
    %c0_11 = arith.constant 0 : index
    %c0_12 = arith.constant 0 : index
    %c0_13 = arith.constant 0 : index
    %7 = vector.load %arg3[%c0_10, %c0_11, %c0_12, %c0_13] : memref<1x1x16x24xf32, #tpu.memory_space<vmem>>, vector<1x1x16x24xf32>
    %8 = vector.shape_cast %7 : vector<1x1x16x24xf32> to vector<16x24xf32>
    %9 = arith.truncf %8 : vector<16x24xf32> to vector<16x24xbf16>
    %c0_i32 = arith.constant 0 : i32
    %10 = arith.cmpi sgt, %arg1, %c0_i32 : i32
    %cst_14 = arith.constant 0.000000e+00 : bf16
    %11 = vector.broadcast %cst_14 : bf16 to vector<16x24xbf16>
    %12 = arith.select %10, %9, %11 : vector<16x24xbf16>
    %13 = vector.shape_cast %12 : vector<16x24xbf16> to vector<1x16x24xbf16>
    %c0_15 = arith.constant 0 : index
    %c1_16 = arith.constant 1 : index
    %c0_17 = arith.constant 0 : index
    %14 = vector.load %arg9[%c0_15, %c1_16, %c0_17] : memref<18x18x24xbf16, #tpu.memory_space<vmem>>, vector<1x16x24xbf16>
    tpu.vector_store %arg9[%c0_15, %c1_16, %c0_17], %13 {strides = array<i32>} : memref<18x18x24xbf16, #tpu.memory_space<vmem>>, vector<1x16x24xbf16>,
    %c0_18 = arith.constant 0 : index
    %c0_19 = arith.constant 0 : index
    %c0_20 = arith.constant 0 : index
    %c0_21 = arith.constant 0 : index
    %15 = vector.load %arg4[%c0_18, %c0_19, %c0_20, %c0_21] : memref<1x1x16x24xf32, #tpu.memory_space<vmem>>, vector<1x1x16x24xf32>
    %16 = vector.shape_cast %15 : vector<1x1x16x24xf32> to vector<16x24xf32>
    %17 = arith.truncf %16 : vector<16x24xf32> to vector<16x24xbf16>
    %c0_i32_22 = arith.constant 0 : i32
    %18 = arith.cmpi slt, %arg1, %c0_i32_22 : i32
    %cst_23 = arith.constant 0.000000e+00 : bf16
    %19 = vector.broadcast %cst_23 : bf16 to vector<16x24xbf16>
    %20 = arith.select %18, %17, %19 : vector<16x24xbf16>
    %21 = vector.shape_cast %20 : vector<16x24xbf16> to vector<1x16x24xbf16>
    %c17_24 = arith.constant 17 : index
    %c1_25 = arith.constant 1 : index
    %c0_26 = arith.constant 0 : index
    %22 = vector.load %arg9[%c17_24, %c1_25, %c0_26] : memref<18x18x24xbf16, #tpu.memory_space<vmem>>, vector<1x16x24xbf16>
    tpu.vector_store %arg9[%c17_24, %c1_25, %c0_26], %21 {strides = array<i32>} : memref<18x18x24xbf16, #tpu.memory_space<vmem>>, vector<1x16x24xbf16>,
    %c0_27 = arith.constant 0 : index
    %c0_28 = arith.constant 0 : index
    %c0_29 = arith.constant 0 : index
    %23 = vector.load %arg9[%c0_27, %c0_28, %c0_29] : memref<18x18x24xbf16, #tpu.memory_space<vmem>>, vector<16x16x24xbf16>
    %c0_30 = arith.constant 0 : index
    %c1_31 = arith.constant 1 : index
    %c0_32 = arith.constant 0 : index
    %24 = vector.load %arg9[%c0_30, %c1_31, %c0_32] : memref<18x18x24xbf16, #tpu.memory_space<vmem>>, vector<16x16x24xbf16>
    %c0_33 = arith.constant 0 : index
    %c2 = arith.constant 2 : index
    %c0_34 = arith.constant 0 : index
    %25 = vector.load %arg9[%c0_33, %c2, %c0_34] : memref<18x18x24xbf16, #tpu.memory_space<vmem>>, vector<16x16x24xbf16>
    %c1_35 = arith.constant 1 : index
    %c0_36 = arith.constant 0 : index
    %c0_37 = arith.constant 0 : index
    %26 = vector.load %arg9[%c1_35, %c0_36, %c0_37] : memref<18x18x24xbf16, #tpu.memory_space<vmem>>, vector<16x16x24xbf16>
    %c1_38 = arith.constant 1 : index
    %c1_39 = arith.constant 1 : index
    %c0_40 = arith.constant 0 : index
    %27 = vector.load %arg9[%c1_38, %c1_39, %c0_40] : memref<18x18x24xbf16, #tpu.memory_space<vmem>>, vector<16x16x24xbf16>
    %c1_41 = arith.constant 1 : index
    %c2_42 = arith.constant 2 : index
    %c0_43 = arith.constant 0 : index
    %28 = vector.load %arg9[%c1_41, %c2_42, %c0_43] : memref<18x18x24xbf16, #tpu.memory_space<vmem>>, vector<16x16x24xbf16>
    %c2_44 = arith.constant 2 : index
    %c0_45 = arith.constant 0 : index
    %c0_46 = arith.constant 0 : index
    %29 = vector.load %arg9[%c2_44, %c0_45, %c0_46] : memref<18x18x24xbf16, #tpu.memory_space<vmem>>, vector<16x16x24xbf16>
    %c2_47 = arith.constant 2 : index
    %c1_48 = arith.constant 1 : index
    %c0_49 = arith.constant 0 : index
    %30 = vector.load %arg9[%c2_47, %c1_48, %c0_49] : memref<18x18x24xbf16, #tpu.memory_space<vmem>>, vector<16x16x24xbf16>
    %c2_50 = arith.constant 2 : index
    %c2_51 = arith.constant 2 : index
    %c0_52 = arith.constant 0 : index
    %31 = vector.load %arg9[%c2_50, %c2_51, %c0_52] : memref<18x18x24xbf16, #tpu.memory_space<vmem>>, vector<16x16x24xbf16>
    %32 = tpu.concatenate %23, %24, %25, %26, %27, %28, %29, %30, %31 in 2 : vector<16x16x24xbf16>, vector<16x16x24xbf16>, vector<16x16x24xbf16>, vector<16x16x24xbf16>, vector<16x16x24xbf16>, vector<16x16x24xbf16>, vector<16x16x24xbf16>, vector<16x16x24xbf16>, vector<16x16x24xbf16> -> vector<16x16x216xbf16>
    %33 = vector.shape_cast %32 : vector<16x16x216xbf16> to vector<256x216xbf16>
    %c0_53 = arith.constant 0 : index
    %c0_54 = arith.constant 0 : index
    %34 = vector.load %arg5[%c0_53, %c0_54] : memref<216x128xbf16, #tpu.memory_space<vmem>>, vector<216x128xbf16>
    %cst_55 = arith.constant dense<0.000000e+00> : vector<256x128xf32>
    %35 = tpu.matmul %33, %34, %cst_55 {dimension_numbers = #tpu.dot_dimension_numbers<[1], [0], [0], [1], [0, 0, 1, 1], [], []>} : vector<256x216xbf16>, vector<216x128xbf16>, vector<256x128xf32> -> vector<256x128xf32>
    %c0_56 = arith.constant 0 : index
    %c0_57 = arith.constant 0 : index
    %36 = vector.load %arg6[%c0_56, %c0_57] : memref<1x128xf32, #tpu.memory_space<vmem>>, vector<1x128xf32>
    %37 = vector.broadcast %36 : vector<1x128xf32> to vector<256x128xf32>
    %38 = arith.mulf %35, %37 : vector<256x128xf32>
    %c0_58 = arith.constant 0 : index
    %c0_59 = arith.constant 0 : index
    %39 = vector.load %arg7[%c0_58, %c0_59] : memref<1x128xf32, #tpu.memory_space<vmem>>, vector<1x128xf32>
    %40 = vector.broadcast %39 : vector<1x128xf32> to vector<256x128xf32>
    %41 = arith.addf %38, %40 : vector<256x128xf32>
    %cst_60 = arith.constant 0.000000e+00 : f32
    %42 = vector.broadcast %cst_60 : f32 to vector<256x128xf32>
    %43 = arith.maximumf %41, %42 : vector<256x128xf32>
    %44 = vector.shape_cast %43 : vector<256x128xf32> to vector<1x16x16x128xf32>
    %45 = arith.truncf %44 : vector<1x16x16x128xf32> to vector<1x16x16x128xbf16>
    %c0_61 = arith.constant 0 : index
    %c0_62 = arith.constant 0 : index
    %c0_63 = arith.constant 0 : index
    %c0_64 = arith.constant 0 : index
    %46 = vector.load %arg8[%c0_61, %c0_62, %c0_63, %c0_64] : memref<1x16x16x128xbf16, #tpu.memory_space<vmem>>, vector<1x16x16x128xbf16>
    tpu.vector_store %arg8[%c0_61, %c0_62, %c0_63, %c0_64], %45 {strides = array<i32>} : memref<1x16x16x128xbf16, #tpu.memory_space<vmem>>, vector<1x16x16x128xbf16>,
    return
  }
  func.func @transform_0(%arg0: i32, %arg1: i32) -> (i32, i32, i32, i32) {
    %c0_i32 = arith.constant 0 : i32
    %c0_i32_0 = arith.constant 0 : i32
    %c0_i32_1 = arith.constant 0 : i32
    return %arg0, %arg1, %c0_i32, %c0_i32_0 : i32, i32, i32, i32
  }
  func.func @transform_1(%arg0: i32, %arg1: i32) -> (i32, i32, i32, i32) {
    %c16_i32 = arith.constant 16 : i32
    %0 = arith.muli %arg1, %c16_i32 : i32
    %c1_i32 = arith.constant 1 : i32
    %1 = arith.subi %0, %c1_i32 : i32
    %c0_i32 = arith.constant 0 : i32
    %2 = arith.maxsi %1, %c0_i32 : i32
    %c0_i32_0 = arith.constant 0 : i32
    %c0_i32_1 = arith.constant 0 : i32
    %c0_i32_2 = arith.constant 0 : i32
    return %arg0, %2, %c0_i32_0, %c0_i32_1 : i32, i32, i32, i32
  }
  func.func @transform_2(%arg0: i32, %arg1: i32) -> (i32, i32, i32, i32) {
    %c16_i32 = arith.constant 16 : i32
    %0 = arith.muli %arg1, %c16_i32 : i32
    %c16_i32_0 = arith.constant 16 : i32
    %1 = arith.addi %0, %c16_i32_0 : i32
    %c15_i32 = arith.constant 15 : i32
    %2 = arith.minsi %1, %c15_i32 : i32
    %c0_i32 = arith.constant 0 : i32
    %c0_i32_1 = arith.constant 0 : i32
    %c0_i32_2 = arith.constant 0 : i32
    return %arg0, %2, %c0_i32, %c0_i32_1 : i32, i32, i32, i32
  }
  func.func @transform_3(%arg0: i32, %arg1: i32) -> (i32, i32) {
    %c0_i32 = arith.constant 0 : i32
    %c0_i32_0 = arith.constant 0 : i32
    %c0_i32_1 = arith.constant 0 : i32
    return %c0_i32, %c0_i32_0 : i32, i32
  }
  func.func @transform_4(%arg0: i32, %arg1: i32) -> (i32, i32) {
    %c0_i32 = arith.constant 0 : i32
    %c0_i32_0 = arith.constant 0 : i32
    %c0_i32_1 = arith.constant 0 : i32
    return %c0_i32, %c0_i32_0 : i32, i32
  }
  func.func @transform_5(%arg0: i32, %arg1: i32) -> (i32, i32) {
    %c0_i32 = arith.constant 0 : i32
    %c0_i32_0 = arith.constant 0 : i32
    %c0_i32_1 = arith.constant 0 : i32
    return %c0_i32, %c0_i32_0 : i32, i32
  }
  func.func @transform_6(%arg0: i32, %arg1: i32) -> (i32, i32, i32, i32) {
    %c0_i32 = arith.constant 0 : i32
    %c0_i32_0 = arith.constant 0 : i32
    %c0_i32_1 = arith.constant 0 : i32
    return %arg0, %arg1, %c0_i32, %c0_i32_0 : i32, i32, i32, i32
  }
}

</mosaic_0001>

<llo_original>
// kernel: tpu_custom_call.1
$region0: #{tpu_custom_call.1}
  #allocation0 [shape = 'u32[]', space=smem, size = 0x4, offset = 0x4, fixed_abs, tag = 'smem constant byte address 0x4 - core index']
  #allocation1 [shape = 'u32[144,128]{1,0:T(1,128)}', space=vmem, size = 0x12000, scoped, tag = 'internal scratch']
  #allocation2 [shape = 'bf16[18,18,24]{2,1,0:T(8,128)(2,1)}', space=vmem, size = 0x1b000, scoped, tag = 'scratch operand']
  %s0 = inlined_call_operand.hbm [shape: f32[2,16,16,24], index: 0, kind: input, shape index: {}]
  %s1 = inlined_call_operand.hbm [shape: f32[2,16,16,24], index: 1, kind: input, shape index: {}]
  %s2 = inlined_call_operand.hbm [shape: f32[2,16,16,24], index: 2, kind: input, shape index: {}]
  %s3 = inlined_call_operand.hbm [shape: bf16[216,128], index: 3, kind: input, shape index: {}]
  %s4 = inlined_call_operand.vmem [shape: f32[1,128], index: 4, kind: input, shape index: {}]
  %s5 = inlined_call_operand.vmem [shape: f32[1,128], index: 5, kind: input, shape index: {}]
  %s6 = inlined_call_operand.hbm [shape: bf16[2,16,16,128], index: 6, kind: output, shape index: {}]
  %s7 = sld [smem:[#allocation0]]
  $region73: #{tpu_custom_call.1} parent=0
    _
  %s9 = ssub.s32 1, %s7
  %s10 = scalar_select 0, %s9, %s7
  $region1: #{tpu_custom_call.1} parent=0
    #allocation3 [shape = 'u8[262144]{0}', space=vmem, size = 0x40000, scoped, tag = 'input window, operand 0']
    #allocation4 [shape = 's32[2]{0}', space=sflag, size = 0x8, scoped, tag = 'scoped memory for tpu_custom_call.1']
    #allocation5 [shape = 's32[2]{0}', space=sflag, size = 0x8, scoped, tag = 'scoped memory for tpu_custom_call.1']
    #allocation6 [shape = 'u8[16384]{0}', space=vmem, size = 0x4000, scoped, tag = 'input window, operand 1']
    #allocation7 [shape = 's32[2]{0}', space=sflag, size = 0x8, scoped, tag = 'scoped memory for tpu_custom_call.1']
    #allocation8 [shape = 'u8[16384]{0}', space=vmem, size = 0x4000, scoped, tag = 'input window, operand 2']
    #allocation9 [shape = 'u8[55296]{0}', space=vmem, size = 0xd800, scoped, tag = 'input window, operand 3, single buffered']
    #allocation10 [shape = 's32[1]{0}', space=sflag, size = 0x4, scoped, tag = 'scoped memory for tpu_custom_call.1']
    #allocation11 [shape = 'u8[131072]{0}', space=vmem, size = 0x20000, scoped, tag = 'output window, operand 0']
    %11 = vsyncpa [#allocation4], 0
    %s12 = scalar_lea.sflag [#allocation4], 1
    %13 = vsyncpa %s12, 0
    %14 = vsyncpa [#allocation7], 0
    %s15 = scalar_lea.sflag [#allocation7], 1
    %16 = vsyncpa %s15, 0
    %17 = vsyncpa [#allocation10], 0
    %18 = vsyncpa [#allocation5], 0
    %s19 = scalar_lea.sflag [#allocation5], 1
    %20 = vsyncpa %s19, 0
    loop: start=0, step=1, limit=4
    $region2: #{tpu_custom_call.1} parent=1 // loop_pre_header
      _
    $region3: #{tpu_custom_call.1} parent=1 // loop_header
      %s22 = sphi 0, %s26
      %p23 = scmp.ge.s32.totalorder %s22, 4
      %s29 = sphi 0, %s41
      %s30 = sphi 0, %s37
      %s31 = sphi 0, %s29
      %s32 = sphi 0, %s30
      %s33 = sphi 0, %s31
      %s34 = sphi 0, %s32
      %s46 = sphi 0, %s48
      %s49 = sphi 0, %s46
      %s50 = sphi 0, %s49
      %s66 = sphi 0, %s50
      %s82 = sphi 0, %s84
      %s85 = sphi 0, %s82
      %s86 = sphi 0, %s85
      %s102 = sphi 0, %s86
      %s118 = sphi 0, %s120
      %s121 = sphi 0, %s118
      %s122 = sphi 0, %s121
      %s138 = sphi 0, %s122
      %s142 = sphi 0, %s142
      %s144 = sphi 0, %s142
      %s145 = sphi 0, %s144
      %s159 = sphi 0, %s145
      %s163 = sphi 0, %s163
      %s165 = sphi 0, %s163
      %s166 = sphi 0, %s165
      %s180 = sphi 0, %s166
      %s184 = sphi 0, %s184
      %s186 = sphi 0, %s184
      %s187 = sphi 0, %s186
      %s201 = sphi 0, %s187
      %s209 = sphi 0, %s211
      %s212 = sphi 0, %s209
      %s213 = sphi 0, %s212
      %s229 = sphi 0, %s213
    $region4: #{tpu_custom_call.1} parent=1 // loop_header_branch
      %25 = sbr.rel (%p23) target = $region8
    $region5: #{tpu_custom_call.1} parent=1 // loop_body
      %s27 = ssub.s32 %s22, 1
      %s28 = ssub.s32 %s22, 2
      %s35 = sadd.s32 1, %s30
      %p36 = scmp.ge.s32.totalorder %s35, 1
      %s37 = scalar_select %p36, 0, %s35
      %s38 = sadd.s32 1, %s29
      %s39 = scalar_select %p36, %s38, %s29
      %p40 = scmp.ge.s32.totalorder %s39, 2
      %s41 = scalar_select %p40, 0, %s39
      %s42 = ssub.s32 %s29, %s41
      %s43 = ssub.s32 %s30, %s37
      %s44 = sor.u32 %s42, %s43
      %p45 = scmp.eq.s32.totalorder %s44, 0
      %s47 = sadd.s32 %s46, 1
      %s48 = scalar_select %p45, %s46, %s47
      %p51 = pneg %p45
      %p52 = scmp.eq.s32.totalorder %s22, 1
      %p53 = por %p51, %p52
      %p54 = scmp.ne.s32.totalorder %s46, %s49
      %p55 = scmp.eq.s32.totalorder %s22, 0
      %p56 = por %p54, %p55
      %p57 = scmp.ne.s32.totalorder %s46, %s49
      %p58 = scmp.eq.s32.totalorder %s27, 1
      %p59 = por %p57, %p58
      %p60 = scmp.ne.s32.totalorder %s49, %s50
      %p61 = scmp.eq.s32.totalorder %s27, 0
      %p62 = por %p60, %p61
      %p63 = scmp.ne.s32.totalorder %s49, %s50
      %p64 = scmp.eq.s32.totalorder %s28, 1
      %p65 = por %p63, %p64
      %p67 = scmp.ne.s32.totalorder %s50, %s66
      %p68 = scmp.eq.s32.totalorder %s28, 0
      %p69 = por %p67, %p68
      %s70 = smul.u32 %s30, 16
      %s71 = ssub.s32 %s70, 1
      %p72 = scmp.gt.s32.totalorder %s71, 0
      %s73 = scalar_select %p72, %s71, 0
      %s74 = smul.u32 %s37, 16
      %s75 = ssub.s32 %s74, 1
      %p76 = scmp.gt.s32.totalorder %s75, 0
      %s77 = scalar_select %p76, %s75, 0
      %s78 = ssub.s32 %s29, %s41
      %s79 = ssub.s32 %s73, %s77
      %s80 = sor.u32 %s78, %s79
      %p81 = scmp.eq.s32.totalorder %s80, 0
      %s83 = sadd.s32 %s82, 1
      %s84 = scalar_select %p81, %s82, %s83
      %p87 = pneg %p81
      %p88 = scmp.eq.s32.totalorder %s22, 1
      %p89 = por %p87, %p88
      %p90 = scmp.ne.s32.totalorder %s82, %s85
      %p91 = scmp.eq.s32.totalorder %s22, 0
      %p92 = por %p90, %p91
      %p93 = scmp.ne.s32.totalorder %s82, %s85
      %p94 = scmp.eq.s32.totalorder %s27, 1
      %p95 = por %p93, %p94
      %p96 = scmp.ne.s32.totalorder %s85, %s86
      %p97 = scmp.eq.s32.totalorder %s27, 0
      %p98 = por %p96, %p97
      %p99 = scmp.ne.s32.totalorder %s85, %s86
      %p100 = scmp.eq.s32.totalorder %s28, 1
      %p101 = por %p99, %p100
      %p103 = scmp.ne.s32.totalorder %s86, %s102
      %p104 = scmp.eq.s32.totalorder %s28, 0
      %p105 = por %p103, %p104
      %s106 = smul.u32 %s30, 16
      %s107 = sadd.s32 %s106, 16
      %p108 = scmp.lt.s32.totalorder %s107, 15
      %s109 = scalar_select %p108, %s107, 15
      %s110 = smul.u32 %s37, 16
      %s111 = sadd.s32 %s110, 16
      %p112 = scmp.lt.s32.totalorder %s111, 15
      %s113 = scalar_select %p112, %s111, 15
      %s114 = ssub.s32 %s29, %s41
      %s115 = ssub.s32 %s109, %s113
      %s116 = sor.u32 %s114, %s115
      %p117 = scmp.eq.s32.totalorder %s116, 0
      %s119 = sadd.s32 %s118, 1
      %s120 = scalar_select %p117, %s118, %s119
      %p123 = pneg %p117
      %p124 = scmp.eq.s32.totalorder %s22, 1
      %p125 = por %p123, %p124
      %p126 = scmp.ne.s32.totalorder %s118, %s121
      %p127 = scmp.eq.s32.totalorder %s22, 0
      %p128 = por %p126, %p127
      %p129 = scmp.ne.s32.totalorder %s118, %s121
      %p130 = scmp.eq.s32.totalorder %s27, 1
      %p131 = por %p129, %p130
      %p132 = scmp.ne.s32.totalorder %s121, %s122
      %p133 = scmp.eq.s32.totalorder %s27, 0
      %p134 = por %p132, %p133
      %p135 = scmp.ne.s32.totalorder %s121, %s122
      %p136 = scmp.eq.s32.totalorder %s28, 1
      %p137 = por %p135, %p136
      %p139 = scmp.ne.s32.totalorder %s122, %s138
      %p140 = scmp.eq.s32.totalorder %s28, 0
      %p141 = por %p139, %p140
      %s143 = sadd.s32 %s142, 1
      %p146 = scmp.eq.s32.totalorder %s22, 1
      %p147 = scmp.ne.s32.totalorder %s142, %s144
      %p148 = scmp.eq.s32.totalorder %s22, 0
      %p149 = por %p147, %p148
      %p150 = scmp.ne.s32.totalorder %s142, %s144
      %p151 = scmp.eq.s32.totalorder %s27, 1
      %p152 = por %p150, %p151
      %p153 = scmp.ne.s32.totalorder %s144, %s145
      %p154 = scmp.eq.s32.totalorder %s27, 0
      %p155 = por %p153, %p154
      %p156 = scmp.ne.s32.totalorder %s144, %s145
      %p157 = scmp.eq.s32.totalorder %s28, 1
      %p158 = por %p156, %p157
      %p160 = scmp.ne.s32.totalorder %s145, %s159
      %p161 = scmp.eq.s32.totalorder %s28, 0
      %p162 = por %p160, %p161
      %s164 = sadd.s32 %s163, 1
      %p167 = scmp.eq.s32.totalorder %s22, 1
      %p168 = scmp.ne.s32.totalorder %s163, %s165
      %p169 = scmp.eq.s32.totalorder %s22, 0
      %p170 = por %p168, %p169
      %p171 = scmp.ne.s32.totalorder %s163, %s165
      %p172 = scmp.eq.s32.totalorder %s27, 1
      %p173 = por %p171, %p172
      %p174 = scmp.ne.s32.totalorder %s165, %s166
      %p175 = scmp.eq.s32.totalorder %s27, 0
      %p176 = por %p174, %p175
      %p177 = scmp.ne.s32.totalorder %s165, %s166
      %p178 = scmp.eq.s32.totalorder %s28, 1
      %p179 = por %p177, %p178
      %p181 = scmp.ne.s32.totalorder %s166, %s180
      %p182 = scmp.eq.s32.totalorder %s28, 0
      %p183 = por %p181, %p182
      %s185 = sadd.s32 %s184, 1
      %p188 = scmp.eq.s32.totalorder %s22, 1
      %p189 = scmp.ne.s32.totalorder %s184, %s186
      %p190 = scmp.eq.s32.totalorder %s22, 0
      %p191 = por %p189, %p190
      %p192 = scmp.ne.s32.totalorder %s184, %s186
      %p193 = scmp.eq.s32.totalorder %s27, 1
      %p194 = por %p192, %p193
      %p195 = scmp.ne.s32.totalorder %s186, %s187
      %p196 = scmp.eq.s32.totalorder %s27, 0
      %p197 = por %p195, %p196
      %p198 = scmp.ne.s32.totalorder %s186, %s187
      %p199 = scmp.eq.s32.totalorder %s28, 1
      %p200 = por %p198, %p199
      %p202 = scmp.ne.s32.totalorder %s187, %s201
      %p203 = scmp.eq.s32.totalorder %s28, 0
      %p204 = por %p202, %p203
      %s205 = ssub.s32 %s29, %s41
      %s206 = ssub.s32 %s30, %s37
      %s207 = sor.u32 %s205, %s206
      %p208 = scmp.eq.s32.totalorder %s207, 0
      %s210 = sadd.s32 %s209, 1
      %s211 = scalar_select %p208, %s209, %s210
      %p214 = pneg %p208
      %p215 = scmp.eq.s32.totalorder %s22, 1
      %p216 = por %p214, %p215
      %p217 = scmp.ne.s32.totalorder %s209, %s212
      %p218 = scmp.eq.s32.totalorder %s22, 0
      %p219 = por %p217, %p218
      %p220 = scmp.ne.s32.totalorder %s209, %s212
      %p221 = scmp.eq.s32.totalorder %s27, 1
      %p222 = por %p220, %p221
      %p223 = scmp.ne.s32.totalorder %s212, %s213
      %p224 = scmp.eq.s32.totalorder %s27, 0
      %p225 = por %p223, %p224
      %p226 = scmp.ne.s32.totalorder %s212, %s213
      %p227 = scmp.eq.s32.totalorder %s28, 1
      %p228 = por %p226, %p227
      %p230 = scmp.ne.s32.totalorder %s213, %s229
      %p231 = scmp.eq.s32.totalorder %s28, 0
      %p232 = por %p230, %p231
      %p233 = scmp.le.s32.totalorder 1, %s22
      %p234 = scmp.lt.s32.totalorder %s22, 3
      %p235 = pnand %p233, %p234
      %p236 = pneg %p235
      // Predicated region
      $region9: #{tpu_custom_call.1} parent=5 // pred_check
        _
      $region10: #{tpu_custom_call.1} parent=5 // pred_check_branch
        %238 = sbr.rel (%p235) target = $region12
      $region11: #{tpu_custom_call.1} parent=5 // pred_region
        %s239 = ssub.s32 %s22, 1
        // Predicated region
        $region13: #{tpu_custom_call.1} parent=11 // pred_check
          %p240 = pneg %p155
        $region14: #{tpu_custom_call.1} parent=11 // pred_check_branch
          %242 = sbr.rel (%p240) target = $region16
        $region15: #{tpu_custom_call.1} parent=11 // pred_region
          %s244 = ssub.s32 1728, 1728
          %245 = vsyncadd [#allocation10], %s244
          %s246 = sshll.u32 [#allocation9], 4
          %s247 = int_to_ptr.vmem [resolvable:$true] %s246
          %252 = dma.hbm_to_vmem [thread:$0]  %s3, 1728, %s247, [#allocation10], 64, 64, 4
        $region16: #{tpu_custom_call.1} parent=11 // pred_fallthru
          _
        // Predicated region
        $region17: #{tpu_custom_call.1} parent=11 // pred_check
          %p253 = pneg %p176
        $region18: #{tpu_custom_call.1} parent=11 // pred_check_branch
          %255 = sbr.rel (%p253) target = $region20
        $region19: #{tpu_custom_call.1} parent=11 // pred_region
          _
        $region20: #{tpu_custom_call.1} parent=11 // pred_fallthru
          _
        // Predicated region
        $region21: #{tpu_custom_call.1} parent=11 // pred_check
          %p256 = pneg %p197
        $region22: #{tpu_custom_call.1} parent=11 // pred_check_branch
          %258 = sbr.rel (%p256) target = $region24
        $region23: #{tpu_custom_call.1} parent=11 // pred_region
          _
        $region24: #{tpu_custom_call.1} parent=11 // pred_fallthru
          _
      $region12: #{tpu_custom_call.1} parent=5 // pred_fallthru
        _
      %p259 = scmp.lt.s32.totalorder %s22, 2
      // Predicated region
      $region25: #{tpu_custom_call.1} parent=5 // pred_check
        %p260 = pneg %p259
      $region26: #{tpu_custom_call.1} parent=5 // pred_check_branch
        %262 = sbr.rel (%p260) target = $region28
      $region27: #{tpu_custom_call.1} parent=5 // pred_region
        // Predicated region
        $region29: #{tpu_custom_call.1} parent=27 // pred_check
          %p263 = pneg %p56
        $region30: #{tpu_custom_call.1} parent=27 // pred_check_branch
          %265 = sbr.rel (%p263) target = $region32
        $region31: #{tpu_custom_call.1} parent=27 // pred_region
          %s266 = sand.u32 %s46, 1
          %s267 = scalar_lea.sflag [#allocation4], %s266
          %s268 = sand.u32 %s46, 1
          %s269 = smul.addr %s268, 256
          %s270 = scalar_lea.vmem [#allocation3], %s269
          %s271 = smul.u32 16, %s30
          %s273 = ssub.s32 4096, 4096
          %274 = vsyncadd %s267, %s273
          %s275 = smul.addr %s271, 2
          %s276 = smul.addr %s29, 32
          %s277 = sadd.s32 %s275, %s276
          %s278 = smul.addr %s277, 128
          %s279 = scalar_lea.hbm %s0, %s278
          %s280 = sshll.u32 %s270, 4
          %s281 = int_to_ptr.vmem [resolvable:$true] %s280
          %286 = dma.hbm_to_vmem [thread:$0]  %s279, 4096, %s281, %s267, 128, 128, 8
        $region32: #{tpu_custom_call.1} parent=27 // pred_fallthru
          _
        // Predicated region
        $region33: #{tpu_custom_call.1} parent=27 // pred_check
          %p287 = pneg %p92
        $region34: #{tpu_custom_call.1} parent=27 // pred_check_branch
          %289 = sbr.rel (%p287) target = $region36
        $region35: #{tpu_custom_call.1} parent=27 // pred_region
          %s290 = sand.u32 %s22, 1
          %s291 = scalar_lea.sflag [#allocation7], %s290
          %s292 = sand.u32 %s82, 1
          %s293 = smul.addr %s292, 16
          %s294 = scalar_lea.vmem [#allocation6], %s293
          %s295 = smul.u32 %s30, 16
          %s296 = ssub.s32 %s295, 1
          %p297 = scmp.gt.s32.totalorder %s296, 0
          %s298 = scalar_select %p297, %s296, 0
          %s300 = ssub.s32 256, 256
          %301 = vsyncadd %s291, %s300
          %s302 = smul.addr %s298, 2
          %s303 = smul.addr %s29, 32
          %s304 = sadd.s32 %s302, %s303
          %s305 = smul.addr %s304, 128
          %s306 = scalar_lea.hbm %s1, %s305
          %s307 = sshll.u32 %s294, 4
          %s308 = int_to_ptr.vmem [resolvable:$true] %s307
          %313 = dma.hbm_to_vmem [thread:$0]  %s306, 256, %s308, %s291, 128, 128, 8
        $region36: #{tpu_custom_call.1} parent=27 // pred_fallthru
          _
        // Predicated region
        $region37: #{tpu_custom_call.1} parent=27 // pred_check
          %p314 = pneg %p128
        $region38: #{tpu_custom_call.1} parent=27 // pred_check_branch
          %316 = sbr.rel (%p314) target = $region40
        $region39: #{tpu_custom_call.1} parent=27 // pred_region
          %s317 = sand.u32 %s22, 1
          %s318 = scalar_lea.sflag [#allocation7], %s317
          %s319 = sand.u32 %s118, 1
          %s320 = smul.addr %s319, 16
          %s321 = scalar_lea.vmem [#allocation8], %s320
          %s322 = smul.u32 %s30, 16
          %s323 = sadd.s32 %s322, 16
          %p324 = scmp.lt.s32.totalorder %s323, 15
          %s325 = scalar_select %p324, %s323, 15
          %s327 = ssub.s32 256, 256
          %328 = vsyncadd %s318, %s327
          %s329 = smul.addr %s325, 2
          %s330 = smul.addr %s29, 32
          %s331 = sadd.s32 %s329, %s330
          %s332 = smul.addr %s331, 128
          %s333 = scalar_lea.hbm %s2, %s332
          %s334 = sshll.u32 %s321, 4
          %s335 = int_to_ptr.vmem [resolvable:$true] %s334
          %340 = dma.hbm_to_vmem [thread:$0]  %s333, 256, %s335, %s318, 128, 128, 8
        $region40: #{tpu_custom_call.1} parent=27 // pred_fallthru
          _
      $region28: #{tpu_custom_call.1} parent=5 // pred_fallthru
        _
      %p341 = scmp.le.s32.totalorder 1, %s22
      %p342 = scmp.lt.s32.totalorder %s22, 3
      %p343 = pnand %p341, %p342
      %p344 = pneg %p343
      // Predicated region
      $region41: #{tpu_custom_call.1} parent=5 // pred_check
        _
      $region42: #{tpu_custom_call.1} parent=5 // pred_check_branch
        %346 = sbr.rel (%p343) target = $region44
      $region43: #{tpu_custom_call.1} parent=5 // pred_region
        %s347 = ssub.s32 %s22, 1
        %s348 = sand.u32 %s49, 1
        %s349 = scalar_lea.sflag [#allocation4], %s348
        %s350 = sand.u32 %s49, 1
        %s351 = smul.addr %s350, 256
        %s352 = scalar_lea.vmem [#allocation3], %s351
        // Predicated region
        $region45: #{tpu_custom_call.1} parent=43 // pred_check
          %p353 = pneg %p62
        $region46: #{tpu_custom_call.1} parent=43 // pred_check_branch
          %355 = sbr.rel (%p353) target = $region48
        $region47: #{tpu_custom_call.1} parent=43 // pred_region
          %356 = dma.done %s349, 4096
        $region48: #{tpu_custom_call.1} parent=43 // pred_fallthru
          _
        %s357 = sand.u32 %s27, 1
        %s358 = scalar_lea.sflag [#allocation7], %s357
        %s359 = sand.u32 %s85, 1
        %s360 = smul.addr %s359, 16
        %s361 = scalar_lea.vmem [#allocation6], %s360
        // Predicated region
        $region49: #{tpu_custom_call.1} parent=43 // pred_check
          %p362 = pneg %p98
        $region50: #{tpu_custom_call.1} parent=43 // pred_check_branch
          %364 = sbr.rel (%p362) target = $region52
        $region51: #{tpu_custom_call.1} parent=43 // pred_region
          %365 = dma.done %s358, 256
        $region52: #{tpu_custom_call.1} parent=43 // pred_fallthru
          _
        %s366 = sand.u32 %s27, 1
        %s367 = scalar_lea.sflag [#allocation7], %s366
        %s368 = sand.u32 %s121, 1
        %s369 = smul.addr %s368, 16
        %s370 = scalar_lea.vmem [#allocation8], %s369
        // Predicated region
        $region53: #{tpu_custom_call.1} parent=43 // pred_check
          %p371 = pneg %p134
        $region54: #{tpu_custom_call.1} parent=43 // pred_check_branch
          %373 = sbr.rel (%p371) target = $region56
        $region55: #{tpu_custom_call.1} parent=43 // pred_region
          %374 = dma.done %s367, 256
        $region56: #{tpu_custom_call.1} parent=43 // pred_fallthru
          _
        // Predicated region
        $region57: #{tpu_custom_call.1} parent=43 // pred_check
          %p375 = pneg %p155
        $region58: #{tpu_custom_call.1} parent=43 // pred_check_branch
          %377 = sbr.rel (%p375) target = $region60
        $region59: #{tpu_custom_call.1} parent=43 // pred_region
          %378 = dma.done [#allocation10], 1728
        $region60: #{tpu_custom_call.1} parent=43 // pred_fallthru
          _
        %s379 = sand.u32 %s49, 1
        %s380 = scalar_lea.sflag [#allocation4], %s379
        %s381 = sand.u32 %s49, 1
        %s382 = smul.addr %s381, 256
        %s383 = scalar_lea.vmem [#allocation3], %s382
        %p384 = pneg %p62
        %p385 = pneg %p59
        %s386 = sand.u32 %s27, 1
        %s387 = scalar_lea.sflag [#allocation7], %s386
        %s388 = sand.u32 %s85, 1
        %s389 = smul.addr %s388, 16
        %s390 = scalar_lea.vmem [#allocation6], %s389
        %p391 = pneg %p98
        %p392 = pneg %p95
        %s393 = sand.u32 %s27, 1
        %s394 = scalar_lea.sflag [#allocation7], %s393
        %s395 = sand.u32 %s121, 1
        %s396 = smul.addr %s395, 16
        %s397 = scalar_lea.vmem [#allocation8], %s396
        %p398 = pneg %p134
        %p399 = pneg %p131
        %p400 = pneg %p155
        %p401 = pneg %p152
        %p402 = pneg %p176
        %p403 = pneg %p173
        %p404 = pneg %p197
        %p405 = pneg %p194
        %p406 = pneg %p225
        %p407 = pneg %p222
        %s408 = sand.u32 %s212, 1
        %s409 = scalar_lea.sflag [#allocation5], %s408
        %s410 = sand.u32 %s212, 1
        %s411 = smul.addr %s410, 128
        %s412 = scalar_lea.vmem [#allocation11], %s411
        %s413 = smul.u32 16, %s32
        %s414 = smul.u32 %s32, 16
        %s415 = ssub.s32 %s414, 1
        %p416 = scmp.gt.s32.totalorder %s415, 0
        %s417 = scalar_select %p416, %s415, 0
        %s418 = smul.u32 %s32, 16
        %s419 = sadd.s32 %s418, 16
        %p420 = scmp.lt.s32.totalorder %s419, 15
        %s421 = scalar_select %p420, %s419, 15
        %s422 = smul.u32 16, %s32
        %vm424 = vcmask 188416
        %vm425 = vsmask.f32 256
        %vm426 = vmand %vm424, %vm425
        %v427 = vld [vmem:[#allocation2] sm:$0x1]
        %v428 = vsel %vm426, 0, %v427
        %429 = vst [vmem:[#allocation2] sm:$0x1] %v428
        %v430 = vld [vmem:[#allocation2 + $0xc] sm:$0x1]
        %v431 = vsel %vm426, 0, %v430
        %432 = vst [vmem:[#allocation2 + $0xc] sm:$0x1] %v431
        %v433 = vld [vmem:[#allocation2 + $0x18] sm:$0x1]
        %v434 = vsel %vm426, 0, %v433
        %435 = vst [vmem:[#allocation2 + $0x18] sm:$0x1] %v434
        %v436 = vld [vmem:[#allocation2 + $0x24] sm:$0x1]
        %v437 = vsel %vm426, 0, %v436
        %438 = vst [vmem:[#allocation2 + $0x24] sm:$0x1] %v437
        %v439 = vld [vmem:[#allocation2 + $0x30] sm:$0x1]
        %v440 = vsel %vm426, 0, %v439
        %441 = vst [vmem:[#allocation2 + $0x30] sm:$0x1] %v440
        %v442 = vld [vmem:[#allocation2 + $0x3c] sm:$0x1]
        %v443 = vsel %vm426, 0, %v442
        %444 = vst [vmem:[#allocation2 + $0x3c] sm:$0x1] %v443
        %v445 = vld [vmem:[#allocation2 + $0x48] sm:$0x1]
        %v446 = vsel %vm426, 0, %v445
        %447 = vst [vmem:[#allocation2 + $0x48] sm:$0x1] %v446
        %v448 = vld [vmem:[#allocation2 + $0x54] sm:$0x1]
        %v449 = vsel %vm426, 0, %v448
        %450 = vst [vmem:[#allocation2 + $0x54] sm:$0x1] %v449
        %v451 = vld [vmem:[#allocation2 + $0x60] sm:$0x1]
        %v452 = vsel %vm426, 0, %v451
        %453 = vst [vmem:[#allocation2 + $0x60] sm:$0x1] %v452
        %v454 = vld [vmem:[#allocation2 + $0x6c] sm:$0x1]
        %v455 = vsel %vm426, 0, %v454
        %456 = vst [vmem:[#allocation2 + $0x6c] sm:$0x1] %v455
        %v457 = vld [vmem:[#allocation2 + $0x78] sm:$0x1]
        %v458 = vsel %vm426, 0, %v457
        %459 = vst [vmem:[#allocation2 + $0x78] sm:$0x1] %v458
        %v460 = vld [vmem:[#allocation2 + $0x84] sm:$0x1]
        %v461 = vsel %vm426, 0, %v460
        %462 = vst [vmem:[#allocation2 + $0x84] sm:$0x1] %v461
        %v463 = vld [vmem:[#allocation2 + $0x90] sm:$0x1]
        %v464 = vsel %vm426, 0, %v463
        %465 = vst [vmem:[#allocation2 + $0x90] sm:$0x1] %v464
        %v466 = vld [vmem:[#allocation2 + $0x9c] sm:$0x1]
        %v467 = vsel %vm426, 0, %v466
        %468 = vst [vmem:[#allocation2 + $0x9c] sm:$0x1] %v467
        %v469 = vld [vmem:[#allocation2 + $0xa8] sm:$0x1]
        %v470 = vsel %vm426, 0, %v469
        %471 = vst [vmem:[#allocation2 + $0xa8] sm:$0x1] %v470
        %v472 = vld [vmem:[#allocation2 + $0xb4] sm:$0x1]
        %v473 = vsel %vm426, 0, %v472
        %474 = vst [vmem:[#allocation2 + $0xb4] sm:$0x1] %v473
        %v475 = vld [vmem:[#allocation2 + $0xc0] sm:$0x1]
        %v476 = vsel %vm426, 0, %v475
        %477 = vst [vmem:[#allocation2 + $0xc0] sm:$0x1] %v476
        %v478 = vld [vmem:[#allocation2 + $0xcc] sm:$0x1]
        %v479 = vsel %vm426, 0, %v478
        %480 = vst [vmem:[#allocation2 + $0xcc] sm:$0x1] %v479
        %vm481 = vsmask.f32 7938
        %vm482 = vmand %vm424, %vm481
        %v483 = vld [vmem:[#allocation2 + $0x8] sm:$0x1]
        %v484 = vsel %vm482, 0, %v483
        %485 = vst [vmem:[#allocation2 + $0x8] sm:$0x1] %v484
        %v486 = vld [vmem:[#allocation2 + $0x14] sm:$0x1]
        %v487 = vsel %vm482, 0, %v486
        %488 = vst [vmem:[#allocation2 + $0x14] sm:$0x1] %v487
        %v489 = vld [vmem:[#allocation2 + $0x20] sm:$0x1]
        %v490 = vsel %vm482, 0, %v489
        %491 = vst [vmem:[#allocation2 + $0x20] sm:$0x1] %v490
        %v492 = vld [vmem:[#allocation2 + $0x2c] sm:$0x1]
        %v493 = vsel %vm482, 0, %v492
        %494 = vst [vmem:[#allocation2 + $0x2c] sm:$0x1] %v493
        %v495 = vld [vmem:[#allocation2 + $0x38] sm:$0x1]
        %v496 = vsel %vm482, 0, %v495
        %497 = vst [vmem:[#allocation2 + $0x38] sm:$0x1] %v496
        %v498 = vld [vmem:[#allocation2 + $0x44] sm:$0x1]
        %v499 = vsel %vm482, 0, %v498
        %500 = vst [vmem:[#allocation2 + $0x44] sm:$0x1] %v499
        %v501 = vld [vmem:[#allocation2 + $0x50] sm:$0x1]
        %v502 = vsel %vm482, 0, %v501
        %503 = vst [vmem:[#allocation2 + $0x50] sm:$0x1] %v502
        %v504 = vld [vmem:[#allocation2 + $0x5c] sm:$0x1]
        %v505 = vsel %vm482, 0, %v504
        %506 = vst [vmem:[#allocation2 + $0x5c] sm:$0x1] %v505
        %v507 = vld [vmem:[#allocation2 + $0x68] sm:$0x1]
        %v508 = vsel %vm482, 0, %v507
        %509 = vst [vmem:[#allocation2 + $0x68] sm:$0x1] %v508
        %v510 = vld [vmem:[#allocation2 + $0x74] sm:$0x1]
        %v511 = vsel %vm482, 0, %v510
        %512 = vst [vmem:[#allocation2 + $0x74] sm:$0x1] %v511
        %v513 = vld [vmem:[#allocation2 + $0x80] sm:$0x1]
        %v514 = vsel %vm482, 0, %v513
        %515 = vst [vmem:[#allocation2 + $0x80] sm:$0x1] %v514
        %v516 = vld [vmem:[#allocation2 + $0x8c] sm:$0x1]
        %v517 = vsel %vm482, 0, %v516
        %518 = vst [vmem:[#allocation2 + $0x8c] sm:$0x1] %v517
        %v519 = vld [vmem:[#allocation2 + $0x98] sm:$0x1]
        %v520 = vsel %vm482, 0, %v519
        %521 = vst [vmem:[#allocation2 + $0x98] sm:$0x1] %v520
        %v522 = vld [vmem:[#allocation2 + $0xa4] sm:$0x1]
        %v523 = vsel %vm482, 0, %v522
        %524 = vst [vmem:[#allocation2 + $0xa4] sm:$0x1] %v523
        %v525 = vld [vmem:[#allocation2 + $0xb0] sm:$0x1]
        %v526 = vsel %vm482, 0, %v525
        %527 = vst [vmem:[#allocation2 + $0xb0] sm:$0x1] %v526
        %v528 = vld [vmem:[#allocation2 + $0xbc] sm:$0x1]
        %v529 = vsel %vm482, 0, %v528
        %530 = vst [vmem:[#allocation2 + $0xbc] sm:$0x1] %v529
        %v531 = vld [vmem:[#allocation2 + $0xc8] sm:$0x1]
        %v532 = vsel %vm482, 0, %v531
        %533 = vst [vmem:[#allocation2 + $0xc8] sm:$0x1] %v532
        %v534 = vld [vmem:[#allocation2 + $0xd4] sm:$0x1]
        %v535 = vsel %vm482, 0, %v534
        %536 = vst [vmem:[#allocation2 + $0xd4] sm:$0x1] %v535
        %v537 = vld [vmem:[%s352] sm:$0xff]
        %v538 = vld [vmem:[%s352 + $0x8] sm:$0xff]
        %v539 = vld [vmem:[%s352 + $0x10] sm:$0xff]
        %v540 = vld [vmem:[%s352 + $0x18] sm:$0xff]
        %v541 = vld [vmem:[%s352 + $0x20] sm:$0xff]
        %v542 = vld [vmem:[%s352 + $0x28] sm:$0xff]
        %v543 = vld [vmem:[%s352 + $0x30] sm:$0xff]
        %v544 = vld [vmem:[%s352 + $0x38] sm:$0xff]
        %v545 = vld [vmem:[%s352 + $0x40] sm:$0xff]
        %v546 = vld [vmem:[%s352 + $0x48] sm:$0xff]
        %v547 = vld [vmem:[%s352 + $0x50] sm:$0xff]
        %v548 = vld [vmem:[%s352 + $0x58] sm:$0xff]
        %v549 = vld [vmem:[%s352 + $0x60] sm:$0xff]
        %v550 = vld [vmem:[%s352 + $0x68] sm:$0xff]
        %v551 = vld [vmem:[%s352 + $0x70] sm:$0xff]
        %v552 = vld [vmem:[%s352 + $0x78] sm:$0xff]
        %v553 = vld [vmem:[%s352 + $0x80] sm:$0xff]
        %v554 = vld [vmem:[%s352 + $0x88] sm:$0xff]
        %v555 = vld [vmem:[%s352 + $0x90] sm:$0xff]
        %v556 = vld [vmem:[%s352 + $0x98] sm:$0xff]
        %v557 = vld [vmem:[%s352 + $0xa0] sm:$0xff]
        %v558 = vld [vmem:[%s352 + $0xa8] sm:$0xff]
        %v559 = vld [vmem:[%s352 + $0xb0] sm:$0xff]
        %v560 = vld [vmem:[%s352 + $0xb8] sm:$0xff]
        %v561 = vld [vmem:[%s352 + $0xc0] sm:$0xff]
        %v562 = vld [vmem:[%s352 + $0xc8] sm:$0xff]
        %v563 = vld [vmem:[%s352 + $0xd0] sm:$0xff]
        %v564 = vld [vmem:[%s352 + $0xd8] sm:$0xff]
        %v565 = vld [vmem:[%s352 + $0xe0] sm:$0xff]
        %v566 = vld [vmem:[%s352 + $0xe8] sm:$0xff]
        %v567 = vld [vmem:[%s352 + $0xf0] sm:$0xff]
        %v568 = vld [vmem:[%s352 + $0xf8] sm:$0xff]
        %v569 = vpack.c.bf16 %v538, %v537
        %v570 = vpack.c.bf16 %v540, %v539
        %v571 = vpack.c.bf16 %v542, %v541
        %v572 = vpack.c.bf16 %v544, %v543
        %v573 = vpack.c.bf16 %v546, %v545
        %v574 = vpack.c.bf16 %v548, %v547
        %v575 = vpack.c.bf16 %v550, %v549
        %v576 = vpack.c.bf16 %v552, %v551
        %v577 = vpack.c.bf16 %v554, %v553
        %v578 = vpack.c.bf16 %v556, %v555
        %v579 = vpack.c.bf16 %v558, %v557
        %v580 = vpack.c.bf16 %v560, %v559
        %v581 = vpack.c.bf16 %v562, %v561
        %v582 = vpack.c.bf16 %v564, %v563
        %v583 = vpack.c.bf16 %v566, %v565
        %v584 = vpack.c.bf16 %v568, %v567
        %v601 = vunpack.c.l.b16 %v569
        %v602 = vunpack.c.h.b16 %v569
        %v603 = vunpack.c.l.b16 %v570
        %v604 = vunpack.c.h.b16 %v570
        %v605 = vunpack.c.l.b16 %v571
        %v606 = vunpack.c.h.b16 %v571
        %v607 = vunpack.c.l.b16 %v572
        %v608 = vunpack.c.h.b16 %v572
        %v609 = vunpack.c.l.b16 %v573
        %v610 = vunpack.c.h.b16 %v573
        %v611 = vunpack.c.l.b16 %v574
        %v612 = vunpack.c.h.b16 %v574
        %v613 = vunpack.c.l.b16 %v575
        %v614 = vunpack.c.h.b16 %v575
        %v615 = vunpack.c.l.b16 %v576
        %v616 = vunpack.c.h.b16 %v576
        %v617 = vunpack.c.l.b16 %v577
        %v618 = vunpack.c.h.b16 %v577
        %v619 = vunpack.c.l.b16 %v578
        %v620 = vunpack.c.h.b16 %v578
        %v621 = vunpack.c.l.b16 %v579
        %v622 = vunpack.c.h.b16 %v579
        %v623 = vunpack.c.l.b16 %v580
        %v624 = vunpack.c.h.b16 %v580
        %v625 = vunpack.c.l.b16 %v581
        %v626 = vunpack.c.h.b16 %v581
        %v627 = vunpack.c.l.b16 %v582
        %v628 = vunpack.c.h.b16 %v582
        %v629 = vunpack.c.l.b16 %v583
        %v630 = vunpack.c.h.b16 %v583
        %v631 = vunpack.c.l.b16 %v584
        %v632 = vunpack.c.h.b16 %v584
        %v633 = vpack.c.b16 %v601, %v601
        %v634 = vpack.c.b16 %v602, %v602
        %v635 = vpack.c.b16 %v603, %v603
        %v636 = vpack.c.b16 %v604, %v604
        %v637 = vpack.c.b16 %v605, %v605
        %v638 = vpack.c.b16 %v606, %v606
        %v639 = vpack.c.b16 %v607, %v607
        %v640 = vpack.c.b16 %v608, %v608
        %v641 = vpack.c.b16 %v609, %v609
        %v642 = vpack.c.b16 %v610, %v610
        %v643 = vpack.c.b16 %v611, %v611
        %v644 = vpack.c.b16 %v612, %v612
        %v645 = vpack.c.b16 %v613, %v613
        %v646 = vpack.c.b16 %v614, %v614
        %v647 = vpack.c.b16 %v615, %v615
        %v648 = vpack.c.b16 %v616, %v616
        %v649 = vpack.c.b16 %v617, %v617
        %v650 = vpack.c.b16 %v618, %v618
        %v651 = vpack.c.b16 %v619, %v619
        %v652 = vpack.c.b16 %v620, %v620
        %v653 = vpack.c.b16 %v621, %v621
        %v654 = vpack.c.b16 %v622, %v622
        %v655 = vpack.c.b16 %v623, %v623
        %v656 = vpack.c.b16 %v624, %v624
        %v657 = vpack.c.b16 %v625, %v625
        %v658 = vpack.c.b16 %v626, %v626
        %v659 = vpack.c.b16 %v627, %v627
        %v660 = vpack.c.b16 %v628, %v628
        %v661 = vpack.c.b16 %v629, %v629
        %v662 = vpack.c.b16 %v630, %v630
        %v663 = vpack.c.b16 %v631, %v631
        %v664 = vpack.c.b16 %v632, %v632
        %vm665 = vsmask.f32 4368
        %vm666 = vmor %vm425, %vm665
        %v668 = vshrl.u32 %v633, 16
        %v670 = vrot.slane %v668, 7
        %v671 = vshll.u32 %v633, 16
        %v673 = vor.u32 %v670, %v671
        %v674 = vrot.slane %v670, 4
        %v676 = vshrl.u32 %v634, 16
        %v678 = vrot.slane %v676, 7
        %v679 = vshll.u32 %v634, 16
        %v681 = vor.u32 %v678, %v679
        %v682 = vsel %vm666, %v674, %v681
        %v683 = vrot.slane %v678, 4
        %v685 = vshrl.u32 %v635, 16
        %v687 = vrot.slane %v685, 7
        %v688 = vshll.u32 %v635, 16
        %v690 = vor.u32 %v687, %v688
        %v691 = vrot.slane %v687, 4
        %v693 = vshrl.u32 %v636, 16
        %v695 = vrot.slane %v693, 7
        %v696 = vshll.u32 %v636, 16
        %v698 = vor.u32 %v695, %v696
        %v699 = vsel %vm666, %v691, %v698
        %v700 = vrot.slane %v695, 4
        %v702 = vshrl.u32 %v637, 16
        %v704 = vrot.slane %v702, 7
        %v705 = vshll.u32 %v637, 16
        %v707 = vor.u32 %v704, %v705
        %v708 = vrot.slane %v704, 4
        %v710 = vshrl.u32 %v638, 16
        %v712 = vrot.slane %v710, 7
        %v713 = vshll.u32 %v638, 16
        %v715 = vor.u32 %v712, %v713
        %v716 = vsel %vm666, %v708, %v715
        %v717 = vrot.slane %v712, 4
        %v719 = vshrl.u32 %v639, 16
        %v721 = vrot.slane %v719, 7
        %v722 = vshll.u32 %v639, 16
        %v724 = vor.u32 %v721, %v722
        %v725 = vrot.slane %v721, 4
        %v727 = vshrl.u32 %v640, 16
        %v729 = vrot.slane %v727, 7
        %v730 = vshll.u32 %v640, 16
        %v732 = vor.u32 %v729, %v730
        %v733 = vsel %vm666, %v725, %v732
        %v734 = vrot.slane %v729, 4
        %v736 = vshrl.u32 %v641, 16
        %v738 = vrot.slane %v736, 7
        %v739 = vshll.u32 %v641, 16
        %v741 = vor.u32 %v738, %v739
        %v742 = vrot.slane %v738, 4
        %v744 = vshrl.u32 %v642, 16
        %v746 = vrot.slane %v744, 7
        %v747 = vshll.u32 %v642, 16
        %v749 = vor.u32 %v746, %v747
        %v750 = vsel %vm666, %v742, %v749
        %v751 = vrot.slane %v746, 4
        %v753 = vshrl.u32 %v643, 16
        %v755 = vrot.slane %v753, 7
        %v756 = vshll.u32 %v643, 16
        %v758 = vor.u32 %v755, %v756
        %v759 = vrot.slane %v755, 4
        %v761 = vshrl.u32 %v644, 16
        %v763 = vrot.slane %v761, 7
        %v764 = vshll.u32 %v644, 16
        %v766 = vor.u32 %v763, %v764
        %v767 = vsel %vm666, %v759, %v766
        %v768 = vrot.slane %v763, 4
        %v770 = vshrl.u32 %v645, 16
        %v772 = vrot.slane %v770, 7
        %v773 = vshll.u32 %v645, 16
        %v775 = vor.u32 %v772, %v773
        %v776 = vrot.slane %v772, 4
        %v778 = vshrl.u32 %v646, 16
        %v780 = vrot.slane %v778, 7
        %v781 = vshll.u32 %v646, 16
        %v783 = vor.u32 %v780, %v781
        %v784 = vsel %vm666, %v776, %v783
        %v785 = vrot.slane %v780, 4
        %v787 = vshrl.u32 %v647, 16
        %v789 = vrot.slane %v787, 7
        %v790 = vshll.u32 %v647, 16
        %v792 = vor.u32 %v789, %v790
        %v793 = vrot.slane %v789, 4
        %v795 = vshrl.u32 %v648, 16
        %v797 = vrot.slane %v795, 7
        %v798 = vshll.u32 %v648, 16
        %v800 = vor.u32 %v797, %v798
        %v801 = vsel %vm666, %v793, %v800
        %v802 = vrot.slane %v797, 4
        %v804 = vshrl.u32 %v649, 16
        %v806 = vrot.slane %v804, 7
        %v807 = vshll.u32 %v649, 16
        %v809 = vor.u32 %v806, %v807
        %v810 = vrot.slane %v806, 4
        %v812 = vshrl.u32 %v650, 16
        %v814 = vrot.slane %v812, 7
        %v815 = vshll.u32 %v650, 16
        %v817 = vor.u32 %v814, %v815
        %v818 = vsel %vm666, %v810, %v817
        %v819 = vrot.slane %v814, 4
        %v821 = vshrl.u32 %v651, 16
        %v823 = vrot.slane %v821, 7
        %v824 = vshll.u32 %v651, 16
        %v826 = vor.u32 %v823, %v824
        %v827 = vrot.slane %v823, 4
        %v829 = vshrl.u32 %v652, 16
        %v831 = vrot.slane %v829, 7
        %v832 = vshll.u32 %v652, 16
        %v834 = vor.u32 %v831, %v832
        %v835 = vsel %vm666, %v827, %v834
        %v836 = vrot.slane %v831, 4
        %v838 = vshrl.u32 %v653, 16
        %v840 = vrot.slane %v838, 7
        %v841 = vshll.u32 %v653, 16
        %v843 = vor.u32 %v840, %v841
        %v844 = vrot.slane %v840, 4
        %v846 = vshrl.u32 %v654, 16
        %v848 = vrot.slane %v846, 7
        %v849 = vshll.u32 %v654, 16
        %v851 = vor.u32 %v848, %v849
        %v852 = vsel %vm666, %v844, %v851
        %v853 = vrot.slane %v848, 4
        %v855 = vshrl.u32 %v655, 16
        %v857 = vrot.slane %v855, 7
        %v858 = vshll.u32 %v655, 16
        %v860 = vor.u32 %v857, %v858
        %v861 = vrot.slane %v857, 4
        %v863 = vshrl.u32 %v656, 16
        %v865 = vrot.slane %v863, 7
        %v866 = vshll.u32 %v656, 16
        %v868 = vor.u32 %v865, %v866
        %v869 = vsel %vm666, %v861, %v868
        %v870 = vrot.slane %v865, 4
        %v872 = vshrl.u32 %v657, 16
        %v874 = vrot.slane %v872, 7
        %v875 = vshll.u32 %v657, 16
        %v877 = vor.u32 %v874, %v875
        %v878 = vrot.slane %v874, 4
        %v880 = vshrl.u32 %v658, 16
        %v882 = vrot.slane %v880, 7
        %v883 = vshll.u32 %v658, 16
        %v885 = vor.u32 %v882, %v883
        %v886 = vsel %vm666, %v878, %v885
        %v887 = vrot.slane %v882, 4
        %v889 = vshrl.u32 %v659, 16
        %v891 = vrot.slane %v889, 7
        %v892 = vshll.u32 %v659, 16
        %v894 = vor.u32 %v891, %v892
        %v895 = vrot.slane %v891, 4
        %v897 = vshrl.u32 %v660, 16
        %v899 = vrot.slane %v897, 7
        %v900 = vshll.u32 %v660, 16
        %v902 = vor.u32 %v899, %v900
        %v903 = vsel %vm666, %v895, %v902
        %v904 = vrot.slane %v899, 4
        %v906 = vshrl.u32 %v661, 16
        %v908 = vrot.slane %v906, 7
        %v909 = vshll.u32 %v661, 16
        %v911 = vor.u32 %v908, %v909
        %v912 = vrot.slane %v908, 4
        %v914 = vshrl.u32 %v662, 16
        %v916 = vrot.slane %v914, 7
        %v917 = vshll.u32 %v662, 16
        %v919 = vor.u32 %v916, %v917
        %v920 = vsel %vm666, %v912, %v919
        %v921 = vrot.slane %v916, 4
        %v923 = vshrl.u32 %v663, 16
        %v925 = vrot.slane %v923, 7
        %v926 = vshll.u32 %v663, 16
        %v928 = vor.u32 %v925, %v926
        %v929 = vrot.slane %v925, 4
        %v931 = vshrl.u32 %v664, 16
        %v933 = vrot.slane %v931, 7
        %v934 = vshll.u32 %v664, 16
        %v936 = vor.u32 %v933, %v934
        %v937 = vsel %vm666, %v929, %v936
        %v938 = vrot.slane %v933, 4
        %s987 = scalar_lea.vmem [#allocation2], 12
        %vm988 = vcmask 191488
        %vm989 = vmand %vm988, %vm481
        %v990 = vld [vmem:[%s987] sm:$0xf]
        %v991 = vsel %vm989, %v673, %v990
        %992 = vst [vmem:[%s987] sm:$0xf] %v991
        %vm993 = vcmask 191488
        %994 = vst.msk [vmem:[%s987 + $0x4] sm:$0xf] %vm993, %v682
        %v995 = vld [vmem:[%s987 + $0x8] sm:$0x1]
        %v996 = vsel %vm426, %v683, %v995
        %997 = vst [vmem:[%s987 + $0x8] sm:$0x1] %v996
        %v998 = vld [vmem:[%s987 + $0xc] sm:$0xf]
        %v999 = vsel %vm989, %v690, %v998
        %1000 = vst [vmem:[%s987 + $0xc] sm:$0xf] %v999
        %1001 = vst.msk [vmem:[%s987 + $0x10] sm:$0xf] %vm993, %v699
        %v1002 = vld [vmem:[%s987 + $0x14] sm:$0x1]
        %v1003 = vsel %vm426, %v700, %v1002
        %1004 = vst [vmem:[%s987 + $0x14] sm:$0x1] %v1003
        %v1005 = vld [vmem:[%s987 + $0x18] sm:$0xf]
        %v1006 = vsel %vm989, %v707, %v1005
        %1007 = vst [vmem:[%s987 + $0x18] sm:$0xf] %v1006
        %1008 = vst.msk [vmem:[%s987 + $0x1c] sm:$0xf] %vm993, %v716
        %v1009 = vld [vmem:[%s987 + $0x20] sm:$0x1]
        %v1010 = vsel %vm426, %v717, %v1009
        %1011 = vst [vmem:[%s987 + $0x20] sm:$0x1] %v1010
        %v1012 = vld [vmem:[%s987 + $0x24] sm:$0xf]
        %v1013 = vsel %vm989, %v724, %v1012
        %1014 = vst [vmem:[%s987 + $0x24] sm:$0xf] %v1013
        %1015 = vst.msk [vmem:[%s987 + $0x28] sm:$0xf] %vm993, %v733
        %v1016 = vld [vmem:[%s987 + $0x2c] sm:$0x1]
        %v1017 = vsel %vm426, %v734, %v1016
        %1018 = vst [vmem:[%s987 + $0x2c] sm:$0x1] %v1017
        %v1019 = vld [vmem:[%s987 + $0x30] sm:$0xf]
        %v1020 = vsel %vm989, %v741, %v1019
        %1021 = vst [vmem:[%s987 + $0x30] sm:$0xf] %v1020
        %1022 = vst.msk [vmem:[%s987 + $0x34] sm:$0xf] %vm993, %v750
        %v1023 = vld [vmem:[%s987 + $0x38] sm:$0x1]
        %v1024 = vsel %vm426, %v751, %v1023
        %1025 = vst [vmem:[%s987 + $0x38] sm:$0x1] %v1024
        %v1026 = vld [vmem:[%s987 + $0x3c] sm:$0xf]
        %v1027 = vsel %vm989, %v758, %v1026
        %1028 = vst [vmem:[%s987 + $0x3c] sm:$0xf] %v1027
        %1029 = vst.msk [vmem:[%s987 + $0x40] sm:$0xf] %vm993, %v767
        %v1030 = vld [vmem:[%s987 + $0x44] sm:$0x1]
        %v1031 = vsel %vm426, %v768, %v1030
        %1032 = vst [vmem:[%s987 + $0x44] sm:$0x1] %v1031
        %v1033 = vld [vmem:[%s987 + $0x48] sm:$0xf]
        %v1034 = vsel %vm989, %v775, %v1033
        %1035 = vst [vmem:[%s987 + $0x48] sm:$0xf] %v1034
        %1036 = vst.msk [vmem:[%s987 + $0x4c] sm:$0xf] %vm993, %v784
        %v1037 = vld [vmem:[%s987 + $0x50] sm:$0x1]
        %v1038 = vsel %vm426, %v785, %v1037
        %1039 = vst [vmem:[%s987 + $0x50] sm:$0x1] %v1038
        %v1040 = vld [vmem:[%s987 + $0x54] sm:$0xf]
        %v1041 = vsel %vm989, %v792, %v1040
        %1042 = vst [vmem:[%s987 + $0x54] sm:$0xf] %v1041
        %1043 = vst.msk [vmem:[%s987 + $0x58] sm:$0xf] %vm993, %v801
        %v1044 = vld [vmem:[%s987 + $0x5c] sm:$0x1]
        %v1045 = vsel %vm426, %v802, %v1044
        %1046 = vst [vmem:[%s987 + $0x5c] sm:$0x1] %v1045
        %v1047 = vld [vmem:[%s987 + $0x60] sm:$0xf]
        %v1048 = vsel %vm989, %v809, %v1047
        %1049 = vst [vmem:[%s987 + $0x60] sm:$0xf] %v1048
        %1050 = vst.msk [vmem:[%s987 + $0x64] sm:$0xf] %vm993, %v818
        %v1051 = vld [vmem:[%s987 + $0x68] sm:$0x1]
        %v1052 = vsel %vm426, %v819, %v1051
        %1053 = vst [vmem:[%s987 + $0x68] sm:$0x1] %v1052
        %v1054 = vld [vmem:[%s987 + $0x6c] sm:$0xf]
        %v1055 = vsel %vm989, %v826, %v1054
        %1056 = vst [vmem:[%s987 + $0x6c] sm:$0xf] %v1055
        %1057 = vst.msk [vmem:[%s987 + $0x70] sm:$0xf] %vm993, %v835
        %v1058 = vld [vmem:[%s987 + $0x74] sm:$0x1]
        %v1059 = vsel %vm426, %v836, %v1058
        %1060 = vst [vmem:[%s987 + $0x74] sm:$0x1] %v1059
        %v1061 = vld [vmem:[%s987 + $0x78] sm:$0xf]
        %v1062 = vsel %vm989, %v843, %v1061
        %1063 = vst [vmem:[%s987 + $0x78] sm:$0xf] %v1062
        %1064 = vst.msk [vmem:[%s987 + $0x7c] sm:$0xf] %vm993, %v852
        %v1065 = vld [vmem:[%s987 + $0x80] sm:$0x1]
        %v1066 = vsel %vm426, %v853, %v1065
        %1067 = vst [vmem:[%s987 + $0x80] sm:$0x1] %v1066
        %v1068 = vld [vmem:[%s987 + $0x84] sm:$0xf]
        %v1069 = vsel %vm989, %v860, %v1068
        %1070 = vst [vmem:[%s987 + $0x84] sm:$0xf] %v1069
        %1071 = vst.msk [vmem:[%s987 + $0x88] sm:$0xf] %vm993, %v869
        %v1072 = vld [vmem:[%s987 + $0x8c] sm:$0x1]
        %v1073 = vsel %vm426, %v870, %v1072
        %1074 = vst [vmem:[%s987 + $0x8c] sm:$0x1] %v1073
        %v1075 = vld [vmem:[%s987 + $0x90] sm:$0xf]
        %v1076 = vsel %vm989, %v877, %v1075
        %1077 = vst [vmem:[%s987 + $0x90] sm:$0xf] %v1076
        %1078 = vst.msk [vmem:[%s987 + $0x94] sm:$0xf] %vm993, %v886
        %v1079 = vld [vmem:[%s987 + $0x98] sm:$0x1]
        %v1080 = vsel %vm426, %v887, %v1079
        %1081 = vst [vmem:[%s987 + $0x98] sm:$0x1] %v1080
        %v1082 = vld [vmem:[%s987 + $0x9c] sm:$0xf]
        %v1083 = vsel %vm989, %v894, %v1082
        %1084 = vst [vmem:[%s987 + $0x9c] sm:$0xf] %v1083
        %1085 = vst.msk [vmem:[%s987 + $0xa0] sm:$0xf] %vm993, %v903
        %v1086 = vld [vmem:[%s987 + $0xa4] sm:$0x1]
        %v1087 = vsel %vm426, %v904, %v1086
        %1088 = vst [vmem:[%s987 + $0xa4] sm:$0x1] %v1087
        %v1089 = vld [vmem:[%s987 + $0xa8] sm:$0xf]
        %v1090 = vsel %vm989, %v911, %v1089
        %1091 = vst [vmem:[%s987 + $0xa8] sm:$0xf] %v1090
        %1092 = vst.msk [vmem:[%s987 + $0xac] sm:$0xf] %vm993, %v920
        %v1093 = vld [vmem:[%s987 + $0xb0] sm:$0x1]
        %v1094 = vsel %vm426, %v921, %v1093
        %1095 = vst [vmem:[%s987 + $0xb0] sm:$0x1] %v1094
        %v1096 = vld [vmem:[%s987 + $0xb4] sm:$0xf]
        %v1097 = vsel %vm989, %v928, %v1096
        %1098 = vst [vmem:[%s987 + $0xb4] sm:$0xf] %v1097
        %1099 = vst.msk [vmem:[%s987 + $0xb8] sm:$0xf] %vm993, %v937
        %v1100 = vld [vmem:[%s987 + $0xbc] sm:$0x1]
        %v1101 = vsel %vm426, %v938, %v1100
        %1102 = vst [vmem:[%s987 + $0xbc] sm:$0x1] %v1101
        %v1103 = vld [vmem:[%s361] sm:$0xff]
        %v1104 = vld [vmem:[%s361 + $0x8] sm:$0xff]
        %v1105 = vpack.c.bf16 %v1104, %v1103
        %p1106 = scmp.gt.s32.totalorder %s32, 0
        %s1107 = scalar_select %p1106, 1, 0
        %v1108 = vstv %s1107
        %vm1109 = vcmp.eq.s32.totalorder %v1108, 1
        %v1110 = vsel %vm1109, %v1105, 0
        %v1112 = vunpack.c.l.b16 %v1110
        %v1113 = vunpack.c.h.b16 %v1110
        %v1114 = vpack.c.b16 %v1112, %v1112
        %v1115 = vpack.c.b16 %v1113, %v1113
        %v1117 = vshrl.u32 %v1114, 16
        %v1119 = vrot.slane %v1117, 7
        %v1120 = vshll.u32 %v1114, 16
        %v1122 = vor.u32 %v1119, %v1120
        %v1123 = vrot.slane %v1119, 4
        %v1125 = vshrl.u32 %v1115, 16
        %v1127 = vrot.slane %v1125, 7
        %v1128 = vshll.u32 %v1115, 16
        %v1130 = vor.u32 %v1127, %v1128
        %v1131 = vsel %vm666, %v1123, %v1130
        %v1132 = vrot.slane %v1127, 4
        %v1136 = vld [vmem:[#allocation2] sm:$0xf]
        %v1137 = vsel %vm989, %v1122, %v1136
        %1138 = vst [vmem:[#allocation2] sm:$0xf] %v1137
        %1139 = vst.msk [vmem:[#allocation2 + $0x4] sm:$0xf] %vm993, %v1131
        %v1140 = vld [vmem:[#allocation2 + $0x8] sm:$0x1]
        %v1141 = vsel %vm426, %v1132, %v1140
        %1142 = vst [vmem:[#allocation2 + $0x8] sm:$0x1] %v1141
        %v1143 = vld [vmem:[%s370] sm:$0xff]
        %v1144 = vld [vmem:[%s370 + $0x8] sm:$0xff]
        %v1145 = vpack.c.bf16 %v1144, %v1143
        %p1146 = scmp.lt.s32.totalorder %s32, 0
        %s1147 = scalar_select %p1146, 1, 0
        %v1148 = vstv %s1147
        %vm1149 = vcmp.eq.s32.totalorder %v1148, 1
        %v1150 = vsel %vm1149, %v1145, 0
        %v1152 = vunpack.c.l.b16 %v1150
        %v1153 = vunpack.c.h.b16 %v1150
        %v1154 = vpack.c.b16 %v1152, %v1152
        %v1155 = vpack.c.b16 %v1153, %v1153
        %v1157 = vshrl.u32 %v1154, 16
        %v1159 = vrot.slane %v1157, 7
        %v1160 = vshll.u32 %v1154, 16
        %v1162 = vor.u32 %v1159, %v1160
        %v1163 = vrot.slane %v1159, 4
        %v1165 = vshrl.u32 %v1155, 16
        %v1167 = vrot.slane %v1165, 7
        %v1168 = vshll.u32 %v1155, 16
        %v1170 = vor.u32 %v1167, %v1168
        %v1171 = vsel %vm666, %v1163, %v1170
        %v1172 = vrot.slane %v1167, 4
        %s1176 = scalar_lea.vmem [#allocation2], 204
        %v1177 = vld [vmem:[%s1176] sm:$0xf]
        %v1178 = vsel %vm989, %v1162, %v1177
        %1179 = vst [vmem:[%s1176] sm:$0xf] %v1178
        %1180 = vst.msk [vmem:[%s1176 + $0x4] sm:$0xf] %vm993, %v1171
        %v1181 = vld [vmem:[%s1176 + $0x8] sm:$0x1]
        %v1182 = vsel %vm426, %v1172, %v1181
        %1183 = vst [vmem:[%s1176 + $0x8] sm:$0x1] %v1182
        %v1184 = vld [vmem:[#allocation2] sm:$0xf]
        %v1185 = vld [vmem:[#allocation2 + $0x4] sm:$0xf]
        %v1186 = vld [vmem:[#allocation2 + $0xc] sm:$0xf]
        %v1187 = vld [vmem:[#allocation2 + $0x10] sm:$0xf]
        %v1188 = vld [vmem:[#allocation2 + $0x18] sm:$0xf]
        %v1189 = vld [vmem:[#allocation2 + $0x1c] sm:$0xf]
        %v1190 = vld [vmem:[#allocation2 + $0x24] sm:$0xf]
        %v1191 = vld [vmem:[#allocation2 + $0x28] sm:$0xf]
        %v1192 = vld [vmem:[#allocation2 + $0x30] sm:$0xf]
        %v1193 = vld [vmem:[#allocation2 + $0x34] sm:$0xf]
        %v1194 = vld [vmem:[#allocation2 + $0x3c] sm:$0xf]
        %v1195 = vld [vmem:[#allocation2 + $0x40] sm:$0xf]
        %v1196 = vld [vmem:[#allocation2 + $0x48] sm:$0xf]
        %v1197 = vld [vmem:[#allocation2 + $0x4c] sm:$0xf]
        %v1198 = vld [vmem:[#allocation2 + $0x54] sm:$0xf]
        %v1199 = vld [vmem:[#allocation2 + $0x58] sm:$0xf]
        %v1200 = vld [vmem:[#allocation2 + $0x60] sm:$0xf]
        %v1201 = vld [vmem:[#allocation2 + $0x64] sm:$0xf]
        %v1202 = vld [vmem:[#allocation2 + $0x6c] sm:$0xf]
        %v1203 = vld [vmem:[#allocation2 + $0x70] sm:$0xf]
        %v1204 = vld [vmem:[#allocation2 + $0x78] sm:$0xf]
        %v1205 = vld [vmem:[#allocation2 + $0x7c] sm:$0xf]
        %v1206 = vld [vmem:[#allocation2 + $0x84] sm:$0xf]
        %v1207 = vld [vmem:[#allocation2 + $0x88] sm:$0xf]
        %v1208 = vld [vmem:[#allocation2 + $0x90] sm:$0xf]
        %v1209 = vld [vmem:[#allocation2 + $0x94] sm:$0xf]
        %v1210 = vld [vmem:[#allocation2 + $0x9c] sm:$0xf]
        %v1211 = vld [vmem:[#allocation2 + $0xa0] sm:$0xf]
        %v1212 = vld [vmem:[#allocation2 + $0xa8] sm:$0xf]
        %v1213 = vld [vmem:[#allocation2 + $0xac] sm:$0xf]
        %v1214 = vld [vmem:[#allocation2 + $0xb4] sm:$0xf]
        %v1215 = vld [vmem:[#allocation2 + $0xb8] sm:$0xf]
        %v1216 = vld [vmem:[#allocation2 + $0x8] sm:$0x1]
        %v1217 = vld [vmem:[#allocation2 + $0x14] sm:$0x1]
        %v1218 = vld [vmem:[#allocation2 + $0x20] sm:$0x1]
        %v1219 = vld [vmem:[#allocation2 + $0x2c] sm:$0x1]
        %v1220 = vld [vmem:[#allocation2 + $0x38] sm:$0x1]
        %v1221 = vld [vmem:[#allocation2 + $0x44] sm:$0x1]
        %v1222 = vld [vmem:[#allocation2 + $0x50] sm:$0x1]
        %v1223 = vld [vmem:[#allocation2 + $0x5c] sm:$0x1]
        %v1224 = vld [vmem:[#allocation2 + $0x68] sm:$0x1]
        %v1225 = vld [vmem:[#allocation2 + $0x74] sm:$0x1]
        %v1226 = vld [vmem:[#allocation2 + $0x80] sm:$0x1]
        %v1227 = vld [vmem:[#allocation2 + $0x8c] sm:$0x1]
        %v1228 = vld [vmem:[#allocation2 + $0x98] sm:$0x1]
        %v1229 = vld [vmem:[#allocation2 + $0xa4] sm:$0x1]
        %v1230 = vld [vmem:[#allocation2 + $0xb0] sm:$0x1]
        %v1231 = vld [vmem:[#allocation2 + $0xbc] sm:$0x1]
        %v1232 = vld [vmem:[#allocation2] sm:$0xe]
        %v1233 = vld [vmem:[#allocation2 + $0xc] sm:$0xe]
        %v1234 = vld [vmem:[#allocation2 + $0x18] sm:$0xe]
        %v1235 = vld [vmem:[#allocation2 + $0x24] sm:$0xe]
        %v1236 = vld [vmem:[#allocation2 + $0x30] sm:$0xe]
        %v1237 = vld [vmem:[#allocation2 + $0x3c] sm:$0xe]
        %v1238 = vld [vmem:[#allocation2 + $0x48] sm:$0xe]
        %v1239 = vld [vmem:[#allocation2 + $0x54] sm:$0xe]
        %v1240 = vld [vmem:[#allocation2 + $0x60] sm:$0xe]
        %v1241 = vld [vmem:[#allocation2 + $0x6c] sm:$0xe]
        %v1242 = vld [vmem:[#allocation2 + $0x78] sm:$0xe]
        %v1243 = vld [vmem:[#allocation2 + $0x84] sm:$0xe]
        %v1244 = vld [vmem:[#allocation2 + $0x90] sm:$0xe]
        %v1245 = vld [vmem:[#allocation2 + $0x9c] sm:$0xe]
        %v1246 = vld [vmem:[#allocation2 + $0xa8] sm:$0xe]
        %v1247 = vld [vmem:[#allocation2 + $0xb4] sm:$0xe]
        %v1248 = vld [vmem:[%s987] sm:$0xf]
        %v1249 = vld [vmem:[%s987 + $0x4] sm:$0xf]
        %v1250 = vld [vmem:[%s987 + $0xc] sm:$0xf]
        %v1251 = vld [vmem:[%s987 + $0x10] sm:$0xf]
        %v1252 = vld [vmem:[%s987 + $0x18] sm:$0xf]
        %v1253 = vld [vmem:[%s987 + $0x1c] sm:$0xf]
        %v1254 = vld [vmem:[%s987 + $0x24] sm:$0xf]
        %v1255 = vld [vmem:[%s987 + $0x28] sm:$0xf]
        %v1256 = vld [vmem:[%s987 + $0x30] sm:$0xf]
        %v1257 = vld [vmem:[%s987 + $0x34] sm:$0xf]
        %v1258 = vld [vmem:[%s987 + $0x3c] sm:$0xf]
        %v1259 = vld [vmem:[%s987 + $0x40] sm:$0xf]
        %v1260 = vld [vmem:[%s987 + $0x48] sm:$0xf]
        %v1261 = vld [vmem:[%s987 + $0x4c] sm:$0xf]
        %v1262 = vld [vmem:[%s987 + $0x54] sm:$0xf]
        %v1263 = vld [vmem:[%s987 + $0x58] sm:$0xf]
        %v1264 = vld [vmem:[%s987 + $0x60] sm:$0xf]
        %v1265 = vld [vmem:[%s987 + $0x64] sm:$0xf]
        %v1266 = vld [vmem:[%s987 + $0x6c] sm:$0xf]
        %v1267 = vld [vmem:[%s987 + $0x70] sm:$0xf]
        %v1268 = vld [vmem:[%s987 + $0x78] sm:$0xf]
        %v1269 = vld [vmem:[%s987 + $0x7c] sm:$0xf]
        %v1270 = vld [vmem:[%s987 + $0x84] sm:$0xf]
        %v1271 = vld [vmem:[%s987 + $0x88] sm:$0xf]
        %v1272 = vld [vmem:[%s987 + $0x90] sm:$0xf]
        %v1273 = vld [vmem:[%s987 + $0x94] sm:$0xf]
        %v1274 = vld [vmem:[%s987 + $0x9c] sm:$0xf]
        %v1275 = vld [vmem:[%s987 + $0xa0] sm:$0xf]
        %v1276 = vld [vmem:[%s987 + $0xa8] sm:$0xf]
        %v1277 = vld [vmem:[%s987 + $0xac] sm:$0xf]
        %v1278 = vld [vmem:[%s987 + $0xb4] sm:$0xf]
        %v1279 = vld [vmem:[%s987 + $0xb8] sm:$0xf]
        %v1280 = vld [vmem:[%s987 + $0x8] sm:$0x1]
        %v1281 = vld [vmem:[%s987 + $0x14] sm:$0x1]
        %v1282 = vld [vmem:[%s987 + $0x20] sm:$0x1]
        %v1283 = vld [vmem:[%s987 + $0x2c] sm:$0x1]
        %v1284 = vld [vmem:[%s987 + $0x38] sm:$0x1]
        %v1285 = vld [vmem:[%s987 + $0x44] sm:$0x1]
        %v1286 = vld [vmem:[%s987 + $0x50] sm:$0x1]
        %v1287 = vld [vmem:[%s987 + $0x5c] sm:$0x1]
        %v1288 = vld [vmem:[%s987 + $0x68] sm:$0x1]
        %v1289 = vld [vmem:[%s987 + $0x74] sm:$0x1]
        %v1290 = vld [vmem:[%s987 + $0x80] sm:$0x1]
        %v1291 = vld [vmem:[%s987 + $0x8c] sm:$0x1]
        %v1292 = vld [vmem:[%s987 + $0x98] sm:$0x1]
        %v1293 = vld [vmem:[%s987 + $0xa4] sm:$0x1]
        %v1294 = vld [vmem:[%s987 + $0xb0] sm:$0x1]
        %v1295 = vld [vmem:[%s987 + $0xbc] sm:$0x1]
        %v1296 = vld [vmem:[%s987] sm:$0xe]
        %v1297 = vld [vmem:[%s987 + $0xc] sm:$0xe]
        %v1298 = vld [vmem:[%s987 + $0x18] sm:$0xe]
        %v1299 = vld [vmem:[%s987 + $0x24] sm:$0xe]
        %v1300 = vld [vmem:[%s987 + $0x30] sm:$0xe]
        %v1301 = vld [vmem:[%s987 + $0x3c] sm:$0xe]
        %v1302 = vld [vmem:[%s987 + $0x48] sm:$0xe]
        %v1303 = vld [vmem:[%s987 + $0x54] sm:$0xe]
        %v1304 = vld [vmem:[%s987 + $0x60] sm:$0xe]
        %v1305 = vld [vmem:[%s987 + $0x6c] sm:$0xe]
        %v1306 = vld [vmem:[%s987 + $0x78] sm:$0xe]
        %v1307 = vld [vmem:[%s987 + $0x84] sm:$0xe]
        %v1308 = vld [vmem:[%s987 + $0x90] sm:$0xe]
        %v1309 = vld [vmem:[%s987 + $0x9c] sm:$0xe]
        %v1310 = vld [vmem:[%s987 + $0xa8] sm:$0xe]
        %v1311 = vld [vmem:[%s987 + $0xb4] sm:$0xe]
        %s1312 = scalar_lea.vmem [#allocation2], 24
        %v1313 = vld [vmem:[%s1312] sm:$0xf]
        %v1314 = vld [vmem:[%s1312 + $0x4] sm:$0xf]
        %v1315 = vld [vmem:[%s1312 + $0xc] sm:$0xf]
        %v1316 = vld [vmem:[%s1312 + $0x10] sm:$0xf]
        %v1317 = vld [vmem:[%s1312 + $0x18] sm:$0xf]
        %v1318 = vld [vmem:[%s1312 + $0x1c] sm:$0xf]
        %v1319 = vld [vmem:[%s1312 + $0x24] sm:$0xf]
        %v1320 = vld [vmem:[%s1312 + $0x28] sm:$0xf]
        %v1321 = vld [vmem:[%s1312 + $0x30] sm:$0xf]
        %v1322 = vld [vmem:[%s1312 + $0x34] sm:$0xf]
        %v1323 = vld [vmem:[%s1312 + $0x3c] sm:$0xf]
        %v1324 = vld [vmem:[%s1312 + $0x40] sm:$0xf]
        %v1325 = vld [vmem:[%s1312 + $0x48] sm:$0xf]
        %v1326 = vld [vmem:[%s1312 + $0x4c] sm:$0xf]
        %v1327 = vld [vmem:[%s1312 + $0x54] sm:$0xf]
        %v1328 = vld [vmem:[%s1312 + $0x58] sm:$0xf]
        %v1329 = vld [vmem:[%s1312 + $0x60] sm:$0xf]
        %v1330 = vld [vmem:[%s1312 + $0x64] sm:$0xf]
        %v1331 = vld [vmem:[%s1312 + $0x6c] sm:$0xf]
        %v1332 = vld [vmem:[%s1312 + $0x70] sm:$0xf]
        %v1333 = vld [vmem:[%s1312 + $0x78] sm:$0xf]
        %v1334 = vld [vmem:[%s1312 + $0x7c] sm:$0xf]
        %v1335 = vld [vmem:[%s1312 + $0x84] sm:$0xf]
        %v1336 = vld [vmem:[%s1312 + $0x88] sm:$0xf]
        %v1337 = vld [vmem:[%s1312 + $0x90] sm:$0xf]
        %v1338 = vld [vmem:[%s1312 + $0x94] sm:$0xf]
        %v1339 = vld [vmem:[%s1312 + $0x9c] sm:$0xf]
        %v1340 = vld [vmem:[%s1312 + $0xa0] sm:$0xf]
        %v1341 = vld [vmem:[%s1312 + $0xa8] sm:$0xf]
        %v1342 = vld [vmem:[%s1312 + $0xac] sm:$0xf]
        %v1343 = vld [vmem:[%s1312 + $0xb4] sm:$0xf]
        %v1344 = vld [vmem:[%s1312 + $0xb8] sm:$0xf]
        %v1345 = vld [vmem:[%s1312 + $0x8] sm:$0x1]
        %v1346 = vld [vmem:[%s1312 + $0x14] sm:$0x1]
        %v1347 = vld [vmem:[%s1312 + $0x20] sm:$0x1]
        %v1348 = vld [vmem:[%s1312 + $0x2c] sm:$0x1]
        %v1349 = vld [vmem:[%s1312 + $0x38] sm:$0x1]
        %v1350 = vld [vmem:[%s1312 + $0x44] sm:$0x1]
        %v1351 = vld [vmem:[%s1312 + $0x50] sm:$0x1]
        %v1352 = vld [vmem:[%s1312 + $0x5c] sm:$0x1]
        %v1353 = vld [vmem:[%s1312 + $0x68] sm:$0x1]
        %v1354 = vld [vmem:[%s1312 + $0x74] sm:$0x1]
        %v1355 = vld [vmem:[%s1312 + $0x80] sm:$0x1]
        %v1356 = vld [vmem:[%s1312 + $0x8c] sm:$0x1]
        %v1357 = vld [vmem:[%s1312 + $0x98] sm:$0x1]
        %v1358 = vld [vmem:[%s1312 + $0xa4] sm:$0x1]
        %v1359 = vld [vmem:[%s1312 + $0xb0] sm:$0x1]
        %v1360 = vld [vmem:[%s1312 + $0xbc] sm:$0x1]
        %v1361 = vld [vmem:[%s1312] sm:$0xe]
        %v1362 = vld [vmem:[%s1312 + $0xc] sm:$0xe]
        %v1363 = vld [vmem:[%s1312 + $0x18] sm:$0xe]
        %v1364 = vld [vmem:[%s1312 + $0x24] sm:$0xe]
        %v1365 = vld [vmem:[%s1312 + $0x30] sm:$0xe]
        %v1366 = vld [vmem:[%s1312 + $0x3c] sm:$0xe]
        %v1367 = vld [vmem:[%s1312 + $0x48] sm:$0xe]
        %v1368 = vld [vmem:[%s1312 + $0x54] sm:$0xe]
        %v1369 = vld [vmem:[%s1312 + $0x60] sm:$0xe]
        %v1370 = vld [vmem:[%s1312 + $0x6c] sm:$0xe]
        %v1371 = vld [vmem:[%s1312 + $0x78] sm:$0xe]
        %v1372 = vld [vmem:[%s1312 + $0x84] sm:$0xe]
        %v1373 = vld [vmem:[%s1312 + $0x90] sm:$0xe]
        %v1374 = vld [vmem:[%s1312 + $0x9c] sm:$0xe]
        %v1375 = vld [vmem:[%s1312 + $0xa8] sm:$0xe]
        %v1376 = vld [vmem:[%s1312 + $0xb4] sm:$0xe]
        %v1409 = vunpack.c.l.b16 %v1184
        %v1410 = vunpack.c.l.b16 %v1185
        %v1411 = vunpack.c.l.b16 %v1186
        %v1412 = vunpack.c.l.b16 %v1187
        %v1413 = vunpack.c.l.b16 %v1188
        %v1414 = vunpack.c.l.b16 %v1189
        %v1415 = vunpack.c.l.b16 %v1190
        %v1416 = vunpack.c.l.b16 %v1191
        %v1417 = vunpack.c.l.b16 %v1192
        %v1418 = vunpack.c.l.b16 %v1193
        %v1419 = vunpack.c.l.b16 %v1194
        %v1420 = vunpack.c.l.b16 %v1195
        %v1421 = vunpack.c.l.b16 %v1196
        %v1422 = vunpack.c.l.b16 %v1197
        %v1423 = vunpack.c.l.b16 %v1198
        %v1424 = vunpack.c.l.b16 %v1199
        %v1425 = vunpack.c.l.b16 %v1200
        %v1426 = vunpack.c.l.b16 %v1201
        %v1427 = vunpack.c.l.b16 %v1202
        %v1428 = vunpack.c.l.b16 %v1203
        %v1429 = vunpack.c.l.b16 %v1204
        %v1430 = vunpack.c.l.b16 %v1205
        %v1431 = vunpack.c.l.b16 %v1206
        %v1432 = vunpack.c.l.b16 %v1207
        %v1433 = vunpack.c.l.b16 %v1208
        %v1434 = vunpack.c.l.b16 %v1209
        %v1435 = vunpack.c.l.b16 %v1210
        %v1436 = vunpack.c.l.b16 %v1211
        %v1437 = vunpack.c.l.b16 %v1212
        %v1438 = vunpack.c.l.b16 %v1213
        %v1439 = vunpack.c.l.b16 %v1214
        %v1440 = vunpack.c.l.b16 %v1215
        %v1441 = vpack.c.b16 %v1410, %v1409
        %v1442 = vpack.c.b16 %v1412, %v1411
        %v1443 = vpack.c.b16 %v1414, %v1413
        %v1444 = vpack.c.b16 %v1416, %v1415
        %v1445 = vpack.c.b16 %v1418, %v1417
        %v1446 = vpack.c.b16 %v1420, %v1419
        %v1447 = vpack.c.b16 %v1422, %v1421
        %v1448 = vpack.c.b16 %v1424, %v1423
        %v1449 = vpack.c.b16 %v1426, %v1425
        %v1450 = vpack.c.b16 %v1428, %v1427
        %v1451 = vpack.c.b16 %v1430, %v1429
        %v1452 = vpack.c.b16 %v1432, %v1431
        %v1453 = vpack.c.b16 %v1434, %v1433
        %v1454 = vpack.c.b16 %v1436, %v1435
        %v1455 = vpack.c.b16 %v1438, %v1437
        %v1456 = vpack.c.b16 %v1440, %v1439
        %v1473 = vunpack.c.l.b16 %v1216
        %v1474 = vunpack.c.l.b16 %v1217
        %v1475 = vunpack.c.l.b16 %v1218
        %v1476 = vunpack.c.l.b16 %v1219
        %v1477 = vunpack.c.l.b16 %v1220
        %v1478 = vunpack.c.l.b16 %v1221
        %v1479 = vunpack.c.l.b16 %v1222
        %v1480 = vunpack.c.l.b16 %v1223
        %v1481 = vunpack.c.l.b16 %v1224
        %v1482 = vunpack.c.l.b16 %v1225
        %v1483 = vunpack.c.l.b16 %v1226
        %v1484 = vunpack.c.l.b16 %v1227
        %v1485 = vunpack.c.l.b16 %v1228
        %v1486 = vunpack.c.l.b16 %v1229
        %v1487 = vunpack.c.l.b16 %v1230
        %v1488 = vunpack.c.l.b16 %v1231
        %v1489 = vpack.c.b16 %v1473, %v1473
        %v1490 = vpack.c.b16 %v1474, %v1474
        %v1491 = vpack.c.b16 %v1475, %v1475
        %v1492 = vpack.c.b16 %v1476, %v1476
        %v1493 = vpack.c.b16 %v1477, %v1477
        %v1494 = vpack.c.b16 %v1478, %v1478
        %v1495 = vpack.c.b16 %v1479, %v1479
        %v1496 = vpack.c.b16 %v1480, %v1480
        %v1497 = vpack.c.b16 %v1481, %v1481
        %v1498 = vpack.c.b16 %v1482, %v1482
        %v1499 = vpack.c.b16 %v1483, %v1483
        %v1500 = vpack.c.b16 %v1484, %v1484
        %v1501 = vpack.c.b16 %v1485, %v1485
        %v1502 = vpack.c.b16 %v1486, %v1486
        %v1503 = vpack.c.b16 %v1487, %v1487
        %v1504 = vpack.c.b16 %v1488, %v1488
        %vm1505 = vsmask.f32 7424
        %v1507 = vshrl.u32 %v1441, 16
        %v1509 = vshll.u32 %v1441, 16
        %v1511 = vrot.slane %v1509, 1
        %v1512 = vor.u32 %v1507, %v1511
        %v1514 = vshll.u32 %v1489, 16
        %v1516 = vrot.slane %v1514, 1
        %v1517 = vsel %vm1505, %v1512, %v1516
        %v1519 = vshrl.u32 %v1442, 16
        %v1521 = vshll.u32 %v1442, 16
        %v1523 = vrot.slane %v1521, 1
        %v1524 = vor.u32 %v1519, %v1523
        %v1526 = vshll.u32 %v1490, 16
        %v1528 = vrot.slane %v1526, 1
        %v1529 = vsel %vm1505, %v1524, %v1528
        %v1531 = vshrl.u32 %v1443, 16
        %v1533 = vshll.u32 %v1443, 16
        %v1535 = vrot.slane %v1533, 1
        %v1536 = vor.u32 %v1531, %v1535
        %v1538 = vshll.u32 %v1491, 16
        %v1540 = vrot.slane %v1538, 1
        %v1541 = vsel %vm1505, %v1536, %v1540
        %v1543 = vshrl.u32 %v1444, 16
        %v1545 = vshll.u32 %v1444, 16
        %v1547 = vrot.slane %v1545, 1
        %v1548 = vor.u32 %v1543, %v1547
        %v1550 = vshll.u32 %v1492, 16
        %v1552 = vrot.slane %v1550, 1
        %v1553 = vsel %vm1505, %v1548, %v1552
        %v1555 = vshrl.u32 %v1445, 16
        %v1557 = vshll.u32 %v1445, 16
        %v1559 = vrot.slane %v1557, 1
        %v1560 = vor.u32 %v1555, %v1559
        %v1562 = vshll.u32 %v1493, 16
        %v1564 = vrot.slane %v1562, 1
        %v1565 = vsel %vm1505, %v1560, %v1564
        %v1567 = vshrl.u32 %v1446, 16
        %v1569 = vshll.u32 %v1446, 16
        %v1571 = vrot.slane %v1569, 1
        %v1572 = vor.u32 %v1567, %v1571
        %v1574 = vshll.u32 %v1494, 16
        %v1576 = vrot.slane %v1574, 1
        %v1577 = vsel %vm1505, %v1572, %v1576
        %v1579 = vshrl.u32 %v1447, 16
        %v1581 = vshll.u32 %v1447, 16
        %v1583 = vrot.slane %v1581, 1
        %v1584 = vor.u32 %v1579, %v1583
        %v1586 = vshll.u32 %v1495, 16
        %v1588 = vrot.slane %v1586, 1
        %v1589 = vsel %vm1505, %v1584, %v1588
        %v1591 = vshrl.u32 %v1448, 16
        %v1593 = vshll.u32 %v1448, 16
        %v1595 = vrot.slane %v1593, 1
        %v1596 = vor.u32 %v1591, %v1595
        %v1598 = vshll.u32 %v1496, 16
        %v1600 = vrot.slane %v1598, 1
        %v1601 = vsel %vm1505, %v1596, %v1600
        %v1603 = vshrl.u32 %v1449, 16
        %v1605 = vshll.u32 %v1449, 16
        %v1607 = vrot.slane %v1605, 1
        %v1608 = vor.u32 %v1603, %v1607
        %v1610 = vshll.u32 %v1497, 16
        %v1612 = vrot.slane %v1610, 1
        %v1613 = vsel %vm1505, %v1608, %v1612
        %v1615 = vshrl.u32 %v1450, 16
        %v1617 = vshll.u32 %v1450, 16
        %v1619 = vrot.slane %v1617, 1
        %v1620 = vor.u32 %v1615, %v1619
        %v1622 = vshll.u32 %v1498, 16
        %v1624 = vrot.slane %v1622, 1
        %v1625 = vsel %vm1505, %v1620, %v1624
        %v1627 = vshrl.u32 %v1451, 16
        %v1629 = vshll.u32 %v1451, 16
        %v1631 = vrot.slane %v1629, 1
        %v1632 = vor.u32 %v1627, %v1631
        %v1634 = vshll.u32 %v1499, 16
        %v1636 = vrot.slane %v1634, 1
        %v1637 = vsel %vm1505, %v1632, %v1636
        %v1639 = vshrl.u32 %v1452, 16
        %v1641 = vshll.u32 %v1452, 16
        %v1643 = vrot.slane %v1641, 1
        %v1644 = vor.u32 %v1639, %v1643
        %v1646 = vshll.u32 %v1500, 16
        %v1648 = vrot.slane %v1646, 1
        %v1649 = vsel %vm1505, %v1644, %v1648
        %v1651 = vshrl.u32 %v1453, 16
        %v1653 = vshll.u32 %v1453, 16
        %v1655 = vrot.slane %v1653, 1
        %v1656 = vor.u32 %v1651, %v1655
        %v1658 = vshll.u32 %v1501, 16
        %v1660 = vrot.slane %v1658, 1
        %v1661 = vsel %vm1505, %v1656, %v1660
        %v1663 = vshrl.u32 %v1454, 16
        %v1665 = vshll.u32 %v1454, 16
        %v1667 = vrot.slane %v1665, 1
        %v1668 = vor.u32 %v1663, %v1667
        %v1670 = vshll.u32 %v1502, 16
        %v1672 = vrot.slane %v1670, 1
        %v1673 = vsel %vm1505, %v1668, %v1672
        %v1675 = vshrl.u32 %v1455, 16
        %v1677 = vshll.u32 %v1455, 16
        %v1679 = vrot.slane %v1677, 1
        %v1680 = vor.u32 %v1675, %v1679
        %v1682 = vshll.u32 %v1503, 16
        %v1684 = vrot.slane %v1682, 1
        %v1685 = vsel %vm1505, %v1680, %v1684
        %v1687 = vshrl.u32 %v1456, 16
        %v1689 = vshll.u32 %v1456, 16
        %v1691 = vrot.slane %v1689, 1
        %v1692 = vor.u32 %v1687, %v1691
        %v1694 = vshll.u32 %v1504, 16
        %v1696 = vrot.slane %v1694, 1
        %v1697 = vsel %vm1505, %v1692, %v1696
        %1698 = vrot.lane.b32.xlu0 %v1517, 24
        %v1699 = vpop.permute.xlu0 %1698
        %1700 = vrot.lane.b32.xlu0 %v1529, 24
        %v1701 = vpop.permute.xlu0 %1700
        %1702 = vrot.lane.b32.xlu0 %v1541, 24
        %v1703 = vpop.permute.xlu0 %1702
        %1704 = vrot.lane.b32.xlu0 %v1553, 24
        %v1705 = vpop.permute.xlu0 %1704
        %1706 = vrot.lane.b32.xlu0 %v1565, 24
        %v1707 = vpop.permute.xlu0 %1706
        %1708 = vrot.lane.b32.xlu0 %v1577, 24
        %v1709 = vpop.permute.xlu0 %1708
        %1710 = vrot.lane.b32.xlu0 %v1589, 24
        %v1711 = vpop.permute.xlu0 %1710
        %1712 = vrot.lane.b32.xlu0 %v1601, 24
        %v1713 = vpop.permute.xlu0 %1712
        %1714 = vrot.lane.b32.xlu0 %v1613, 24
        %v1715 = vpop.permute.xlu0 %1714
        %1716 = vrot.lane.b32.xlu0 %v1625, 24
        %v1717 = vpop.permute.xlu0 %1716
        %1718 = vrot.lane.b32.xlu0 %v1637, 24
        %v1719 = vpop.permute.xlu0 %1718
        %1720 = vrot.lane.b32.xlu0 %v1649, 24
        %v1721 = vpop.permute.xlu0 %1720
        %1722 = vrot.lane.b32.xlu0 %v1661, 24
        %v1723 = vpop.permute.xlu0 %1722
        %1724 = vrot.lane.b32.xlu0 %v1673, 24
        %v1725 = vpop.permute.xlu0 %1724
        %1726 = vrot.lane.b32.xlu0 %v1685, 24
        %v1727 = vpop.permute.xlu0 %1726
        %1728 = vrot.lane.b32.xlu0 %v1697, 24
        %v1729 = vpop.permute.xlu0 %1728
        %v1746 = vunpack.c.l.b16 %v1232
        %v1747 = vunpack.c.l.b16 %v1233
        %v1748 = vunpack.c.l.b16 %v1234
        %v1749 = vunpack.c.l.b16 %v1235
        %v1750 = vunpack.c.l.b16 %v1236
        %v1751 = vunpack.c.l.b16 %v1237
        %v1752 = vunpack.c.l.b16 %v1238
        %v1753 = vunpack.c.l.b16 %v1239
        %v1754 = vunpack.c.l.b16 %v1240
        %v1755 = vunpack.c.l.b16 %v1241
        %v1756 = vunpack.c.l.b16 %v1242
        %v1757 = vunpack.c.l.b16 %v1243
        %v1758 = vunpack.c.l.b16 %v1244
        %v1759 = vunpack.c.l.b16 %v1245
        %v1760 = vunpack.c.l.b16 %v1246
        %v1761 = vunpack.c.l.b16 %v1247
        %v1762 = vpack.c.b16 %v1410, %v1746
        %v1763 = vpack.c.b16 %v1412, %v1747
        %v1764 = vpack.c.b16 %v1414, %v1748
        %v1765 = vpack.c.b16 %v1416, %v1749
        %v1766 = vpack.c.b16 %v1418, %v1750
        %v1767 = vpack.c.b16 %v1420, %v1751
        %v1768 = vpack.c.b16 %v1422, %v1752
        %v1769 = vpack.c.b16 %v1424, %v1753
        %v1770 = vpack.c.b16 %v1426, %v1754
        %v1771 = vpack.c.b16 %v1428, %v1755
        %v1772 = vpack.c.b16 %v1430, %v1756
        %v1773 = vpack.c.b16 %v1432, %v1757
        %v1774 = vpack.c.b16 %v1434, %v1758
        %v1775 = vpack.c.b16 %v1436, %v1759
        %v1776 = vpack.c.b16 %v1438, %v1760
        %v1777 = vpack.c.b16 %v1440, %v1761
        %vm1778 = vcmask 1046528
        %v1779 = vrot.slane %v1762, 1
        %v1780 = vrot.slane %v1489, 1
        %v1781 = vsel %vm1778, %v1779, %v1780
        %v1782 = vrot.slane %v1763, 1
        %v1783 = vrot.slane %v1490, 1
        %v1784 = vsel %vm1778, %v1782, %v1783
        %v1785 = vrot.slane %v1764, 1
        %v1786 = vrot.slane %v1491, 1
        %v1787 = vsel %vm1778, %v1785, %v1786
        %v1788 = vrot.slane %v1765, 1
        %v1789 = vrot.slane %v1492, 1
        %v1790 = vsel %vm1778, %v1788, %v1789
        %v1791 = vrot.slane %v1766, 1
        %v1792 = vrot.slane %v1493, 1
        %v1793 = vsel %vm1778, %v1791, %v1792
        %v1794 = vrot.slane %v1767, 1
        %v1795 = vrot.slane %v1494, 1
        %v1796 = vsel %vm1778, %v1794, %v1795
        %v1797 = vrot.slane %v1768, 1
        %v1798 = vrot.slane %v1495, 1
        %v1799 = vsel %vm1778, %v1797, %v1798
        %v1800 = vrot.slane %v1769, 1
        %v1801 = vrot.slane %v1496, 1
        %v1802 = vsel %vm1778, %v1800, %v1801
        %v1803 = vrot.slane %v1770, 1
        %v1804 = vrot.slane %v1497, 1
        %v1805 = vsel %vm1778, %v1803, %v1804
        %v1806 = vrot.slane %v1771, 1
        %v1807 = vrot.slane %v1498, 1
        %v1808 = vsel %vm1778, %v1806, %v1807
        %v1809 = vrot.slane %v1772, 1
        %v1810 = vrot.slane %v1499, 1
        %v1811 = vsel %vm1778, %v1809, %v1810
        %v1812 = vrot.slane %v1773, 1
        %v1813 = vrot.slane %v1500, 1
        %v1814 = vsel %vm1778, %v1812, %v1813
        %v1815 = vrot.slane %v1774, 1
        %v1816 = vrot.slane %v1501, 1
        %v1817 = vsel %vm1778, %v1815, %v1816
        %v1818 = vrot.slane %v1775, 1
        %v1819 = vrot.slane %v1502, 1
        %v1820 = vsel %vm1778, %v1818, %v1819
        %v1821 = vrot.slane %v1776, 1
        %v1822 = vrot.slane %v1503, 1
        %v1823 = vsel %vm1778, %v1821, %v1822
        %v1824 = vrot.slane %v1777, 1
        %v1825 = vrot.slane %v1504, 1
        %v1826 = vsel %vm1778, %v1824, %v1825
        %1827 = vrot.lane.b32.xlu0 %v1781, 48
        %v1828 = vpop.permute.xlu0 %1827
        %1829 = vrot.lane.b32.xlu0 %v1784, 48
        %v1830 = vpop.permute.xlu0 %1829
        %1831 = vrot.lane.b32.xlu0 %v1787, 48
        %v1832 = vpop.permute.xlu0 %1831
        %1833 = vrot.lane.b32.xlu0 %v1790, 48
        %v1834 = vpop.permute.xlu0 %1833
        %1835 = vrot.lane.b32.xlu0 %v1793, 48
        %v1836 = vpop.permute.xlu0 %1835
        %1837 = vrot.lane.b32.xlu0 %v1796, 48
        %v1838 = vpop.permute.xlu0 %1837
        %1839 = vrot.lane.b32.xlu0 %v1799, 48
        %v1840 = vpop.permute.xlu0 %1839
        %1841 = vrot.lane.b32.xlu0 %v1802, 48
        %v1842 = vpop.permute.xlu0 %1841
        %1843 = vrot.lane.b32.xlu0 %v1805, 48
        %v1844 = vpop.permute.xlu0 %1843
        %1845 = vrot.lane.b32.xlu0 %v1808, 48
        %v1846 = vpop.permute.xlu0 %1845
        %1847 = vrot.lane.b32.xlu0 %v1811, 48
        %v1848 = vpop.permute.xlu0 %1847
        %1849 = vrot.lane.b32.xlu0 %v1814, 48
        %v1850 = vpop.permute.xlu0 %1849
        %1851 = vrot.lane.b32.xlu0 %v1817, 48
        %v1852 = vpop.permute.xlu0 %1851
        %1853 = vrot.lane.b32.xlu0 %v1820, 48
        %v1854 = vpop.permute.xlu0 %1853
        %1855 = vrot.lane.b32.xlu0 %v1823, 48
        %v1856 = vpop.permute.xlu0 %1855
        %1857 = vrot.lane.b32.xlu0 %v1826, 48
        %v1858 = vpop.permute.xlu0 %1857
        %v1891 = vunpack.c.l.b16 %v1248
        %v1892 = vunpack.c.l.b16 %v1249
        %v1893 = vunpack.c.l.b16 %v1250
        %v1894 = vunpack.c.l.b16 %v1251
        %v1895 = vunpack.c.l.b16 %v1252
        %v1896 = vunpack.c.l.b16 %v1253
        %v1897 = vunpack.c.l.b16 %v1254
        %v1898 = vunpack.c.l.b16 %v1255
        %v1899 = vunpack.c.l.b16 %v1256
        %v1900 = vunpack.c.l.b16 %v1257
        %v1901 = vunpack.c.l.b16 %v1258
        %v1902 = vunpack.c.l.b16 %v1259
        %v1903 = vunpack.c.l.b16 %v1260
        %v1904 = vunpack.c.l.b16 %v1261
        %v1905 = vunpack.c.l.b16 %v1262
        %v1906 = vunpack.c.l.b16 %v1263
        %v1907 = vunpack.c.l.b16 %v1264
        %v1908 = vunpack.c.l.b16 %v1265
        %v1909 = vunpack.c.l.b16 %v1266
        %v1910 = vunpack.c.l.b16 %v1267
        %v1911 = vunpack.c.l.b16 %v1268
        %v1912 = vunpack.c.l.b16 %v1269
        %v1913 = vunpack.c.l.b16 %v1270
        %v1914 = vunpack.c.l.b16 %v1271
        %v1915 = vunpack.c.l.b16 %v1272
        %v1916 = vunpack.c.l.b16 %v1273
        %v1917 = vunpack.c.l.b16 %v1274
        %v1918 = vunpack.c.l.b16 %v1275
        %v1919 = vunpack.c.l.b16 %v1276
        %v1920 = vunpack.c.l.b16 %v1277
        %v1921 = vunpack.c.l.b16 %v1278
        %v1922 = vunpack.c.l.b16 %v1279
        %v1923 = vpack.c.b16 %v1892, %v1891
        %v1924 = vpack.c.b16 %v1894, %v1893
        %v1925 = vpack.c.b16 %v1896, %v1895
        %v1926 = vpack.c.b16 %v1898, %v1897
        %v1927 = vpack.c.b16 %v1900, %v1899
        %v1928 = vpack.c.b16 %v1902, %v1901
        %v1929 = vpack.c.b16 %v1904, %v1903
        %v1930 = vpack.c.b16 %v1906, %v1905
        %v1931 = vpack.c.b16 %v1908, %v1907
        %v1932 = vpack.c.b16 %v1910, %v1909
        %v1933 = vpack.c.b16 %v1912, %v1911
        %v1934 = vpack.c.b16 %v1914, %v1913
        %v1935 = vpack.c.b16 %v1916, %v1915
        %v1936 = vpack.c.b16 %v1918, %v1917
        %v1937 = vpack.c.b16 %v1920, %v1919
        %v1938 = vpack.c.b16 %v1922, %v1921
        %1939 = vrot.lane.b32.xlu0 %v1923, 72
        %v1940 = vpop.permute.xlu0 %1939
        %1941 = vrot.lane.b32.xlu0 %v1924, 72
        %v1942 = vpop.permute.xlu0 %1941
        %1943 = vrot.lane.b32.xlu0 %v1925, 72
        %v1944 = vpop.permute.xlu0 %1943
        %1945 = vrot.lane.b32.xlu0 %v1926, 72
        %v1946 = vpop.permute.xlu0 %1945
        %1947 = vrot.lane.b32.xlu0 %v1927, 72
        %v1948 = vpop.permute.xlu0 %1947
        %1949 = vrot.lane.b32.xlu0 %v1928, 72
        %v1950 = vpop.permute.xlu0 %1949
        %1951 = vrot.lane.b32.xlu0 %v1929, 72
        %v1952 = vpop.permute.xlu0 %1951
        %1953 = vrot.lane.b32.xlu0 %v1930, 72
        %v1954 = vpop.permute.xlu0 %1953
        %1955 = vrot.lane.b32.xlu0 %v1931, 72
        %v1956 = vpop.permute.xlu0 %1955
        %1957 = vrot.lane.b32.xlu0 %v1932, 72
        %v1958 = vpop.permute.xlu0 %1957
        %1959 = vrot.lane.b32.xlu0 %v1933, 72
        %v1960 = vpop.permute.xlu0 %1959
        %1961 = vrot.lane.b32.xlu0 %v1934, 72
        %v1962 = vpop.permute.xlu0 %1961
        %1963 = vrot.lane.b32.xlu0 %v1935, 72
        %v1964 = vpop.permute.xlu0 %1963
        %1965 = vrot.lane.b32.xlu0 %v1936, 72
        %v1966 = vpop.permute.xlu0 %1965
        %1967 = vrot.lane.b32.xlu0 %v1937, 72
        %v1968 = vpop.permute.xlu0 %1967
        %1969 = vrot.lane.b32.xlu0 %v1938, 72
        %v1970 = vpop.permute.xlu0 %1969
        %v1987 = vunpack.c.l.b16 %v1280
        %v1988 = vunpack.c.l.b16 %v1281
        %v1989 = vunpack.c.l.b16 %v1282
        %v1990 = vunpack.c.l.b16 %v1283
        %v1991 = vunpack.c.l.b16 %v1284
        %v1992 = vunpack.c.l.b16 %v1285
        %v1993 = vunpack.c.l.b16 %v1286
        %v1994 = vunpack.c.l.b16 %v1287
        %v1995 = vunpack.c.l.b16 %v1288
        %v1996 = vunpack.c.l.b16 %v1289
        %v1997 = vunpack.c.l.b16 %v1290
        %v1998 = vunpack.c.l.b16 %v1291
        %v1999 = vunpack.c.l.b16 %v1292
        %v2000 = vunpack.c.l.b16 %v1293
        %v2001 = vunpack.c.l.b16 %v1294
        %v2002 = vunpack.c.l.b16 %v1295
        %v2003 = vpack.c.b16 %v1987, %v1987
        %v2004 = vpack.c.b16 %v1988, %v1988
        %v2005 = vpack.c.b16 %v1989, %v1989
        %v2006 = vpack.c.b16 %v1990, %v1990
        %v2007 = vpack.c.b16 %v1991, %v1991
        %v2008 = vpack.c.b16 %v1992, %v1992
        %v2009 = vpack.c.b16 %v1993, %v1993
        %v2010 = vpack.c.b16 %v1994, %v1994
        %v2011 = vpack.c.b16 %v1995, %v1995
        %v2012 = vpack.c.b16 %v1996, %v1996
        %v2013 = vpack.c.b16 %v1997, %v1997
        %v2014 = vpack.c.b16 %v1998, %v1998
        %v2015 = vpack.c.b16 %v1999, %v1999
        %v2016 = vpack.c.b16 %v2000, %v2000
        %v2017 = vpack.c.b16 %v2001, %v2001
        %v2018 = vpack.c.b16 %v2002, %v2002
        %v2020 = vshrl.u32 %v1923, 16
        %v2022 = vshll.u32 %v1923, 16
        %v2024 = vrot.slane %v2022, 1
        %v2025 = vor.u32 %v2020, %v2024
        %v2027 = vshll.u32 %v2003, 16
        %v2029 = vrot.slane %v2027, 1
        %v2030 = vsel %vm1505, %v2025, %v2029
        %v2032 = vshrl.u32 %v1924, 16
        %v2034 = vshll.u32 %v1924, 16
        %v2036 = vrot.slane %v2034, 1
        %v2037 = vor.u32 %v2032, %v2036
        %v2039 = vshll.u32 %v2004, 16
        %v2041 = vrot.slane %v2039, 1
        %v2042 = vsel %vm1505, %v2037, %v2041
        %v2044 = vshrl.u32 %v1925, 16
        %v2046 = vshll.u32 %v1925, 16
        %v2048 = vrot.slane %v2046, 1
        %v2049 = vor.u32 %v2044, %v2048
        %v2051 = vshll.u32 %v2005, 16
        %v2053 = vrot.slane %v2051, 1
        %v2054 = vsel %vm1505, %v2049, %v2053
        %v2056 = vshrl.u32 %v1926, 16
        %v2058 = vshll.u32 %v1926, 16
        %v2060 = vrot.slane %v2058, 1
        %v2061 = vor.u32 %v2056, %v2060
        %v2063 = vshll.u32 %v2006, 16
        %v2065 = vrot.slane %v2063, 1
        %v2066 = vsel %vm1505, %v2061, %v2065
        %v2068 = vshrl.u32 %v1927, 16
        %v2070 = vshll.u32 %v1927, 16
        %v2072 = vrot.slane %v2070, 1
        %v2073 = vor.u32 %v2068, %v2072
        %v2075 = vshll.u32 %v2007, 16
        %v2077 = vrot.slane %v2075, 1
        %v2078 = vsel %vm1505, %v2073, %v2077
        %v2080 = vshrl.u32 %v1928, 16
        %v2082 = vshll.u32 %v1928, 16
        %v2084 = vrot.slane %v2082, 1
        %v2085 = vor.u32 %v2080, %v2084
        %v2087 = vshll.u32 %v2008, 16
        %v2089 = vrot.slane %v2087, 1
        %v2090 = vsel %vm1505, %v2085, %v2089
        %v2092 = vshrl.u32 %v1929, 16
        %v2094 = vshll.u32 %v1929, 16
        %v2096 = vrot.slane %v2094, 1
        %v2097 = vor.u32 %v2092, %v2096
        %v2099 = vshll.u32 %v2009, 16
        %v2101 = vrot.slane %v2099, 1
        %v2102 = vsel %vm1505, %v2097, %v2101
        %v2104 = vshrl.u32 %v1930, 16
        %v2106 = vshll.u32 %v1930, 16
        %v2108 = vrot.slane %v2106, 1
        %v2109 = vor.u32 %v2104, %v2108
        %v2111 = vshll.u32 %v2010, 16
        %v2113 = vrot.slane %v2111, 1
        %v2114 = vsel %vm1505, %v2109, %v2113
        %v2116 = vshrl.u32 %v1931, 16
        %v2118 = vshll.u32 %v1931, 16
        %v2120 = vrot.slane %v2118, 1
        %v2121 = vor.u32 %v2116, %v2120
        %v2123 = vshll.u32 %v2011, 16
        %v2125 = vrot.slane %v2123, 1
        %v2126 = vsel %vm1505, %v2121, %v2125
        %v2128 = vshrl.u32 %v1932, 16
        %v2130 = vshll.u32 %v1932, 16
        %v2132 = vrot.slane %v2130, 1
        %v2133 = vor.u32 %v2128, %v2132
        %v2135 = vshll.u32 %v2012, 16
        %v2137 = vrot.slane %v2135, 1
        %v2138 = vsel %vm1505, %v2133, %v2137
        %v2140 = vshrl.u32 %v1933, 16
        %v2142 = vshll.u32 %v1933, 16
        %v2144 = vrot.slane %v2142, 1
        %v2145 = vor.u32 %v2140, %v2144
        %v2147 = vshll.u32 %v2013, 16
        %v2149 = vrot.slane %v2147, 1
        %v2150 = vsel %vm1505, %v2145, %v2149
        %v2152 = vshrl.u32 %v1934, 16
        %v2154 = vshll.u32 %v1934, 16
        %v2156 = vrot.slane %v2154, 1
        %v2157 = vor.u32 %v2152, %v2156
        %v2159 = vshll.u32 %v2014, 16
        %v2161 = vrot.slane %v2159, 1
        %v2162 = vsel %vm1505, %v2157, %v2161
        %v2164 = vshrl.u32 %v1935, 16
        %v2166 = vshll.u32 %v1935, 16
        %v2168 = vrot.slane %v2166, 1
        %v2169 = vor.u32 %v2164, %v2168
        %v2171 = vshll.u32 %v2015, 16
        %v2173 = vrot.slane %v2171, 1
        %v2174 = vsel %vm1505, %v2169, %v2173
        %v2176 = vshrl.u32 %v1936, 16
        %v2178 = vshll.u32 %v1936, 16
        %v2180 = vrot.slane %v2178, 1
        %v2181 = vor.u32 %v2176, %v2180
        %v2183 = vshll.u32 %v2016, 16
        %v2185 = vrot.slane %v2183, 1
        %v2186 = vsel %vm1505, %v2181, %v2185
        %v2188 = vshrl.u32 %v1937, 16
        %v2190 = vshll.u32 %v1937, 16
        %v2192 = vrot.slane %v2190, 1
        %v2193 = vor.u32 %v2188, %v2192
        %v2195 = vshll.u32 %v2017, 16
        %v2197 = vrot.slane %v2195, 1
        %v2198 = vsel %vm1505, %v2193, %v2197
        %v2200 = vshrl.u32 %v1938, 16
        %v2202 = vshll.u32 %v1938, 16
        %v2204 = vrot.slane %v2202, 1
        %v2205 = vor.u32 %v2200, %v2204
        %v2207 = vshll.u32 %v2018, 16
        %v2209 = vrot.slane %v2207, 1
        %v2210 = vsel %vm1505, %v2205, %v2209
        %2211 = vrot.lane.b32.xlu0 %v2030, 96
        %v2212 = vpop.permute.xlu0 %2211
        %2213 = vrot.lane.b32.xlu0 %v2042, 96
        %v2214 = vpop.permute.xlu0 %2213
        %2215 = vrot.lane.b32.xlu0 %v2054, 96
        %v2216 = vpop.permute.xlu0 %2215
        %2217 = vrot.lane.b32.xlu0 %v2066, 96
        %v2218 = vpop.permute.xlu0 %2217
        %2219 = vrot.lane.b32.xlu0 %v2078, 96
        %v2220 = vpop.permute.xlu0 %2219
        %2221 = vrot.lane.b32.xlu0 %v2090, 96
        %v2222 = vpop.permute.xlu0 %2221
        %2223 = vrot.lane.b32.xlu0 %v2102, 96
        %v2224 = vpop.permute.xlu0 %2223
        %2225 = vrot.lane.b32.xlu0 %v2114, 96
        %v2226 = vpop.permute.xlu0 %2225
        %2227 = vrot.lane.b32.xlu0 %v2126, 96
        %v2228 = vpop.permute.xlu0 %2227
        %2229 = vrot.lane.b32.xlu0 %v2138, 96
        %v2230 = vpop.permute.xlu0 %2229
        %2231 = vrot.lane.b32.xlu0 %v2150, 96
        %v2232 = vpop.permute.xlu0 %2231
        %2233 = vrot.lane.b32.xlu0 %v2162, 96
        %v2234 = vpop.permute.xlu0 %2233
        %2235 = vrot.lane.b32.xlu0 %v2174, 96
        %v2236 = vpop.permute.xlu0 %2235
        %2237 = vrot.lane.b32.xlu0 %v2186, 96
        %v2238 = vpop.permute.xlu0 %2237
        %2239 = vrot.lane.b32.xlu0 %v2198, 96
        %v2240 = vpop.permute.xlu0 %2239
        %2241 = vrot.lane.b32.xlu0 %v2210, 96
        %v2242 = vpop.permute.xlu0 %2241
        %v2259 = vunpack.c.l.b16 %v1296
        %v2260 = vunpack.c.l.b16 %v1297
        %v2261 = vunpack.c.l.b16 %v1298
        %v2262 = vunpack.c.l.b16 %v1299
        %v2263 = vunpack.c.l.b16 %v1300
        %v2264 = vunpack.c.l.b16 %v1301
        %v2265 = vunpack.c.l.b16 %v1302
        %v2266 = vunpack.c.l.b16 %v1303
        %v2267 = vunpack.c.l.b16 %v1304
        %v2268 = vunpack.c.l.b16 %v1305
        %v2269 = vunpack.c.l.b16 %v1306
        %v2270 = vunpack.c.l.b16 %v1307
        %v2271 = vunpack.c.l.b16 %v1308
        %v2272 = vunpack.c.l.b16 %v1309
        %v2273 = vunpack.c.l.b16 %v1310
        %v2274 = vunpack.c.l.b16 %v1311
        %v2275 = vpack.c.b16 %v1892, %v2259
        %v2276 = vpack.c.b16 %v1894, %v2260
        %v2277 = vpack.c.b16 %v1896, %v2261
        %v2278 = vpack.c.b16 %v1898, %v2262
        %v2279 = vpack.c.b16 %v1900, %v2263
        %v2280 = vpack.c.b16 %v1902, %v2264
        %v2281 = vpack.c.b16 %v1904, %v2265
        %v2282 = vpack.c.b16 %v1906, %v2266
        %v2283 = vpack.c.b16 %v1908, %v2267
        %v2284 = vpack.c.b16 %v1910, %v2268
        %v2285 = vpack.c.b16 %v1912, %v2269
        %v2286 = vpack.c.b16 %v1914, %v2270
        %v2287 = vpack.c.b16 %v1916, %v2271
        %v2288 = vpack.c.b16 %v1918, %v2272
        %v2289 = vpack.c.b16 %v1920, %v2273
        %v2290 = vpack.c.b16 %v1922, %v2274
        %v2291 = vrot.slane %v2275, 1
        %v2292 = vrot.slane %v2003, 1
        %v2293 = vsel %vm1778, %v2291, %v2292
        %v2294 = vrot.slane %v2276, 1
        %v2295 = vrot.slane %v2004, 1
        %v2296 = vsel %vm1778, %v2294, %v2295
        %v2297 = vrot.slane %v2277, 1
        %v2298 = vrot.slane %v2005, 1
        %v2299 = vsel %vm1778, %v2297, %v2298
        %v2300 = vrot.slane %v2278, 1
        %v2301 = vrot.slane %v2006, 1
        %v2302 = vsel %vm1778, %v2300, %v2301
        %v2303 = vrot.slane %v2279, 1
        %v2304 = vrot.slane %v2007, 1
        %v2305 = vsel %vm1778, %v2303, %v2304
        %v2306 = vrot.slane %v2280, 1
        %v2307 = vrot.slane %v2008, 1
        %v2308 = vsel %vm1778, %v2306, %v2307
        %v2309 = vrot.slane %v2281, 1
        %v2310 = vrot.slane %v2009, 1
        %v2311 = vsel %vm1778, %v2309, %v2310
        %v2312 = vrot.slane %v2282, 1
        %v2313 = vrot.slane %v2010, 1
        %v2314 = vsel %vm1778, %v2312, %v2313
        %v2315 = vrot.slane %v2283, 1
        %v2316 = vrot.slane %v2011, 1
        %v2317 = vsel %vm1778, %v2315, %v2316
        %v2318 = vrot.slane %v2284, 1
        %v2319 = vrot.slane %v2012, 1
        %v2320 = vsel %vm1778, %v2318, %v2319
        %v2321 = vrot.slane %v2285, 1
        %v2322 = vrot.slane %v2013, 1
        %v2323 = vsel %vm1778, %v2321, %v2322
        %v2324 = vrot.slane %v2286, 1
        %v2325 = vrot.slane %v2014, 1
        %v2326 = vsel %vm1778, %v2324, %v2325
        %v2327 = vrot.slane %v2287, 1
        %v2328 = vrot.slane %v2015, 1
        %v2329 = vsel %vm1778, %v2327, %v2328
        %v2330 = vrot.slane %v2288, 1
        %v2331 = vrot.slane %v2016, 1
        %v2332 = vsel %vm1778, %v2330, %v2331
        %v2333 = vrot.slane %v2289, 1
        %v2334 = vrot.slane %v2017, 1
        %v2335 = vsel %vm1778, %v2333, %v2334
        %v2336 = vrot.slane %v2290, 1
        %v2337 = vrot.slane %v2018, 1
        %v2338 = vsel %vm1778, %v2336, %v2337
        %2339 = vrot.lane.b32.xlu0 %v2293, 120
        %v2340 = vpop.permute.xlu0 %2339
        %2341 = vrot.lane.b32.xlu0 %v2296, 120
        %v2342 = vpop.permute.xlu0 %2341
        %2343 = vrot.lane.b32.xlu0 %v2299, 120
        %v2344 = vpop.permute.xlu0 %2343
        %2345 = vrot.lane.b32.xlu0 %v2302, 120
        %v2346 = vpop.permute.xlu0 %2345
        %2347 = vrot.lane.b32.xlu0 %v2305, 120
        %v2348 = vpop.permute.xlu0 %2347
        %2349 = vrot.lane.b32.xlu0 %v2308, 120
        %v2350 = vpop.permute.xlu0 %2349
        %2351 = vrot.lane.b32.xlu0 %v2311, 120
        %v2352 = vpop.permute.xlu0 %2351
        %2353 = vrot.lane.b32.xlu0 %v2314, 120
        %v2354 = vpop.permute.xlu0 %2353
        %2355 = vrot.lane.b32.xlu0 %v2317, 120
        %v2356 = vpop.permute.xlu0 %2355
        %2357 = vrot.lane.b32.xlu0 %v2320, 120
        %v2358 = vpop.permute.xlu0 %2357
        %2359 = vrot.lane.b32.xlu0 %v2323, 120
        %v2360 = vpop.permute.xlu0 %2359
        %2361 = vrot.lane.b32.xlu0 %v2326, 120
        %v2362 = vpop.permute.xlu0 %2361
        %2363 = vrot.lane.b32.xlu0 %v2329, 120
        %v2364 = vpop.permute.xlu0 %2363
        %2365 = vrot.lane.b32.xlu0 %v2332, 120
        %v2366 = vpop.permute.xlu0 %2365
        %2367 = vrot.lane.b32.xlu0 %v2335, 120
        %v2368 = vpop.permute.xlu0 %2367
        %2369 = vrot.lane.b32.xlu0 %v2338, 120
        %v2370 = vpop.permute.xlu0 %2369
        %v2403 = vunpack.c.l.b16 %v1313
        %v2404 = vunpack.c.l.b16 %v1314
        %v2405 = vunpack.c.l.b16 %v1315
        %v2406 = vunpack.c.l.b16 %v1316
        %v2407 = vunpack.c.l.b16 %v1317
        %v2408 = vunpack.c.l.b16 %v1318
        %v2409 = vunpack.c.l.b16 %v1319
        %v2410 = vunpack.c.l.b16 %v1320
        %v2411 = vunpack.c.l.b16 %v1321
        %v2412 = vunpack.c.l.b16 %v1322
        %v2413 = vunpack.c.l.b16 %v1323
        %v2414 = vunpack.c.l.b16 %v1324
        %v2415 = vunpack.c.l.b16 %v1325
        %v2416 = vunpack.c.l.b16 %v1326
        %v2417 = vunpack.c.l.b16 %v1327
        %v2418 = vunpack.c.l.b16 %v1328
        %v2419 = vunpack.c.l.b16 %v1329
        %v2420 = vunpack.c.l.b16 %v1330
        %v2421 = vunpack.c.l.b16 %v1331
        %v2422 = vunpack.c.l.b16 %v1332
        %v2423 = vunpack.c.l.b16 %v1333
        %v2424 = vunpack.c.l.b16 %v1334
        %v2425 = vunpack.c.l.b16 %v1335
        %v2426 = vunpack.c.l.b16 %v1336
        %v2427 = vunpack.c.l.b16 %v1337
        %v2428 = vunpack.c.l.b16 %v1338
        %v2429 = vunpack.c.l.b16 %v1339
        %v2430 = vunpack.c.l.b16 %v1340
        %v2431 = vunpack.c.l.b16 %v1341
        %v2432 = vunpack.c.l.b16 %v1342
        %v2433 = vunpack.c.l.b16 %v1343
        %v2434 = vunpack.c.l.b16 %v1344
        %v2435 = vpack.c.b16 %v2404, %v2403
        %v2436 = vpack.c.b16 %v2406, %v2405
        %v2437 = vpack.c.b16 %v2408, %v2407
        %v2438 = vpack.c.b16 %v2410, %v2409
        %v2439 = vpack.c.b16 %v2412, %v2411
        %v2440 = vpack.c.b16 %v2414, %v2413
        %v2441 = vpack.c.b16 %v2416, %v2415
        %v2442 = vpack.c.b16 %v2418, %v2417
        %v2443 = vpack.c.b16 %v2420, %v2419
        %v2444 = vpack.c.b16 %v2422, %v2421
        %v2445 = vpack.c.b16 %v2424, %v2423
        %v2446 = vpack.c.b16 %v2426, %v2425
        %v2447 = vpack.c.b16 %v2428, %v2427
        %v2448 = vpack.c.b16 %v2430, %v2429
        %v2449 = vpack.c.b16 %v2432, %v2431
        %v2450 = vpack.c.b16 %v2434, %v2433
        %2451 = vrot.lane.b32.xlu0 %v2435, 16
        %v2452 = vpop.permute.xlu0 %2451
        %2453 = vrot.lane.b32.xlu0 %v2436, 16
        %v2454 = vpop.permute.xlu0 %2453
        %2455 = vrot.lane.b32.xlu0 %v2437, 16
        %v2456 = vpop.permute.xlu0 %2455
        %2457 = vrot.lane.b32.xlu0 %v2438, 16
        %v2458 = vpop.permute.xlu0 %2457
        %2459 = vrot.lane.b32.xlu0 %v2439, 16
        %v2460 = vpop.permute.xlu0 %2459
        %2461 = vrot.lane.b32.xlu0 %v2440, 16
        %v2462 = vpop.permute.xlu0 %2461
        %2463 = vrot.lane.b32.xlu0 %v2441, 16
        %v2464 = vpop.permute.xlu0 %2463
        %2465 = vrot.lane.b32.xlu0 %v2442, 16
        %v2466 = vpop.permute.xlu0 %2465
        %2467 = vrot.lane.b32.xlu0 %v2443, 16
        %v2468 = vpop.permute.xlu0 %2467
        %2469 = vrot.lane.b32.xlu0 %v2444, 16
        %v2470 = vpop.permute.xlu0 %2469
        %2471 = vrot.lane.b32.xlu0 %v2445, 16
        %v2472 = vpop.permute.xlu0 %2471
        %2473 = vrot.lane.b32.xlu0 %v2446, 16
        %v2474 = vpop.permute.xlu0 %2473
        %2475 = vrot.lane.b32.xlu0 %v2447, 16
        %v2476 = vpop.permute.xlu0 %2475
        %2477 = vrot.lane.b32.xlu0 %v2448, 16
        %v2478 = vpop.permute.xlu0 %2477
        %2479 = vrot.lane.b32.xlu0 %v2449, 16
        %v2480 = vpop.permute.xlu0 %2479
        %2481 = vrot.lane.b32.xlu0 %v2450, 16
        %v2482 = vpop.permute.xlu0 %2481
        %v2499 = vunpack.c.l.b16 %v1345
        %v2500 = vunpack.c.l.b16 %v1346
        %v2501 = vunpack.c.l.b16 %v1347
        %v2502 = vunpack.c.l.b16 %v1348
        %v2503 = vunpack.c.l.b16 %v1349
        %v2504 = vunpack.c.l.b16 %v1350
        %v2505 = vunpack.c.l.b16 %v1351
        %v2506 = vunpack.c.l.b16 %v1352
        %v2507 = vunpack.c.l.b16 %v1353
        %v2508 = vunpack.c.l.b16 %v1354
        %v2509 = vunpack.c.l.b16 %v1355
        %v2510 = vunpack.c.l.b16 %v1356
        %v2511 = vunpack.c.l.b16 %v1357
        %v2512 = vunpack.c.l.b16 %v1358
        %v2513 = vunpack.c.l.b16 %v1359
        %v2514 = vunpack.c.l.b16 %v1360
        %v2515 = vpack.c.b16 %v2499, %v2499
        %v2516 = vpack.c.b16 %v2500, %v2500
        %v2517 = vpack.c.b16 %v2501, %v2501
        %v2518 = vpack.c.b16 %v2502, %v2502
        %v2519 = vpack.c.b16 %v2503, %v2503
        %v2520 = vpack.c.b16 %v2504, %v2504
        %v2521 = vpack.c.b16 %v2505, %v2505
        %v2522 = vpack.c.b16 %v2506, %v2506
        %v2523 = vpack.c.b16 %v2507, %v2507
        %v2524 = vpack.c.b16 %v2508, %v2508
        %v2525 = vpack.c.b16 %v2509, %v2509
        %v2526 = vpack.c.b16 %v2510, %v2510
        %v2527 = vpack.c.b16 %v2511, %v2511
        %v2528 = vpack.c.b16 %v2512, %v2512
        %v2529 = vpack.c.b16 %v2513, %v2513
        %v2530 = vpack.c.b16 %v2514, %v2514
        %v2532 = vshrl.u32 %v2435, 16
        %v2534 = vshll.u32 %v2435, 16
        %v2536 = vrot.slane %v2534, 1
        %v2537 = vor.u32 %v2532, %v2536
        %v2539 = vshll.u32 %v2515, 16
        %v2541 = vrot.slane %v2539, 1
        %v2542 = vsel %vm1505, %v2537, %v2541
        %v2544 = vshrl.u32 %v2436, 16
        %v2546 = vshll.u32 %v2436, 16
        %v2548 = vrot.slane %v2546, 1
        %v2549 = vor.u32 %v2544, %v2548
        %v2551 = vshll.u32 %v2516, 16
        %v2553 = vrot.slane %v2551, 1
        %v2554 = vsel %vm1505, %v2549, %v2553
        %v2556 = vshrl.u32 %v2437, 16
        %v2558 = vshll.u32 %v2437, 16
        %v2560 = vrot.slane %v2558, 1
        %v2561 = vor.u32 %v2556, %v2560
        %v2563 = vshll.u32 %v2517, 16
        %v2565 = vrot.slane %v2563, 1
        %v2566 = vsel %vm1505, %v2561, %v2565
        %v2568 = vshrl.u32 %v2438, 16
        %v2570 = vshll.u32 %v2438, 16
        %v2572 = vrot.slane %v2570, 1
        %v2573 = vor.u32 %v2568, %v2572
        %v2575 = vshll.u32 %v2518, 16
        %v2577 = vrot.slane %v2575, 1
        %v2578 = vsel %vm1505, %v2573, %v2577
        %v2580 = vshrl.u32 %v2439, 16
        %v2582 = vshll.u32 %v2439, 16
        %v2584 = vrot.slane %v2582, 1
        %v2585 = vor.u32 %v2580, %v2584
        %v2587 = vshll.u32 %v2519, 16
        %v2589 = vrot.slane %v2587, 1
        %v2590 = vsel %vm1505, %v2585, %v2589
        %v2592 = vshrl.u32 %v2440, 16
        %v2594 = vshll.u32 %v2440, 16
        %v2596 = vrot.slane %v2594, 1
        %v2597 = vor.u32 %v2592, %v2596
        %v2599 = vshll.u32 %v2520, 16
        %v2601 = vrot.slane %v2599, 1
        %v2602 = vsel %vm1505, %v2597, %v2601
        %v2604 = vshrl.u32 %v2441, 16
        %v2606 = vshll.u32 %v2441, 16
        %v2608 = vrot.slane %v2606, 1
        %v2609 = vor.u32 %v2604, %v2608
        %v2611 = vshll.u32 %v2521, 16
        %v2613 = vrot.slane %v2611, 1
        %v2614 = vsel %vm1505, %v2609, %v2613
        %v2616 = vshrl.u32 %v2442, 16
        %v2618 = vshll.u32 %v2442, 16
        %v2620 = vrot.slane %v2618, 1
        %v2621 = vor.u32 %v2616, %v2620
        %v2623 = vshll.u32 %v2522, 16
        %v2625 = vrot.slane %v2623, 1
        %v2626 = vsel %vm1505, %v2621, %v2625
        %v2628 = vshrl.u32 %v2443, 16
        %v2630 = vshll.u32 %v2443, 16
        %v2632 = vrot.slane %v2630, 1
        %v2633 = vor.u32 %v2628, %v2632
        %v2635 = vshll.u32 %v2523, 16
        %v2637 = vrot.slane %v2635, 1
        %v2638 = vsel %vm1505, %v2633, %v2637
        %v2640 = vshrl.u32 %v2444, 16
        %v2642 = vshll.u32 %v2444, 16
        %v2644 = vrot.slane %v2642, 1
        %v2645 = vor.u32 %v2640, %v2644
        %v2647 = vshll.u32 %v2524, 16
        %v2649 = vrot.slane %v2647, 1
        %v2650 = vsel %vm1505, %v2645, %v2649
        %v2652 = vshrl.u32 %v2445, 16
        %v2654 = vshll.u32 %v2445, 16
        %v2656 = vrot.slane %v2654, 1
        %v2657 = vor.u32 %v2652, %v2656
        %v2659 = vshll.u32 %v2525, 16
        %v2661 = vrot.slane %v2659, 1
        %v2662 = vsel %vm1505, %v2657, %v2661
        %v2664 = vshrl.u32 %v2446, 16
        %v2666 = vshll.u32 %v2446, 16
        %v2668 = vrot.slane %v2666, 1
        %v2669 = vor.u32 %v2664, %v2668
        %v2671 = vshll.u32 %v2526, 16
        %v2673 = vrot.slane %v2671, 1
        %v2674 = vsel %vm1505, %v2669, %v2673
        %v2676 = vshrl.u32 %v2447, 16
        %v2678 = vshll.u32 %v2447, 16
        %v2680 = vrot.slane %v2678, 1
        %v2681 = vor.u32 %v2676, %v2680
        %v2683 = vshll.u32 %v2527, 16
        %v2685 = vrot.slane %v2683, 1
        %v2686 = vsel %vm1505, %v2681, %v2685
        %v2688 = vshrl.u32 %v2448, 16
        %v2690 = vshll.u32 %v2448, 16
        %v2692 = vrot.slane %v2690, 1
        %v2693 = vor.u32 %v2688, %v2692
        %v2695 = vshll.u32 %v2528, 16
        %v2697 = vrot.slane %v2695, 1
        %v2698 = vsel %vm1505, %v2693, %v2697
        %v2700 = vshrl.u32 %v2449, 16
        %v2702 = vshll.u32 %v2449, 16
        %v2704 = vrot.slane %v2702, 1
        %v2705 = vor.u32 %v2700, %v2704
        %v2707 = vshll.u32 %v2529, 16
        %v2709 = vrot.slane %v2707, 1
        %v2710 = vsel %vm1505, %v2705, %v2709
        %v2712 = vshrl.u32 %v2450, 16
        %v2714 = vshll.u32 %v2450, 16
        %v2716 = vrot.slane %v2714, 1
        %v2717 = vor.u32 %v2712, %v2716
        %v2719 = vshll.u32 %v2530, 16
        %v2721 = vrot.slane %v2719, 1
        %v2722 = vsel %vm1505, %v2717, %v2721
        %2723 = vrot.lane.b32.xlu0 %v2542, 40
        %v2724 = vpop.permute.xlu0 %2723
        %2725 = vrot.lane.b32.xlu0 %v2554, 40
        %v2726 = vpop.permute.xlu0 %2725
        %2727 = vrot.lane.b32.xlu0 %v2566, 40
        %v2728 = vpop.permute.xlu0 %2727
        %2729 = vrot.lane.b32.xlu0 %v2578, 40
        %v2730 = vpop.permute.xlu0 %2729
        %2731 = vrot.lane.b32.xlu0 %v2590, 40
        %v2732 = vpop.permute.xlu0 %2731
        %2733 = vrot.lane.b32.xlu0 %v2602, 40
        %v2734 = vpop.permute.xlu0 %2733
        %2735 = vrot.lane.b32.xlu0 %v2614, 40
        %v2736 = vpop.permute.xlu0 %2735
        %2737 = vrot.lane.b32.xlu0 %v2626, 40
        %v2738 = vpop.permute.xlu0 %2737
        %2739 = vrot.lane.b32.xlu0 %v2638, 40
        %v2740 = vpop.permute.xlu0 %2739
        %2741 = vrot.lane.b32.xlu0 %v2650, 40
        %v2742 = vpop.permute.xlu0 %2741
        %2743 = vrot.lane.b32.xlu0 %v2662, 40
        %v2744 = vpop.permute.xlu0 %2743
        %2745 = vrot.lane.b32.xlu0 %v2674, 40
        %v2746 = vpop.permute.xlu0 %2745
        %2747 = vrot.lane.b32.xlu0 %v2686, 40
        %v2748 = vpop.permute.xlu0 %2747
        %2749 = vrot.lane.b32.xlu0 %v2698, 40
        %v2750 = vpop.permute.xlu0 %2749
        %2751 = vrot.lane.b32.xlu0 %v2710, 40
        %v2752 = vpop.permute.xlu0 %2751
        %2753 = vrot.lane.b32.xlu0 %v2722, 40
        %v2754 = vpop.permute.xlu0 %2753
        %v2771 = vunpack.c.l.b16 %v1361
        %v2772 = vunpack.c.l.b16 %v1362
        %v2773 = vunpack.c.l.b16 %v1363
        %v2774 = vunpack.c.l.b16 %v1364
        %v2775 = vunpack.c.l.b16 %v1365
        %v2776 = vunpack.c.l.b16 %v1366
        %v2777 = vunpack.c.l.b16 %v1367
        %v2778 = vunpack.c.l.b16 %v1368
        %v2779 = vunpack.c.l.b16 %v1369
        %v2780 = vunpack.c.l.b16 %v1370
        %v2781 = vunpack.c.l.b16 %v1371
        %v2782 = vunpack.c.l.b16 %v1372
        %v2783 = vunpack.c.l.b16 %v1373
        %v2784 = vunpack.c.l.b16 %v1374
        %v2785 = vunpack.c.l.b16 %v1375
        %v2786 = vunpack.c.l.b16 %v1376
        %v2787 = vpack.c.b16 %v2404, %v2771
        %v2788 = vpack.c.b16 %v2406, %v2772
        %v2789 = vpack.c.b16 %v2408, %v2773
        %v2790 = vpack.c.b16 %v2410, %v2774
        %v2791 = vpack.c.b16 %v2412, %v2775
        %v2792 = vpack.c.b16 %v2414, %v2776
        %v2793 = vpack.c.b16 %v2416, %v2777
        %v2794 = vpack.c.b16 %v2418, %v2778
        %v2795 = vpack.c.b16 %v2420, %v2779
        %v2796 = vpack.c.b16 %v2422, %v2780
        %v2797 = vpack.c.b16 %v2424, %v2781
        %v2798 = vpack.c.b16 %v2426, %v2782
        %v2799 = vpack.c.b16 %v2428, %v2783
        %v2800 = vpack.c.b16 %v2430, %v2784
        %v2801 = vpack.c.b16 %v2432, %v2785
        %v2802 = vpack.c.b16 %v2434, %v2786
        %v2803 = vrot.slane %v2787, 1
        %v2804 = vrot.slane %v2515, 1
        %v2805 = vsel %vm1778, %v2803, %v2804
        %v2806 = vrot.slane %v2788, 1
        %v2807 = vrot.slane %v2516, 1
        %v2808 = vsel %vm1778, %v2806, %v2807
        %v2809 = vrot.slane %v2789, 1
        %v2810 = vrot.slane %v2517, 1
        %v2811 = vsel %vm1778, %v2809, %v2810
        %v2812 = vrot.slane %v2790, 1
        %v2813 = vrot.slane %v2518, 1
        %v2814 = vsel %vm1778, %v2812, %v2813
        %v2815 = vrot.slane %v2791, 1
        %v2816 = vrot.slane %v2519, 1
        %v2817 = vsel %vm1778, %v2815, %v2816
        %v2818 = vrot.slane %v2792, 1
        %v2819 = vrot.slane %v2520, 1
        %v2820 = vsel %vm1778, %v2818, %v2819
        %v2821 = vrot.slane %v2793, 1
        %v2822 = vrot.slane %v2521, 1
        %v2823 = vsel %vm1778, %v2821, %v2822
        %v2824 = vrot.slane %v2794, 1
        %v2825 = vrot.slane %v2522, 1
        %v2826 = vsel %vm1778, %v2824, %v2825
        %v2827 = vrot.slane %v2795, 1
        %v2828 = vrot.slane %v2523, 1
        %v2829 = vsel %vm1778, %v2827, %v2828
        %v2830 = vrot.slane %v2796, 1
        %v2831 = vrot.slane %v2524, 1
        %v2832 = vsel %vm1778, %v2830, %v2831
        %v2833 = vrot.slane %v2797, 1
        %v2834 = vrot.slane %v2525, 1
        %v2835 = vsel %vm1778, %v2833, %v2834
        %v2836 = vrot.slane %v2798, 1
        %v2837 = vrot.slane %v2526, 1
        %v2838 = vsel %vm1778, %v2836, %v2837
        %v2839 = vrot.slane %v2799, 1
        %v2840 = vrot.slane %v2527, 1
        %v2841 = vsel %vm1778, %v2839, %v2840
        %v2842 = vrot.slane %v2800, 1
        %v2843 = vrot.slane %v2528, 1
        %v2844 = vsel %vm1778, %v2842, %v2843
        %v2845 = vrot.slane %v2801, 1
        %v2846 = vrot.slane %v2529, 1
        %v2847 = vsel %vm1778, %v2845, %v2846
        %v2848 = vrot.slane %v2802, 1
        %v2849 = vrot.slane %v2530, 1
        %v2850 = vsel %vm1778, %v2848, %v2849
        %2851 = vrot.lane.b32.xlu0 %v2805, 64
        %v2852 = vpop.permute.xlu0 %2851
        %2853 = vrot.lane.b32.xlu0 %v2808, 64
        %v2854 = vpop.permute.xlu0 %2853
        %2855 = vrot.lane.b32.xlu0 %v2811, 64
        %v2856 = vpop.permute.xlu0 %2855
        %2857 = vrot.lane.b32.xlu0 %v2814, 64
        %v2858 = vpop.permute.xlu0 %2857
        %2859 = vrot.lane.b32.xlu0 %v2817, 64
        %v2860 = vpop.permute.xlu0 %2859
        %2861 = vrot.lane.b32.xlu0 %v2820, 64
        %v2862 = vpop.permute.xlu0 %2861
        %2863 = vrot.lane.b32.xlu0 %v2823, 64
        %v2864 = vpop.permute.xlu0 %2863
        %2865 = vrot.lane.b32.xlu0 %v2826, 64
        %v2866 = vpop.permute.xlu0 %2865
        %2867 = vrot.lane.b32.xlu0 %v2829, 64
        %v2868 = vpop.permute.xlu0 %2867
        %2869 = vrot.lane.b32.xlu0 %v2832, 64
        %v2870 = vpop.permute.xlu0 %2869
        %2871 = vrot.lane.b32.xlu0 %v2835, 64
        %v2872 = vpop.permute.xlu0 %2871
        %2873 = vrot.lane.b32.xlu0 %v2838, 64
        %v2874 = vpop.permute.xlu0 %2873
        %2875 = vrot.lane.b32.xlu0 %v2841, 64
        %v2876 = vpop.permute.xlu0 %2875
        %2877 = vrot.lane.b32.xlu0 %v2844, 64
        %v2878 = vpop.permute.xlu0 %2877
        %2879 = vrot.lane.b32.xlu0 %v2847, 64
        %v2880 = vpop.permute.xlu0 %2879
        %2881 = vrot.lane.b32.xlu0 %v2850, 64
        %v2882 = vpop.permute.xlu0 %2881
        %vm2883 = vcmask 195584
        %v2885 = vsel %vm2883, %v1441, %v1699
        %v2887 = vsel %vm2883, %v1442, %v1701
        %v2889 = vsel %vm2883, %v1443, %v1703
        %v2891 = vsel %vm2883, %v1444, %v1705
        %v2893 = vsel %vm2883, %v1445, %v1707
        %v2895 = vsel %vm2883, %v1446, %v1709
        %v2897 = vsel %vm2883, %v1447, %v1711
        %v2899 = vsel %vm2883, %v1448, %v1713
        %v2901 = vsel %vm2883, %v1449, %v1715
        %v2903 = vsel %vm2883, %v1450, %v1717
        %v2905 = vsel %vm2883, %v1451, %v1719
        %v2907 = vsel %vm2883, %v1452, %v1721
        %v2909 = vsel %vm2883, %v1453, %v1723
        %v2911 = vsel %vm2883, %v1454, %v1725
        %v2913 = vsel %vm2883, %v1455, %v1727
        %v2915 = vsel %vm2883, %v1456, %v1729
        %vm2916 = vcmask 392192
        %v2918 = vsel %vm2916, %v2885, %v1828
        %v2920 = vsel %vm2916, %v2887, %v1830
        %v2922 = vsel %vm2916, %v2889, %v1832
        %v2924 = vsel %vm2916, %v2891, %v1834
        %v2926 = vsel %vm2916, %v2893, %v1836
        %v2928 = vsel %vm2916, %v2895, %v1838
        %v2930 = vsel %vm2916, %v2897, %v1840
        %v2932 = vsel %vm2916, %v2899, %v1842
        %v2934 = vsel %vm2916, %v2901, %v1844
        %v2936 = vsel %vm2916, %v2903, %v1846
        %v2938 = vsel %vm2916, %v2905, %v1848
        %v2940 = vsel %vm2916, %v2907, %v1850
        %v2942 = vsel %vm2916, %v2909, %v1852
        %v2944 = vsel %vm2916, %v2911, %v1854
        %v2946 = vsel %vm2916, %v2913, %v1856
        %v2948 = vsel %vm2916, %v2915, %v1858
        %vm2949 = vcmask 588800
        %v2951 = vsel %vm2949, %v2918, %v1940
        %v2953 = vsel %vm2949, %v2920, %v1942
        %v2955 = vsel %vm2949, %v2922, %v1944
        %v2957 = vsel %vm2949, %v2924, %v1946
        %v2959 = vsel %vm2949, %v2926, %v1948
        %v2961 = vsel %vm2949, %v2928, %v1950
        %v2963 = vsel %vm2949, %v2930, %v1952
        %v2965 = vsel %vm2949, %v2932, %v1954
        %v2967 = vsel %vm2949, %v2934, %v1956
        %v2969 = vsel %vm2949, %v2936, %v1958
        %v2971 = vsel %vm2949, %v2938, %v1960
        %v2973 = vsel %vm2949, %v2940, %v1962
        %v2975 = vsel %vm2949, %v2942, %v1964
        %v2977 = vsel %vm2949, %v2944, %v1966
        %v2979 = vsel %vm2949, %v2946, %v1968
        %v2981 = vsel %vm2949, %v2948, %v1970
        %vm2982 = vcmask 785408
        %v2984 = vsel %vm2982, %v2951, %v2212
        %v2986 = vsel %vm2982, %v2953, %v2214
        %v2988 = vsel %vm2982, %v2955, %v2216
        %v2990 = vsel %vm2982, %v2957, %v2218
        %v2992 = vsel %vm2982, %v2959, %v2220
        %v2994 = vsel %vm2982, %v2961, %v2222
        %v2996 = vsel %vm2982, %v2963, %v2224
        %v2998 = vsel %vm2982, %v2965, %v2226
        %v3000 = vsel %vm2982, %v2967, %v2228
        %v3002 = vsel %vm2982, %v2969, %v2230
        %v3004 = vsel %vm2982, %v2971, %v2232
        %v3006 = vsel %vm2982, %v2973, %v2234
        %v3008 = vsel %vm2982, %v2975, %v2236
        %v3010 = vsel %vm2982, %v2977, %v2238
        %v3012 = vsel %vm2982, %v2979, %v2240
        %v3014 = vsel %vm2982, %v2981, %v2242
        %vm3015 = vcmask 982016
        %v3017 = vsel %vm3015, %v2984, %v2340
        %v3020 = vsel %vm3015, %v2986, %v2342
        %v3023 = vsel %vm3015, %v2988, %v2344
        %v3026 = vsel %vm3015, %v2990, %v2346
        %v3029 = vsel %vm3015, %v2992, %v2348
        %v3032 = vsel %vm3015, %v2994, %v2350
        %v3035 = vsel %vm3015, %v2996, %v2352
        %v3038 = vsel %vm3015, %v2998, %v2354
        %v3041 = vsel %vm3015, %v3000, %v2356
        %v3044 = vsel %vm3015, %v3002, %v2358
        %v3047 = vsel %vm3015, %v3004, %v2360
        %v3050 = vsel %vm3015, %v3006, %v2362
        %v3053 = vsel %vm3015, %v3008, %v2364
        %v3056 = vsel %vm3015, %v3010, %v2366
        %v3059 = vsel %vm3015, %v3012, %v2368
        %v3062 = vsel %vm3015, %v3014, %v2370
        %vm3064 = vcmask 130048
        %v3066 = vsel %vm3064, %v2340, %v2452
        %v3068 = vsel %vm3064, %v2342, %v2454
        %v3070 = vsel %vm3064, %v2344, %v2456
        %v3072 = vsel %vm3064, %v2346, %v2458
        %v3074 = vsel %vm3064, %v2348, %v2460
        %v3076 = vsel %vm3064, %v2350, %v2462
        %v3078 = vsel %vm3064, %v2352, %v2464
        %v3080 = vsel %vm3064, %v2354, %v2466
        %v3082 = vsel %vm3064, %v2356, %v2468
        %v3084 = vsel %vm3064, %v2358, %v2470
        %v3086 = vsel %vm3064, %v2360, %v2472
        %v3088 = vsel %vm3064, %v2362, %v2474
        %v3090 = vsel %vm3064, %v2364, %v2476
        %v3092 = vsel %vm3064, %v2366, %v2478
        %v3094 = vsel %vm3064, %v2368, %v2480
        %v3096 = vsel %vm3064, %v2370, %v2482
        %vm3097 = vcmask 326656
        %v3099 = vsel %vm3097, %v3066, %v2724
        %v3101 = vsel %vm3097, %v3068, %v2726
        %v3103 = vsel %vm3097, %v3070, %v2728
        %v3105 = vsel %vm3097, %v3072, %v2730
        %v3107 = vsel %vm3097, %v3074, %v2732
        %v3109 = vsel %vm3097, %v3076, %v2734
        %v3111 = vsel %vm3097, %v3078, %v2736
        %v3113 = vsel %vm3097, %v3080, %v2738
        %v3115 = vsel %vm3097, %v3082, %v2740
        %v3117 = vsel %vm3097, %v3084, %v2742
        %v3119 = vsel %vm3097, %v3086, %v2744
        %v3121 = vsel %vm3097, %v3088, %v2746
        %v3123 = vsel %vm3097, %v3090, %v2748
        %v3125 = vsel %vm3097, %v3092, %v2750
        %v3127 = vsel %vm3097, %v3094, %v2752
        %v3129 = vsel %vm3097, %v3096, %v2754
        %vm3130 = vcmask 523264
        %v3132 = vsel %vm3130, %v3099, %v2852
        %v3134 = vsel %vm3130, %v3101, %v2854
        %v3136 = vsel %vm3130, %v3103, %v2856
        %v3138 = vsel %vm3130, %v3105, %v2858
        %v3140 = vsel %vm3130, %v3107, %v2860
        %v3142 = vsel %vm3130, %v3109, %v2862
        %v3144 = vsel %vm3130, %v3111, %v2864
        %v3146 = vsel %vm3130, %v3113, %v2866
        %v3148 = vsel %vm3130, %v3115, %v2868
        %v3150 = vsel %vm3130, %v3117, %v2870
        %v3152 = vsel %vm3130, %v3119, %v2872
        %v3154 = vsel %vm3130, %v3121, %v2874
        %v3156 = vsel %vm3130, %v3123, %v2876
        %v3158 = vsel %vm3130, %v3125, %v2878
        %v3160 = vsel %vm3130, %v3127, %v2880
        %v3162 = vsel %vm3130, %v3129, %v2882
        %v3163 = vld [vmem:[#allocation9] sm:$0xf]
        %v3164 = vld [vmem:[#allocation9 + $0x4] sm:$0xf]
        %v3165 = vld [vmem:[#allocation9 + $0x8] sm:$0xf]
        %v3166 = vld [vmem:[#allocation9 + $0xc] sm:$0xf]
        %v3167 = vld [vmem:[#allocation9 + $0x10] sm:$0xf]
        %v3168 = vld [vmem:[#allocation9 + $0x14] sm:$0xf]
        %v3169 = vld [vmem:[#allocation9 + $0x18] sm:$0xf]
        %v3170 = vld [vmem:[#allocation9 + $0x1c] sm:$0xf]
        %v3171 = vld [vmem:[#allocation9 + $0x20] sm:$0xf]
        %v3172 = vld [vmem:[#allocation9 + $0x24] sm:$0xf]
        %v3173 = vld [vmem:[#allocation9 + $0x28] sm:$0xf]
        %v3174 = vld [vmem:[#allocation9 + $0x2c] sm:$0xf]
        %v3175 = vld [vmem:[#allocation9 + $0x30] sm:$0xf]
        %v3176 = vld [vmem:[#allocation9 + $0x34] sm:$0xf]
        %v3177 = vld [vmem:[#allocation9 + $0x38] sm:$0xf]
        %v3178 = vld [vmem:[#allocation9 + $0x3c] sm:$0xf]
        %v3179 = vld [vmem:[#allocation9 + $0x40] sm:$0xf]
        %v3180 = vld [vmem:[#allocation9 + $0x44] sm:$0xf]
        %v3181 = vld [vmem:[#allocation9 + $0x48] sm:$0xf]
        %v3182 = vld [vmem:[#allocation9 + $0x4c] sm:$0xf]
        %v3183 = vld [vmem:[#allocation9 + $0x50] sm:$0xf]
        %v3184 = vld [vmem:[#allocation9 + $0x54] sm:$0xf]
        %v3185 = vld [vmem:[#allocation9 + $0x58] sm:$0xf]
        %v3186 = vld [vmem:[#allocation9 + $0x5c] sm:$0xf]
        %v3187 = vld [vmem:[#allocation9 + $0x60] sm:$0xf]
        %v3188 = vld [vmem:[#allocation9 + $0x64] sm:$0xf]
        %v3189 = vld [vmem:[#allocation9 + $0x68] sm:$0xf]
        %v3217 = vunpack.c.l.b16 %v3163
        %v3218 = vunpack.c.l.b16 %v3164
        %v3219 = vunpack.c.l.b16 %v3165
        %v3220 = vunpack.c.l.b16 %v3166
        %v3221 = vunpack.c.l.b16 %v3167
        %v3222 = vunpack.c.l.b16 %v3168
        %v3223 = vunpack.c.l.b16 %v3169
        %v3224 = vunpack.c.l.b16 %v3170
        %v3225 = vunpack.c.l.b16 %v3171
        %v3226 = vunpack.c.l.b16 %v3172
        %v3227 = vunpack.c.l.b16 %v3173
        %v3228 = vunpack.c.l.b16 %v3174
        %v3229 = vunpack.c.l.b16 %v3175
        %v3230 = vunpack.c.l.b16 %v3176
        %v3231 = vunpack.c.l.b16 %v3177
        %v3232 = vunpack.c.l.b16 %v3178
        %v3233 = vunpack.c.l.b16 %v3179
        %v3234 = vunpack.c.l.b16 %v3180
        %v3235 = vunpack.c.l.b16 %v3181
        %v3236 = vunpack.c.l.b16 %v3182
        %v3237 = vunpack.c.l.b16 %v3183
        %v3238 = vunpack.c.l.b16 %v3184
        %v3239 = vunpack.c.l.b16 %v3185
        %v3240 = vunpack.c.l.b16 %v3186
        %v3241 = vunpack.c.l.b16 %v3187
        %v3242 = vunpack.c.l.b16 %v3188
        %v3243 = vunpack.c.l.b16 %v3189
        %v3244 = vpack.c.b16 %v3218, %v3217
        %v3245 = vpack.c.b16 %v3220, %v3219
        %v3246 = vpack.c.b16 %v3222, %v3221
        %v3247 = vpack.c.b16 %v3224, %v3223
        %v3248 = vpack.c.b16 %v3226, %v3225
        %v3249 = vpack.c.b16 %v3228, %v3227
        %v3250 = vpack.c.b16 %v3230, %v3229
        %v3251 = vpack.c.b16 %v3232, %v3231
        %v3252 = vpack.c.b16 %v3234, %v3233
        %v3253 = vpack.c.b16 %v3236, %v3235
        %v3254 = vpack.c.b16 %v3238, %v3237
        %v3255 = vpack.c.b16 %v3240, %v3239
        %v3256 = vpack.c.b16 %v3242, %v3241
        %v3257 = vpack.c.b16 %v3243, %v3243
        %vm3271 = vcmask 719872
        %v3272 = vsel %vm3271, %v3132, 0
        %v3274 = vsel %vm3271, %v3134, 0
        %v3276 = vsel %vm3271, %v3136, 0
        %v3278 = vsel %vm3271, %v3138, 0
        %v3280 = vsel %vm3271, %v3140, 0
        %v3282 = vsel %vm3271, %v3142, 0
        %v3284 = vsel %vm3271, %v3144, 0
        %v3286 = vsel %vm3271, %v3146, 0
        %v3288 = vsel %vm3271, %v3148, 0
        %v3290 = vsel %vm3271, %v3150, 0
        %v3292 = vsel %vm3271, %v3152, 0
        %v3294 = vsel %vm3271, %v3154, 0
        %v3296 = vsel %vm3271, %v3156, 0
        %v3298 = vsel %vm3271, %v3158, 0
        %v3300 = vsel %vm3271, %v3160, 0
        %v3302 = vsel %vm3271, %v3162, 0
        %vm3304 = vcmask 1043456
        %v3306 = vsel %vm3304, %v3257, 0
        %3308 = vmatprep.subr.bf16.mxu0 0
        %3309 = vmatpush1.bf16.msra.mxu0 %v3251
        %3310 = vmatprep.subr.bf16.mxu0 0
        %3311 = vmatpush1.bf16.msra.mxu0 %v3250
        %3312 = vmatprep.subr.bf16.mxu0 0
        %3313 = vmatpush1.bf16.msra.mxu0 %v3249
        %3314 = vmatprep.subr.bf16.mxu0 0
        %3315 = vmatpush1.bf16.msra.mxu0 %v3248
        %3316 = vmatprep.subr.bf16.mxu0 0
        %3317 = vmatpush1.bf16.msra.mxu0 %v3247
        %3318 = vmatprep.subr.bf16.mxu0 0
        %3319 = vmatpush1.bf16.msra.mxu0 %v3246
        %3320 = vmatprep.subr.bf16.mxu0 0
        %3321 = vmatpush1.bf16.msra.mxu0 %v3245
        %3322 = vmatprep.subr.bf16.mxu0 0
        %3323 = vmatpush1.bf16.msra.mxu0 %v3244
        %3324 = vmatprep.subr.bf16.mxu0 0
        %3325 = vmatpush2.bf16.msra.mxu0 0
        %3326 = vmatprep.subr.bf16.mxu0 0
        %3327 = vmatpush2.bf16.msra.mxu0 0
        %3328 = vmatprep.subr.bf16.mxu0 0
        %3329 = vmatpush2.bf16.msra.mxu0 %v3306
        %3330 = vmatprep.subr.bf16.mxu0 0
        %3331 = vmatpush2.bf16.msra.mxu0 %v3256
        %3332 = vmatprep.subr.bf16.mxu0 0
        %3333 = vmatpush2.bf16.msra.mxu0 %v3255
        %3334 = vmatprep.subr.bf16.mxu0 0
        %3335 = vmatpush2.bf16.msra.mxu0 %v3254
        %3336 = vmatprep.subr.bf16.mxu0 0
        %3337 = vmatpush2.bf16.msra.mxu0 %v3253
        %3338 = vmatprep.subr.bf16.mxu0 0
        %3339 = vmatpush2.bf16.msra.mxu0 %v3252
        %3340 = vmatprep.mubr.bf16.mxu0 %v3272
        %3341 = vmatmul.mubr.bf16.gmra.mxu0 %v3017
        %v3342 = vpop.f32.mrf.mxu0
        %v3343 = vadd.f32 0.0, %v3342
        %v3344 = vpop.f32.mrf.mxu0
        %v3345 = vpop.f32.mrf.mxu0
        %v3346 = vadd.f32 0.0, %v3345
        %v3347 = vpop.f32.mrf.mxu0
        %3348 = vmatprep.mubr.bf16.mxu0 %v3274
        %3349 = vmatmul.mubr.bf16.gmra.mxu0 %v3020
        %v3350 = vpop.f32.mrf.mxu0
        %v3351 = vadd.f32 0.0, %v3350
        %v3352 = vpop.f32.mrf.mxu0
        %v3353 = vpop.f32.mrf.mxu0
        %v3354 = vadd.f32 0.0, %v3353
        %v3355 = vpop.f32.mrf.mxu0
        %3356 = vmatprep.mubr.bf16.mxu0 %v3276
        %3357 = vmatmul.mubr.bf16.gmra.mxu0 %v3023
        %v3358 = vpop.f32.mrf.mxu0
        %v3359 = vadd.f32 0.0, %v3358
        %v3360 = vpop.f32.mrf.mxu0
        %v3361 = vpop.f32.mrf.mxu0
        %v3362 = vadd.f32 0.0, %v3361
        %v3363 = vpop.f32.mrf.mxu0
        %3364 = vmatprep.mubr.bf16.mxu0 %v3278
        %3365 = vmatmul.mubr.bf16.gmra.mxu0 %v3026
        %v3366 = vpop.f32.mrf.mxu0
        %v3367 = vadd.f32 0.0, %v3366
        %v3368 = vpop.f32.mrf.mxu0
        %v3369 = vpop.f32.mrf.mxu0
        %v3370 = vadd.f32 0.0, %v3369
        %v3371 = vpop.f32.mrf.mxu0
        %3372 = vmatprep.mubr.bf16.mxu0 %v3280
        %3373 = vmatmul.mubr.bf16.gmra.mxu0 %v3029
        %v3374 = vpop.f32.mrf.mxu0
        %v3375 = vadd.f32 0.0, %v3374
        %v3376 = vpop.f32.mrf.mxu0
        %v3377 = vpop.f32.mrf.mxu0
        %v3378 = vadd.f32 0.0, %v3377
        %v3379 = vpop.f32.mrf.mxu0
        %3380 = vmatprep.mubr.bf16.mxu0 %v3282
        %3381 = vmatmul.mubr.bf16.gmra.mxu0 %v3032
        %v3382 = vpop.f32.mrf.mxu0
        %v3383 = vadd.f32 0.0, %v3382
        %v3384 = vpop.f32.mrf.mxu0
        %v3385 = vpop.f32.mrf.mxu0
        %v3386 = vadd.f32 0.0, %v3385
        %v3387 = vpop.f32.mrf.mxu0
        %3388 = vmatprep.mubr.bf16.mxu0 %v3284
        %3389 = vmatmul.mubr.bf16.gmra.mxu0 %v3035
        %v3390 = vpop.f32.mrf.mxu0
        %v3391 = vadd.f32 0.0, %v3390
        %v3392 = vpop.f32.mrf.mxu0
        %v3393 = vpop.f32.mrf.mxu0
        %v3394 = vadd.f32 0.0, %v3393
        %v3395 = vpop.f32.mrf.mxu0
        %3396 = vmatprep.mubr.bf16.mxu0 %v3286
        %3397 = vmatmul.mubr.bf16.gmra.mxu0 %v3038
        %v3398 = vpop.f32.mrf.mxu0
        %v3399 = vadd.f32 0.0, %v3398
        %v3400 = vpop.f32.mrf.mxu0
        %v3401 = vpop.f32.mrf.mxu0
        %v3402 = vadd.f32 0.0, %v3401
        %v3403 = vpop.f32.mrf.mxu0
        %3404 = vmatprep.mubr.bf16.mxu0 %v3288
        %3405 = vmatmul.mubr.bf16.gmra.mxu0 %v3041
        %v3406 = vpop.f32.mrf.mxu0
        %v3407 = vadd.f32 0.0, %v3406
        %v3408 = vpop.f32.mrf.mxu0
        %v3409 = vpop.f32.mrf.mxu0
        %v3410 = vadd.f32 0.0, %v3409
        %v3411 = vpop.f32.mrf.mxu0
        %3412 = vmatprep.mubr.bf16.mxu0 %v3290
        %3413 = vmatmul.mubr.bf16.gmra.mxu0 %v3044
        %v3414 = vpop.f32.mrf.mxu0
        %v3415 = vadd.f32 0.0, %v3414
        %v3416 = vpop.f32.mrf.mxu0
        %v3417 = vpop.f32.mrf.mxu0
        %v3418 = vadd.f32 0.0, %v3417
        %v3419 = vpop.f32.mrf.mxu0
        %3420 = vmatprep.mubr.bf16.mxu0 %v3292
        %3421 = vmatmul.mubr.bf16.gmra.mxu0 %v3047
        %v3422 = vpop.f32.mrf.mxu0
        %v3423 = vadd.f32 0.0, %v3422
        %v3424 = vpop.f32.mrf.mxu0
        %v3425 = vpop.f32.mrf.mxu0
        %v3426 = vadd.f32 0.0, %v3425
        %v3427 = vpop.f32.mrf.mxu0
        %3428 = vmatprep.mubr.bf16.mxu0 %v3294
        %3429 = vmatmul.mubr.bf16.gmra.mxu0 %v3050
        %v3430 = vpop.f32.mrf.mxu0
        %v3431 = vadd.f32 0.0, %v3430
        %v3432 = vpop.f32.mrf.mxu0
        %v3433 = vpop.f32.mrf.mxu0
        %v3434 = vadd.f32 0.0, %v3433
        %v3435 = vpop.f32.mrf.mxu0
        %3436 = vmatprep.mubr.bf16.mxu0 %v3296
        %3437 = vmatmul.mubr.bf16.gmra.mxu0 %v3053
        %v3438 = vpop.f32.mrf.mxu0
        %v3439 = vadd.f32 0.0, %v3438
        %v3440 = vpop.f32.mrf.mxu0
        %v3441 = vpop.f32.mrf.mxu0
        %v3442 = vadd.f32 0.0, %v3441
        %v3443 = vpop.f32.mrf.mxu0
        %3444 = vmatprep.mubr.bf16.mxu0 %v3298
        %3445 = vmatmul.mubr.bf16.gmra.mxu0 %v3056
        %v3446 = vpop.f32.mrf.mxu0
        %v3447 = vadd.f32 0.0, %v3446
        %v3448 = vpop.f32.mrf.mxu0
        %v3449 = vpop.f32.mrf.mxu0
        %v3450 = vadd.f32 0.0, %v3449
        %v3451 = vpop.f32.mrf.mxu0
        %3452 = vmatprep.mubr.bf16.mxu0 %v3300
        %3453 = vmatmul.mubr.bf16.gmra.mxu0 %v3059
        %v3454 = vpop.f32.mrf.mxu0
        %v3455 = vadd.f32 0.0, %v3454
        %v3456 = vpop.f32.mrf.mxu0
        %v3457 = vpop.f32.mrf.mxu0
        %v3458 = vadd.f32 0.0, %v3457
        %v3459 = vpop.f32.mrf.mxu0
        %3460 = vmatprep.mubr.bf16.mxu0 %v3302
        %3461 = vmatmul.mubr.bf16.gmra.mxu0 %v3062
        %v3462 = vpop.f32.mrf.mxu0
        %v3463 = vadd.f32 0.0, %v3462
        %v3464 = vpop.f32.mrf.mxu0
        %v3465 = vpop.f32.mrf.mxu0
        %v3466 = vadd.f32 0.0, %v3465
        %v3467 = vpop.f32.mrf.mxu0
        %3468 = vdwg.mxu0
        %v3469 = vld [vmem:[%s4] sm:$0x1]
        %v3471 = vlaneseq
        %v3472 = vshrl.u32 %v3471, 7
        %v3473 = vsub.s32 0, %v3472
        %v3474 = vrot.slane %v3469, %v3473
        %v3476 = vmul.f32 %v3343, %v3474
        %v3477 = vmul.f32 %v3346, %v3474
        %v3478 = vmul.f32 %v3351, %v3474
        %v3479 = vmul.f32 %v3354, %v3474
        %v3480 = vmul.f32 %v3359, %v3474
        %v3481 = vmul.f32 %v3362, %v3474
        %v3482 = vmul.f32 %v3367, %v3474
        %v3483 = vmul.f32 %v3370, %v3474
        %v3484 = vmul.f32 %v3375, %v3474
        %v3485 = vmul.f32 %v3378, %v3474
        %v3486 = vmul.f32 %v3383, %v3474
        %v3487 = vmul.f32 %v3386, %v3474
        %v3488 = vmul.f32 %v3391, %v3474
        %v3489 = vmul.f32 %v3394, %v3474
        %v3490 = vmul.f32 %v3399, %v3474
        %v3491 = vmul.f32 %v3402, %v3474
        %v3492 = vmul.f32 %v3407, %v3474
        %v3493 = vmul.f32 %v3410, %v3474
        %v3494 = vmul.f32 %v3415, %v3474
        %v3495 = vmul.f32 %v3418, %v3474
        %v3496 = vmul.f32 %v3423, %v3474
        %v3497 = vmul.f32 %v3426, %v3474
        %v3498 = vmul.f32 %v3431, %v3474
        %v3499 = vmul.f32 %v3434, %v3474
        %v3500 = vmul.f32 %v3439, %v3474
        %v3501 = vmul.f32 %v3442, %v3474
        %v3502 = vmul.f32 %v3447, %v3474
        %v3503 = vmul.f32 %v3450, %v3474
        %v3504 = vmul.f32 %v3455, %v3474
        %v3505 = vmul.f32 %v3458, %v3474
        %v3506 = vmul.f32 %v3463, %v3474
        %v3507 = vmul.f32 %v3466, %v3474
        %v3508 = vld [vmem:[%s5] sm:$0x1]
        %v3510 = vlaneseq
        %v3511 = vshrl.u32 %v3510, 7
        %v3512 = vsub.s32 0, %v3511
        %v3513 = vrot.slane %v3508, %v3512
        %v3515 = vadd.f32 %v3476, %v3513
        %v3516 = vadd.f32 %v3477, %v3513
        %v3517 = vadd.f32 %v3478, %v3513
        %v3518 = vadd.f32 %v3479, %v3513
        %v3519 = vadd.f32 %v3480, %v3513
        %v3520 = vadd.f32 %v3481, %v3513
        %v3521 = vadd.f32 %v3482, %v3513
        %v3522 = vadd.f32 %v3483, %v3513
        %v3523 = vadd.f32 %v3484, %v3513
        %v3524 = vadd.f32 %v3485, %v3513
        %v3525 = vadd.f32 %v3486, %v3513
        %v3526 = vadd.f32 %v3487, %v3513
        %v3527 = vadd.f32 %v3488, %v3513
        %v3528 = vadd.f32 %v3489, %v3513
        %v3529 = vadd.f32 %v3490, %v3513
        %v3530 = vadd.f32 %v3491, %v3513
        %v3531 = vadd.f32 %v3492, %v3513
        %v3532 = vadd.f32 %v3493, %v3513
        %v3533 = vadd.f32 %v3494, %v3513
        %v3534 = vadd.f32 %v3495, %v3513
        %v3535 = vadd.f32 %v3496, %v3513
        %v3536 = vadd.f32 %v3497, %v3513
        %v3537 = vadd.f32 %v3498, %v3513
        %v3538 = vadd.f32 %v3499, %v3513
        %v3539 = vadd.f32 %v3500, %v3513
        %v3540 = vadd.f32 %v3501, %v3513
        %v3541 = vadd.f32 %v3502, %v3513
        %v3542 = vadd.f32 %v3503, %v3513
        %v3543 = vadd.f32 %v3504, %v3513
        %v3544 = vadd.f32 %v3505, %v3513
        %v3545 = vadd.f32 %v3506, %v3513
        %v3546 = vadd.f32 %v3507, %v3513
        %v3547 = vmax.f32 %v3515, 0.0
        %v3548 = vmax.f32 %v3516, 0.0
        %v3549 = vmax.f32 %v3517, 0.0
        %v3550 = vmax.f32 %v3518, 0.0
        %v3551 = vmax.f32 %v3519, 0.0
        %v3552 = vmax.f32 %v3520, 0.0
        %v3553 = vmax.f32 %v3521, 0.0
        %v3554 = vmax.f32 %v3522, 0.0
        %v3555 = vmax.f32 %v3523, 0.0
        %v3556 = vmax.f32 %v3524, 0.0
        %v3557 = vmax.f32 %v3525, 0.0
        %v3558 = vmax.f32 %v3526, 0.0
        %v3559 = vmax.f32 %v3527, 0.0
        %v3560 = vmax.f32 %v3528, 0.0
        %v3561 = vmax.f32 %v3529, 0.0
        %v3562 = vmax.f32 %v3530, 0.0
        %v3563 = vmax.f32 %v3531, 0.0
        %v3564 = vmax.f32 %v3532, 0.0
        %v3565 = vmax.f32 %v3533, 0.0
        %v3566 = vmax.f32 %v3534, 0.0
        %v3567 = vmax.f32 %v3535, 0.0
        %v3568 = vmax.f32 %v3536, 0.0
        %v3569 = vmax.f32 %v3537, 0.0
        %v3570 = vmax.f32 %v3538, 0.0
        %v3571 = vmax.f32 %v3539, 0.0
        %v3572 = vmax.f32 %v3540, 0.0
        %v3573 = vmax.f32 %v3541, 0.0
        %v3574 = vmax.f32 %v3542, 0.0
        %v3575 = vmax.f32 %v3543, 0.0
        %v3576 = vmax.f32 %v3544, 0.0
        %v3577 = vmax.f32 %v3545, 0.0
        %v3578 = vmax.f32 %v3546, 0.0
        %v3579 = vpack.c.bf16 %v3548, %v3547
        %v3580 = vpack.c.bf16 %v3550, %v3549
        %v3581 = vpack.c.bf16 %v3552, %v3551
        %v3582 = vpack.c.bf16 %v3554, %v3553
        %v3583 = vpack.c.bf16 %v3556, %v3555
        %v3584 = vpack.c.bf16 %v3558, %v3557
        %v3585 = vpack.c.bf16 %v3560, %v3559
        %v3586 = vpack.c.bf16 %v3562, %v3561
        %v3587 = vpack.c.bf16 %v3564, %v3563
        %v3588 = vpack.c.bf16 %v3566, %v3565
        %v3589 = vpack.c.bf16 %v3568, %v3567
        %v3590 = vpack.c.bf16 %v3570, %v3569
        %v3591 = vpack.c.bf16 %v3572, %v3571
        %v3592 = vpack.c.bf16 %v3574, %v3573
        %v3593 = vpack.c.bf16 %v3576, %v3575
        %v3594 = vpack.c.bf16 %v3578, %v3577
        %v3611 = vunpack.c.l.b16 %v3579
        %v3612 = vunpack.c.h.b16 %v3579
        %v3613 = vunpack.c.l.b16 %v3580
        %v3614 = vunpack.c.h.b16 %v3580
        %v3615 = vunpack.c.l.b16 %v3581
        %v3616 = vunpack.c.h.b16 %v3581
        %v3617 = vunpack.c.l.b16 %v3582
        %v3618 = vunpack.c.h.b16 %v3582
        %v3619 = vunpack.c.l.b16 %v3583
        %v3620 = vunpack.c.h.b16 %v3583
        %v3621 = vunpack.c.l.b16 %v3584
        %v3622 = vunpack.c.h.b16 %v3584
        %v3623 = vunpack.c.l.b16 %v3585
        %v3624 = vunpack.c.h.b16 %v3585
        %v3625 = vunpack.c.l.b16 %v3586
        %v3626 = vunpack.c.h.b16 %v3586
        %v3627 = vunpack.c.l.b16 %v3587
        %v3628 = vunpack.c.h.b16 %v3587
        %v3629 = vunpack.c.l.b16 %v3588
        %v3630 = vunpack.c.h.b16 %v3588
        %v3631 = vunpack.c.l.b16 %v3589
        %v3632 = vunpack.c.h.b16 %v3589
        %v3633 = vunpack.c.l.b16 %v3590
        %v3634 = vunpack.c.h.b16 %v3590
        %v3635 = vunpack.c.l.b16 %v3591
        %v3636 = vunpack.c.h.b16 %v3591
        %v3637 = vunpack.c.l.b16 %v3592
        %v3638 = vunpack.c.h.b16 %v3592
        %v3639 = vunpack.c.l.b16 %v3593
        %v3640 = vunpack.c.h.b16 %v3593
        %v3641 = vunpack.c.l.b16 %v3594
        %v3642 = vunpack.c.h.b16 %v3594
        %v3643 = vpack.c.b16 %v3611, %v3611
        %v3644 = vpack.c.b16 %v3612, %v3612
        %v3645 = vpack.c.b16 %v3613, %v3613
        %v3646 = vpack.c.b16 %v3614, %v3614
        %v3647 = vpack.c.b16 %v3615, %v3615
        %v3648 = vpack.c.b16 %v3616, %v3616
        %v3649 = vpack.c.b16 %v3617, %v3617
        %v3650 = vpack.c.b16 %v3618, %v3618
        %v3651 = vpack.c.b16 %v3619, %v3619
        %v3652 = vpack.c.b16 %v3620, %v3620
        %v3653 = vpack.c.b16 %v3621, %v3621
        %v3654 = vpack.c.b16 %v3622, %v3622
        %v3655 = vpack.c.b16 %v3623, %v3623
        %v3656 = vpack.c.b16 %v3624, %v3624
        %v3657 = vpack.c.b16 %v3625, %v3625
        %v3658 = vpack.c.b16 %v3626, %v3626
        %v3659 = vpack.c.b16 %v3627, %v3627
        %v3660 = vpack.c.b16 %v3628, %v3628
        %v3661 = vpack.c.b16 %v3629, %v3629
        %v3662 = vpack.c.b16 %v3630, %v3630
        %v3663 = vpack.c.b16 %v3631, %v3631
        %v3664 = vpack.c.b16 %v3632, %v3632
        %v3665 = vpack.c.b16 %v3633, %v3633
        %v3666 = vpack.c.b16 %v3634, %v3634
        %v3667 = vpack.c.b16 %v3635, %v3635
        %v3668 = vpack.c.b16 %v3636, %v3636
        %v3669 = vpack.c.b16 %v3637, %v3637
        %v3670 = vpack.c.b16 %v3638, %v3638
        %v3671 = vpack.c.b16 %v3639, %v3639
        %v3672 = vpack.c.b16 %v3640, %v3640
        %v3673 = vpack.c.b16 %v3641, %v3641
        %v3674 = vpack.c.b16 %v3642, %v3642
        %3707 = vst [vmem:[%s412] sm:$0xf] %v3643
        %3708 = vst [vmem:[%s412 + $0x4] sm:$0xf] %v3644
        %3709 = vst [vmem:[%s412 + $0x8] sm:$0xf] %v3645
        %3710 = vst [vmem:[%s412 + $0xc] sm:$0xf] %v3646
        %3711 = vst [vmem:[%s412 + $0x10] sm:$0xf] %v3647
        %3712 = vst [vmem:[%s412 + $0x14] sm:$0xf] %v3648
        %3713 = vst [vmem:[%s412 + $0x18] sm:$0xf] %v3649
        %3714 = vst [vmem:[%s412 + $0x1c] sm:$0xf] %v3650
        %3715 = vst [vmem:[%s412 + $0x20] sm:$0xf] %v3651
        %3716 = vst [vmem:[%s412 + $0x24] sm:$0xf] %v3652
        %3717 = vst [vmem:[%s412 + $0x28] sm:$0xf] %v3653
        %3718 = vst [vmem:[%s412 + $0x2c] sm:$0xf] %v3654
        %3719 = vst [vmem:[%s412 + $0x30] sm:$0xf] %v3655
        %3720 = vst [vmem:[%s412 + $0x34] sm:$0xf] %v3656
        %3721 = vst [vmem:[%s412 + $0x38] sm:$0xf] %v3657
        %3722 = vst [vmem:[%s412 + $0x3c] sm:$0xf] %v3658
        %3723 = vst [vmem:[%s412 + $0x40] sm:$0xf] %v3659
        %3724 = vst [vmem:[%s412 + $0x44] sm:$0xf] %v3660
        %3725 = vst [vmem:[%s412 + $0x48] sm:$0xf] %v3661
        %3726 = vst [vmem:[%s412 + $0x4c] sm:$0xf] %v3662
        %3727 = vst [vmem:[%s412 + $0x50] sm:$0xf] %v3663
        %3728 = vst [vmem:[%s412 + $0x54] sm:$0xf] %v3664
        %3729 = vst [vmem:[%s412 + $0x58] sm:$0xf] %v3665
        %3730 = vst [vmem:[%s412 + $0x5c] sm:$0xf] %v3666
        %3731 = vst [vmem:[%s412 + $0x60] sm:$0xf] %v3667
        %3732 = vst [vmem:[%s412 + $0x64] sm:$0xf] %v3668
        %3733 = vst [vmem:[%s412 + $0x68] sm:$0xf] %v3669
        %3734 = vst [vmem:[%s412 + $0x6c] sm:$0xf] %v3670
        %3735 = vst [vmem:[%s412 + $0x70] sm:$0xf] %v3671
        %3736 = vst [vmem:[%s412 + $0x74] sm:$0xf] %v3672
        %3737 = vst [vmem:[%s412 + $0x78] sm:$0xf] %v3673
        %3738 = vst [vmem:[%s412 + $0x7c] sm:$0xf] %v3674
        %s3739 = sand.u32 %s212, 1
        %s3740 = scalar_lea.sflag [#allocation5], %s3739
        %s3741 = sand.u32 %s212, 1
        %s3742 = smul.addr %s3741, 128
        %s3743 = scalar_lea.vmem [#allocation11], %s3742
        // Predicated region
        $region61: #{tpu_custom_call.1} parent=43 // pred_check
          %p3744 = pneg %p222
        $region62: #{tpu_custom_call.1} parent=43 // pred_check_branch
          %3746 = sbr.rel (%p3744) target = $region64
        $region63: #{tpu_custom_call.1} parent=43 // pred_region
          %s3747 = smul.u32 16, %s32
          %s3749 = ssub.s32 2048, 2048
          %3750 = vsyncadd %s3740, %s3749
          %s3751 = smul.addr %s3747, 2
          %s3752 = smul.addr %s31, 32
          %s3753 = sadd.s32 %s3751, %s3752
          %s3754 = smul.addr %s3753, 64
          %s3755 = scalar_lea.hbm %s6, %s3754
          %s3756 = sshll.u32 %s3743, 4
          %s3757 = int_to_ptr.vmem [resolvable:$true] %s3756
          %3762 = dma.vmem_to_hbm [thread:$0]  %s3757, 2048, %s3755, %s3740, 64, 64, 4
        $region64: #{tpu_custom_call.1} parent=43 // pred_fallthru
          _
      $region44: #{tpu_custom_call.1} parent=5 // pred_fallthru
        _
      %p3763 = scmp.le.s32.totalorder 2, %s22
      // Predicated region
      $region65: #{tpu_custom_call.1} parent=5 // pred_check
        %p3764 = pneg %p3763
      $region66: #{tpu_custom_call.1} parent=5 // pred_check_branch
        %3766 = sbr.rel (%p3764) target = $region68
      $region67: #{tpu_custom_call.1} parent=5 // pred_region
        %s3767 = ssub.s32 %s22, 2
        // Predicated region
        $region69: #{tpu_custom_call.1} parent=67 // pred_check
          %p3768 = pneg %p228
        $region70: #{tpu_custom_call.1} parent=67 // pred_check_branch
          %3770 = sbr.rel (%p3768) target = $region72
        $region71: #{tpu_custom_call.1} parent=67 // pred_region
          %s3771 = sand.u32 %s213, 1
          %s3772 = scalar_lea.sflag [#allocation5], %s3771
          %s3773 = sand.u32 %s213, 1
          %s3774 = smul.addr %s3773, 128
          %s3775 = scalar_lea.vmem [#allocation11], %s3774
          %3776 = dma.done %s3772, 2048
        $region72: #{tpu_custom_call.1} parent=67 // pred_fallthru
          _
      $region68: #{tpu_custom_call.1} parent=5 // pred_fallthru
        _
    $region6: #{tpu_custom_call.1} parent=1 // loop_footer
      %s26 = sadd.s32 1, %s22
    $region7: #{tpu_custom_call.1} parent=1 // loop_footer_branch
      %21 = sbr.rel target = $region3
    $region8: #{tpu_custom_call.1} parent=1 // loop_exit
      _
    %3777 = vsyncpa [#allocation4], 1
    %s3778 = scalar_lea.sflag [#allocation4], 1
    %3779 = vsyncpa %s3778, 1
    %3780 = vsyncpa [#allocation7], 1
    %s3781 = scalar_lea.sflag [#allocation7], 1
    %3782 = vsyncpa %s3781, 1
    %3783 = vsyncpa [#allocation10], 1
    %3784 = vsyncpa [#allocation5], 1
    %s3785 = scalar_lea.sflag [#allocation5], 1
    %3786 = vsyncpa %s3785, 1

</llo_original>
